<compile_context>
chip_gen: v5e
topology: v5e:2x2
jax: 0.10.0
libtpu: 0.0.40
codegen_flags: <defaults>
</compile_context>

<pallas_src>
import math

import jax
import jax.numpy as jnp
from jax.experimental import pallas as pl
from jax.experimental.pallas import tpu as pltpu


# Lane-dense padded widths (multiples of 128) and sublane padding.
KP = 128          # conv im2col reduce dim  (C*9 = 36 -> 128, zero-filled)
FP = 128          # conv output features    (32       -> 128, zero-filled)
LOGP = 128        # logits width            (10       -> 128, zero-filled)
HID = 128         # per-branch MLP hidden width (exact)
FUSED = 2 * HID   # fused (features (+) logits) stream width = 256
HHID = 512        # head hidden width (exact)
OUTP = 128        # head output             (1        -> 128, zero-filled)
SUBLANES = 8      # f32 sublane tile; batch padded up to a multiple of this


# ----------------------------------------------------------------------------
# Fused Pallas kernel: backbone + both MLPs + head in one shot.
# ----------------------------------------------------------------------------
def fused_selection_kernel(
    patches_ref, logits_ref,
    wc, bc,
    wfl1_feat, wfl1_log, bfl1, wfl2, bfl2, wfl3, bfl3, wfl4, bfl4,
    wh1_img, wh1_fl, bh1, wh2, bh2, wh3, bh3, wh4, bh4,
    o_ref,
):
    f32 = jnp.float32
    bf16 = jnp.bfloat16
    bp = logits_ref.shape[0]              # sublane-padded batch
    p = patches_ref.shape[0] // bp        # spatial positions per image (H*W)

    def lin(h, w_ref, b_ref):
        # bf16 operands on the MXU, f32 accumulation, f32 bias/ReLU on the VPU.
        return jnp.dot(h.astype(bf16), w_ref[...],
                       preferred_element_type=f32) + b_ref[...]

    # --- shared backbone: 3x3 conv as one tall im2col matmul -> ReLU -> GAP
    y = jnp.maximum(lin(patches_ref[...], wc, bc), 0.0)          # (bp*p, FP) f32
    # Global average pool in-kernel: row-major split of the leading dim (no
    # lane crossing) + sublane-direction mean.  No pooling matrix, no MXU time.
    feats = jnp.mean(y.reshape(bp, p, FP), axis=1)               # (bp, FP) f32
    images_nn_out = feats  # nn_from_images wraps the same backbone modules

    # --- nn_from_features (+) nn_from_logits fused into one 256-lane stream
    # with block-diagonal weights: 4 serial dots instead of 8.  Layer 1 uses
    # split weights so no in-kernel lane concat is needed.
    h = (jnp.dot(feats.astype(bf16), wfl1_feat[...], preferred_element_type=f32)
         + jnp.dot(logits_ref[...], wfl1_log[...], preferred_element_type=f32)
         + bfl1[...])
    h = jnp.maximum(h, 0.0)
    h = jnp.maximum(lin(h, wfl2, bfl2), 0.0)
    h = jnp.maximum(lin(h, wfl3, bfl3), 0.0)
    fl_out = lin(h, wfl4, bfl4)            # (bp, 256) = [features_out | logits_out]

    # --- head: layer-1 weight split into (images | features+logits) row blocks
    # so the 288-wide concat is never materialized.
    h = (jnp.dot(images_nn_out.astype(bf16), wh1_img[...], preferred_element_type=f32)
         + jnp.dot(fl_out.astype(bf16), wh1_fl[...], preferred_element_type=f32)
         + bh1[...])
    h = jnp.maximum(h, 0.0)
    h = jnp.maximum(lin(h, wh2, bh2), 0.0)
    h = jnp.maximum(lin(h, wh3, bh3), 0.0)
    out = lin(h, wh4, bh4)                 # (bp, OUTP); real g lives in lane 0
    o_ref[...] = out.astype(o_ref.dtype)   # full-sublane, lane-dense store


# ----------------------------------------------------------------------------
# pallas_call wrapper: single launch, whole arrays resident in VMEM, no grid
# (so constant weight blocks are single-buffered).
# ----------------------------------------------------------------------------
def fused_selection_forward(patches, logits_p, flat_params):
    bp = logits_p.shape[0]
    args = (patches, logits_p) + tuple(flat_params)

    operand_bytes = sum(int(a.size) * a.dtype.itemsize for a in args)
    out_bytes = bp * OUTP * 4
    # MXU work: conv matmul + fused MLP + head (for the XLA scheduler hint).
    flops = 2 * (patches.shape[0] * KP * FP
                 + bp * (2 * HID * FUSED + 3 * FUSED * FUSED
                         + FP * HHID + FUSED * HHID
                         + 2 * HHID * HHID + HHID * OUTP))
    # VMEM budget from actual operand sizes + activation slab + margin
    # (no grid -> no double buffering of the weight blocks).
    act_bytes = patches.shape[0] * FP * 4 * 3
    vmem_limit = int(operand_bytes + out_bytes + act_bytes + (6 << 20))

    return pl.pallas_call(
        fused_selection_kernel,
        out_shape=jax.ShapeDtypeStruct((bp, OUTP), jnp.float32),
        in_specs=[pl.BlockSpec(memory_space=pltpu.MemorySpace.VMEM) for _ in args],
        out_specs=pl.BlockSpec(memory_space=pltpu.MemorySpace.VMEM),
        cost_estimate=pl.CostEstimate(flops=flops, transcendentals=0,
                                      bytes_accessed=operand_bytes + out_bytes),
        compiler_params=pltpu.CompilerParams(vmem_limit_bytes=vmem_limit),
    )(*args)


# ----------------------------------------------------------------------------
# Glue (XLA): im2col + padded/bf16 parameter construction
# ----------------------------------------------------------------------------
def im2col_3x3_same(x):
    # x: [B, C, H, W] -> [B*H*W, KP] bf16 patches (3x3 conv, stride 1, SAME).
    b, c, h, w = x.shape
    xp = jnp.pad(x, ((0, 0), (0, 0), (1, 1), (1, 1)))
    cols = [xp[:, :, dh:dh + h, dw:dw + w] for dh in range(3) for dw in range(3)]
    p = jnp.stack(cols, axis=2)                  # [B, C, 9, H, W]
    p = p.transpose(0, 3, 4, 1, 2)               # [B, H, W, C, 9]
    p = p.reshape(b * h * w, c * 9)              # [B*P, 36]
    p = jnp.pad(p, ((0, 0), (0, KP - c * 9)))    # zero lane-pad (exact)
    return p.astype(jnp.bfloat16)


def linear_params(key, fan_in, fan_out, pad_in=None, pad_out=None):
    # PyTorch nn.Linear / nn.Conv2d default init: U(+-1/sqrt(fan_in)), stored
    # as [in, out]; weight zero-padded + cast to bf16, bias kept f32.
    kw, kb = jax.random.split(key)
    bound = 1.0 / math.sqrt(fan_in)
    w = jax.random.uniform(kw, (fan_in, fan_out), jnp.float32, -bound, bound)
    b = jax.random.uniform(kb, (1, fan_out), jnp.float32, -bound, bound)
    pi = (pad_in or fan_in) - fan_in
    po = (pad_out or fan_out) - fan_out
    w = jnp.pad(w, ((0, pi), (0, po))).astype(jnp.bfloat16)
    b = jnp.pad(b, ((0, 0), (0, po)))
    return w, b


def init_selection_params(key, c_in=4, n_features=32, n_logits=10):
    k_conv, k_feat, k_log, k_head = jax.random.split(key, 4)

    # Conv as matmul: true (C*9, 32) zero-padded to (KP, FP); padded lanes stay
    # exactly 0 through bias + ReLU + pooling.
    wc, bc = linear_params(k_conv, c_in * 9, n_features, pad_in=KP, pad_out=FP)

    # Fused (features (+) logits) MLP: layer 1 as split weights, layers 2-4 as
    # block-diagonal 256x256 weights.
    kf = jax.random.split(k_feat, 4)
    kl = jax.random.split(k_log, 4)
    z = jnp.zeros((HID, HID), jnp.bfloat16)
    wf1, bf1 = linear_params(kf[0], n_features, HID, pad_in=HID)
    wl1, bl1 = linear_params(kl[0], n_logits, HID, pad_in=HID)
    fused = [jnp.concatenate([wf1, z], axis=1),          # wfl1_feat (128, 256)
             jnp.concatenate([z, wl1], axis=1),          # wfl1_log  (128, 256)
             jnp.concatenate([bf1, bl1], axis=1)]        # bfl1      (1, 256) f32
    for i in (1, 2, 3):
        wf, bf = linear_params(kf[i], HID, HID)
        wl, bl = linear_params(kl[i], HID, HID)
        wd = jnp.concatenate([jnp.concatenate([wf, z], axis=1),
                              jnp.concatenate([z, wl], axis=1)], axis=0)
        fused += [wd, jnp.concatenate([bf, bl], axis=1)]

    # Head: reference concat order is (images_nn_out, features_nn_out,
    # logits_nn_out) -> wh1 rows [0:32 | 32:160 | 160:288].
    kh = jax.random.split(k_head, 5)
    head_in = n_features + HID + HID                     # 288 (true fan_in)
    bound = 1.0 / math.sqrt(head_in)
    wh1 = jax.random.uniform(kh[0], (head_in, HHID), jnp.float32, -bound, bound)
    bh1 = jax.random.uniform(kh[1], (1, HHID), jnp.float32, -bound, bound)
    wh1_img = jnp.pad(wh1[:n_features],
                      ((0, FP - n_features), (0, 0))).astype(jnp.bfloat16)
    wh1_fl = wh1[n_features:].astype(jnp.bfloat16)       # rows [features | logits]

    wh2, bh2 = linear_params(kh[2], HHID, HHID)
    wh3, bh3 = linear_params(kh[3], HHID, HHID)
    wh4, bh4 = linear_params(kh[4], HHID, 1, pad_out=OUTP)

    return (wc, bc, *fused, wh1_img, wh1_fl, bh1, wh2, bh2, wh3, bh3, wh4, bh4)


@jax.jit
def selection_from_all_forward(images, logits, flat_params):
    # images: [B, C, H, W], logits: [B, n_logits]  ->  g: [B, 1]
    b = images.shape[0]
    bp = -(-b // SUBLANES) * SUBLANES   # sublane-pad the batch (B=2 -> 8)
    images_p = jnp.pad(images, ((0, bp - b), (0, 0), (0, 0), (0, 0)))
    logits_p = jnp.pad(logits, ((0, bp - b), (0, LOGP - logits.shape[1])))
    patches = im2col_3x3_same(images_p)                    # [bp*H*W, KP] bf16
    out = fused_selection_forward(patches, logits_p.astype(jnp.bfloat16),
                                  flat_params)
    return out[:b, :1]                                     # real g is column 0


if __name__ == "__main__":
    key = jax.random.PRNGKey(0)
    k_img, k_log, k_par = jax.random.split(key, 3)

    B, C, H, W = 2, 4, 16, 16
    n_logits = 10

    images = jax.random.normal(k_img, (B, C, H, W), jnp.float32)
    logits = jax.random.normal(k_log, (B, n_logits), jnp.float32)
    flat_params = init_selection_params(k_par, c_in=C, n_features=32,
                                        n_logits=n_logits)

    g = selection_from_all_forward(images, logits, flat_params)
    g = jax.block_until_ready(g)

    assert g.shape == (B, 1), g.shape
    assert bool(jnp.all(jnp.isfinite(g)))
    print("KERNEL_OK")
</pallas_src>

<mosaic_0001>
module attributes {stable_mosaic.version = 11 : i64} {
  func.func @fused_selection_kernel(%arg0: memref<2048x128xbf16, #tpu.memory_space<vmem>>, %arg1: memref<8x128xbf16, #tpu.memory_space<vmem>>, %arg2: memref<128x128xbf16, #tpu.memory_space<vmem>>, %arg3: memref<1x128xf32, #tpu.memory_space<vmem>>, %arg4: memref<128x256xbf16, #tpu.memory_space<vmem>>, %arg5: memref<128x256xbf16, #tpu.memory_space<vmem>>, %arg6: memref<1x256xf32, #tpu.memory_space<vmem>>, %arg7: memref<256x256xbf16, #tpu.memory_space<vmem>>, %arg8: memref<1x256xf32, #tpu.memory_space<vmem>>, %arg9: memref<256x256xbf16, #tpu.memory_space<vmem>>, %arg10: memref<1x256xf32, #tpu.memory_space<vmem>>, %arg11: memref<256x256xbf16, #tpu.memory_space<vmem>>, %arg12: memref<1x256xf32, #tpu.memory_space<vmem>>, %arg13: memref<128x512xbf16, #tpu.memory_space<vmem>>, %arg14: memref<256x512xbf16, #tpu.memory_space<vmem>>, %arg15: memref<1x512xf32, #tpu.memory_space<vmem>>, %arg16: memref<512x512xbf16, #tpu.memory_space<vmem>>, %arg17: memref<1x512xf32, #tpu.memory_space<vmem>>, %arg18: memref<512x512xbf16, #tpu.memory_space<vmem>>, %arg19: memref<1x512xf32, #tpu.memory_space<vmem>>, %arg20: memref<512x128xbf16, #tpu.memory_space<vmem>>, %arg21: memref<1x128xf32, #tpu.memory_space<vmem>>, %arg22: memref<8x128xf32, #tpu.memory_space<vmem>>) attributes {dimension_semantics = [], scalar_prefetch = 0 : i64, scratch_operands = 0 : i64, tpu.core_type = #tpu.core_type<tc>} {
    %c0 = arith.constant 0 : index
    %c0_0 = arith.constant 0 : index
    %0 = vector.load %arg0[%c0, %c0_0] : memref<2048x128xbf16, #tpu.memory_space<vmem>>, vector<2048x128xbf16>
    %c0_1 = arith.constant 0 : index
    %c0_2 = arith.constant 0 : index
    %1 = vector.load %arg2[%c0_1, %c0_2] : memref<128x128xbf16, #tpu.memory_space<vmem>>, vector<128x128xbf16>
    %cst = arith.constant dense<0.000000e+00> : vector<2048x128xf32>
    %2 = tpu.matmul %0, %1, %cst {dimension_numbers = #tpu.dot_dimension_numbers<[1], [0], [0], [1], [0, 0, 1, 1], [], []>} : vector<2048x128xbf16>, vector<128x128xbf16>, vector<2048x128xf32> -> vector<2048x128xf32>
    %c0_3 = arith.constant 0 : index
    %c0_4 = arith.constant 0 : index
    %3 = vector.load %arg3[%c0_3, %c0_4] : memref<1x128xf32, #tpu.memory_space<vmem>>, vector<1x128xf32>
    %4 = vector.broadcast %3 : vector<1x128xf32> to vector<2048x128xf32>
    %5 = arith.addf %2, %4 : vector<2048x128xf32>
    %cst_5 = arith.constant 0.000000e+00 : f32
    %6 = vector.broadcast %cst_5 : f32 to vector<2048x128xf32>
    %7 = arith.maximumf %5, %6 : vector<2048x128xf32>
    %8 = vector.shape_cast %7 : vector<2048x128xf32> to vector<8x256x128xf32>
    %cst_6 = arith.constant dense<0.000000e+00> : vector<8x128xf32>
    %9 = vector.multi_reduction <add>, %8, %cst_6 [1] : vector<8x256x128xf32> to vector<8x128xf32>
    %cst_7 = arith.constant 2.560000e+02 : f32
    %10 = vector.broadcast %cst_7 : f32 to vector<8x128xf32>
    %11 = arith.divf %9, %10 : vector<8x128xf32>
    %12 = arith.truncf %11 : vector<8x128xf32> to vector<8x128xbf16>
    %c0_8 = arith.constant 0 : index
    %c0_9 = arith.constant 0 : index
    %13 = vector.load %arg4[%c0_8, %c0_9] : memref<128x256xbf16, #tpu.memory_space<vmem>>, vector<128x256xbf16>
    %cst_10 = arith.constant dense<0.000000e+00> : vector<8x256xf32>
    %14 = tpu.matmul %12, %13, %cst_10 {dimension_numbers = #tpu.dot_dimension_numbers<[1], [0], [0], [1], [0, 0, 1, 1], [], []>} : vector<8x128xbf16>, vector<128x256xbf16>, vector<8x256xf32> -> vector<8x256xf32>
    %c0_11 = arith.constant 0 : index
    %c0_12 = arith.constant 0 : index
    %15 = vector.load %arg1[%c0_11, %c0_12] : memref<8x128xbf16, #tpu.memory_space<vmem>>, vector<8x128xbf16>
    %c0_13 = arith.constant 0 : index
    %c0_14 = arith.constant 0 : index
    %16 = vector.load %arg5[%c0_13, %c0_14] : memref<128x256xbf16, #tpu.memory_space<vmem>>, vector<128x256xbf16>
    %cst_15 = arith.constant dense<0.000000e+00> : vector<8x256xf32>
    %17 = tpu.matmul %15, %16, %cst_15 {dimension_numbers = #tpu.dot_dimension_numbers<[1], [0], [0], [1], [0, 0, 1, 1], [], []>} : vector<8x128xbf16>, vector<128x256xbf16>, vector<8x256xf32> -> vector<8x256xf32>
    %18 = arith.addf %14, %17 : vector<8x256xf32>
    %c0_16 = arith.constant 0 : index
    %c0_17 = arith.constant 0 : index
    %19 = vector.load %arg6[%c0_16, %c0_17] : memref<1x256xf32, #tpu.memory_space<vmem>>, vector<1x256xf32>
    %20 = vector.broadcast %19 : vector<1x256xf32> to vector<8x256xf32>
    %21 = arith.addf %18, %20 : vector<8x256xf32>
    %cst_18 = arith.constant 0.000000e+00 : f32
    %22 = vector.broadcast %cst_18 : f32 to vector<8x256xf32>
    %23 = arith.maximumf %21, %22 : vector<8x256xf32>
    %24 = arith.truncf %23 : vector<8x256xf32> to vector<8x256xbf16>
    %c0_19 = arith.constant 0 : index
    %c0_20 = arith.constant 0 : index
    %25 = vector.load %arg7[%c0_19, %c0_20] : memref<256x256xbf16, #tpu.memory_space<vmem>>, vector<256x256xbf16>
    %cst_21 = arith.constant dense<0.000000e+00> : vector<8x256xf32>
    %26 = tpu.matmul %24, %25, %cst_21 {dimension_numbers = #tpu.dot_dimension_numbers<[1], [0], [0], [1], [0, 0, 1, 1], [], []>} : vector<8x256xbf16>, vector<256x256xbf16>, vector<8x256xf32> -> vector<8x256xf32>
    %c0_22 = arith.constant 0 : index
    %c0_23 = arith.constant 0 : index
    %27 = vector.load %arg8[%c0_22, %c0_23] : memref<1x256xf32, #tpu.memory_space<vmem>>, vector<1x256xf32>
    %28 = vector.broadcast %27 : vector<1x256xf32> to vector<8x256xf32>
    %29 = arith.addf %26, %28 : vector<8x256xf32>
    %cst_24 = arith.constant 0.000000e+00 : f32
    %30 = vector.broadcast %cst_24 : f32 to vector<8x256xf32>
    %31 = arith.maximumf %29, %30 : vector<8x256xf32>
    %32 = arith.truncf %31 : vector<8x256xf32> to vector<8x256xbf16>
    %c0_25 = arith.constant 0 : index
    %c0_26 = arith.constant 0 : index
    %33 = vector.load %arg9[%c0_25, %c0_26] : memref<256x256xbf16, #tpu.memory_space<vmem>>, vector<256x256xbf16>
    %cst_27 = arith.constant dense<0.000000e+00> : vector<8x256xf32>
    %34 = tpu.matmul %32, %33, %cst_27 {dimension_numbers = #tpu.dot_dimension_numbers<[1], [0], [0], [1], [0, 0, 1, 1], [], []>} : vector<8x256xbf16>, vector<256x256xbf16>, vector<8x256xf32> -> vector<8x256xf32>
    %c0_28 = arith.constant 0 : index
    %c0_29 = arith.constant 0 : index
    %35 = vector.load %arg10[%c0_28, %c0_29] : memref<1x256xf32, #tpu.memory_space<vmem>>, vector<1x256xf32>
    %36 = vector.broadcast %35 : vector<1x256xf32> to vector<8x256xf32>
    %37 = arith.addf %34, %36 : vector<8x256xf32>
    %cst_30 = arith.constant 0.000000e+00 : f32
    %38 = vector.broadcast %cst_30 : f32 to vector<8x256xf32>
    %39 = arith.maximumf %37, %38 : vector<8x256xf32>
    %40 = arith.truncf %39 : vector<8x256xf32> to vector<8x256xbf16>
    %c0_31 = arith.constant 0 : index
    %c0_32 = arith.constant 0 : index
    %41 = vector.load %arg11[%c0_31, %c0_32] : memref<256x256xbf16, #tpu.memory_space<vmem>>, vector<256x256xbf16>
    %cst_33 = arith.constant dense<0.000000e+00> : vector<8x256xf32>
    %42 = tpu.matmul %40, %41, %cst_33 {dimension_numbers = #tpu.dot_dimension_numbers<[1], [0], [0], [1], [0, 0, 1, 1], [], []>} : vector<8x256xbf16>, vector<256x256xbf16>, vector<8x256xf32> -> vector<8x256xf32>
    %c0_34 = arith.constant 0 : index
    %c0_35 = arith.constant 0 : index
    %43 = vector.load %arg12[%c0_34, %c0_35] : memref<1x256xf32, #tpu.memory_space<vmem>>, vector<1x256xf32>
    %44 = vector.broadcast %43 : vector<1x256xf32> to vector<8x256xf32>
    %45 = arith.addf %42, %44 : vector<8x256xf32>
    %46 = arith.truncf %11 : vector<8x128xf32> to vector<8x128xbf16>
    %c0_36 = arith.constant 0 : index
    %c0_37 = arith.constant 0 : index
    %47 = vector.load %arg13[%c0_36, %c0_37] : memref<128x512xbf16, #tpu.memory_space<vmem>>, vector<128x512xbf16>
    %cst_38 = arith.constant dense<0.000000e+00> : vector<8x512xf32>
    %48 = tpu.matmul %46, %47, %cst_38 {dimension_numbers = #tpu.dot_dimension_numbers<[1], [0], [0], [1], [0, 0, 1, 1], [], []>} : vector<8x128xbf16>, vector<128x512xbf16>, vector<8x512xf32> -> vector<8x512xf32>
    %49 = arith.truncf %45 : vector<8x256xf32> to vector<8x256xbf16>
    %c0_39 = arith.constant 0 : index
    %c0_40 = arith.constant 0 : index
    %50 = vector.load %arg14[%c0_39, %c0_40] : memref<256x512xbf16, #tpu.memory_space<vmem>>, vector<256x512xbf16>
    %cst_41 = arith.constant dense<0.000000e+00> : vector<8x512xf32>
    %51 = tpu.matmul %49, %50, %cst_41 {dimension_numbers = #tpu.dot_dimension_numbers<[1], [0], [0], [1], [0, 0, 1, 1], [], []>} : vector<8x256xbf16>, vector<256x512xbf16>, vector<8x512xf32> -> vector<8x512xf32>
    %52 = arith.addf %48, %51 : vector<8x512xf32>
    %c0_42 = arith.constant 0 : index
    %c0_43 = arith.constant 0 : index
    %53 = vector.load %arg15[%c0_42, %c0_43] : memref<1x512xf32, #tpu.memory_space<vmem>>, vector<1x512xf32>
    %54 = vector.broadcast %53 : vector<1x512xf32> to vector<8x512xf32>
    %55 = arith.addf %52, %54 : vector<8x512xf32>
    %cst_44 = arith.constant 0.000000e+00 : f32
    %56 = vector.broadcast %cst_44 : f32 to vector<8x512xf32>
    %57 = arith.maximumf %55, %56 : vector<8x512xf32>
    %58 = arith.truncf %57 : vector<8x512xf32> to vector<8x512xbf16>
    %c0_45 = arith.constant 0 : index
    %c0_46 = arith.constant 0 : index
    %59 = vector.load %arg16[%c0_45, %c0_46] : memref<512x512xbf16, #tpu.memory_space<vmem>>, vector<512x512xbf16>
    %cst_47 = arith.constant dense<0.000000e+00> : vector<8x512xf32>
    %60 = tpu.matmul %58, %59, %cst_47 {dimension_numbers = #tpu.dot_dimension_numbers<[1], [0], [0], [1], [0, 0, 1, 1], [], []>} : vector<8x512xbf16>, vector<512x512xbf16>, vector<8x512xf32> -> vector<8x512xf32>
    %c0_48 = arith.constant 0 : index
    %c0_49 = arith.constant 0 : index
    %61 = vector.load %arg17[%c0_48, %c0_49] : memref<1x512xf32, #tpu.memory_space<vmem>>, vector<1x512xf32>
    %62 = vector.broadcast %61 : vector<1x512xf32> to vector<8x512xf32>
    %63 = arith.addf %60, %62 : vector<8x512xf32>
    %cst_50 = arith.constant 0.000000e+00 : f32
    %64 = vector.broadcast %cst_50 : f32 to vector<8x512xf32>
    %65 = arith.maximumf %63, %64 : vector<8x512xf32>
    %66 = arith.truncf %65 : vector<8x512xf32> to vector<8x512xbf16>
    %c0_51 = arith.constant 0 : index
    %c0_52 = arith.constant 0 : index
    %67 = vector.load %arg18[%c0_51, %c0_52] : memref<512x512xbf16, #tpu.memory_space<vmem>>, vector<512x512xbf16>
    %cst_53 = arith.constant dense<0.000000e+00> : vector<8x512xf32>
    %68 = tpu.matmul %66, %67, %cst_53 {dimension_numbers = #tpu.dot_dimension_numbers<[1], [0], [0], [1], [0, 0, 1, 1], [], []>} : vector<8x512xbf16>, vector<512x512xbf16>, vector<8x512xf32> -> vector<8x512xf32>
    %c0_54 = arith.constant 0 : index
    %c0_55 = arith.constant 0 : index
    %69 = vector.load %arg19[%c0_54, %c0_55] : memref<1x512xf32, #tpu.memory_space<vmem>>, vector<1x512xf32>
    %70 = vector.broadcast %69 : vector<1x512xf32> to vector<8x512xf32>
    %71 = arith.addf %68, %70 : vector<8x512xf32>
    %cst_56 = arith.constant 0.000000e+00 : f32
    %72 = vector.broadcast %cst_56 : f32 to vector<8x512xf32>
    %73 = arith.maximumf %71, %72 : vector<8x512xf32>
    %74 = arith.truncf %73 : vector<8x512xf32> to vector<8x512xbf16>
    %c0_57 = arith.constant 0 : index
    %c0_58 = arith.constant 0 : index
    %75 = vector.load %arg20[%c0_57, %c0_58] : memref<512x128xbf16, #tpu.memory_space<vmem>>, vector<512x128xbf16>
    %cst_59 = arith.constant dense<0.000000e+00> : vector<8x128xf32>
    %76 = tpu.matmul %74, %75, %cst_59 {dimension_numbers = #tpu.dot_dimension_numbers<[1], [0], [0], [1], [0, 0, 1, 1], [], []>} : vector<8x512xbf16>, vector<512x128xbf16>, vector<8x128xf32> -> vector<8x128xf32>
    %c0_60 = arith.constant 0 : index
    %c0_61 = arith.constant 0 : index
    %77 = vector.load %arg21[%c0_60, %c0_61] : memref<1x128xf32, #tpu.memory_space<vmem>>, vector<1x128xf32>
    %78 = vector.broadcast %77 : vector<1x128xf32> to vector<8x128xf32>
    %79 = arith.addf %76, %78 : vector<8x128xf32>
    %c0_62 = arith.constant 0 : index
    %c0_63 = arith.constant 0 : index
    %80 = vector.load %arg22[%c0_62, %c0_63] : memref<8x128xf32, #tpu.memory_space<vmem>>, vector<8x128xf32>
    tpu.vector_store %arg22[%c0_62, %c0_63], %79 {strides = array<i32>} : memref<8x128xf32, #tpu.memory_space<vmem>>, vector<8x128xf32>,
    return
  }
}

</mosaic_0001>

<llo_original>
// kernel: selection_from_all_forward.1
$region0: #{selection_from_all_forward.1}
  #allocation0 [shape = 'u32[]', space=smem, size = 0x4, offset = 0x4, fixed_abs, tag = 'smem constant byte address 0x4 - core index']
  #allocation1 [shape = 'u32[72,128]{1,0:T(1,128)}', space=vmem, size = 0x9000, scoped, tag = 'internal scratch']
  %s0 = inlined_call_operand.vmem [shape: bf16[2048,128], index: 0, kind: input, shape index: {}]
  %s1 = inlined_call_operand.vmem [shape: bf16[8,128], index: 1, kind: input, shape index: {}]
  %s2 = inlined_call_operand.vmem [shape: bf16[128,128], index: 2, kind: input, shape index: {}]
  %s3 = inlined_call_operand.vmem [shape: f32[1,128], index: 3, kind: input, shape index: {}]
  %s4 = inlined_call_operand.vmem [shape: bf16[128,256], index: 4, kind: input, shape index: {}]
  %s5 = inlined_call_operand.vmem [shape: bf16[128,256], index: 5, kind: input, shape index: {}]
  %s6 = inlined_call_operand.vmem [shape: f32[1,256], index: 6, kind: input, shape index: {}]
  %s7 = inlined_call_operand.vmem [shape: bf16[256,256], index: 7, kind: input, shape index: {}]
  %s8 = inlined_call_operand.vmem [shape: f32[1,256], index: 8, kind: input, shape index: {}]
  %s9 = inlined_call_operand.vmem [shape: bf16[256,256], index: 9, kind: input, shape index: {}]
  %s10 = inlined_call_operand.vmem [shape: f32[1,256], index: 10, kind: input, shape index: {}]
  %s11 = inlined_call_operand.vmem [shape: bf16[256,256], index: 11, kind: input, shape index: {}]
  %s12 = inlined_call_operand.vmem [shape: f32[1,256], index: 12, kind: input, shape index: {}]
  %s13 = inlined_call_operand.vmem [shape: bf16[128,512], index: 13, kind: input, shape index: {}]
  %s14 = inlined_call_operand.vmem [shape: bf16[256,512], index: 14, kind: input, shape index: {}]
  %s15 = inlined_call_operand.vmem [shape: f32[1,512], index: 15, kind: input, shape index: {}]
  %s16 = inlined_call_operand.vmem [shape: bf16[512,512], index: 16, kind: input, shape index: {}]
  %s17 = inlined_call_operand.vmem [shape: f32[1,512], index: 17, kind: input, shape index: {}]
  %s18 = inlined_call_operand.vmem [shape: bf16[512,512], index: 18, kind: input, shape index: {}]
  %s19 = inlined_call_operand.vmem [shape: f32[1,512], index: 19, kind: input, shape index: {}]
  %s20 = inlined_call_operand.vmem [shape: bf16[512,128], index: 20, kind: input, shape index: {}]
  %s21 = inlined_call_operand.vmem [shape: f32[1,128], index: 21, kind: input, shape index: {}]
  %s22 = inlined_call_operand.vmem [shape: f32[8,128], index: 22, kind: output, shape index: {}]
  %s23 = sld [smem:[#allocation0]]
  $region98: #{selection_from_all_forward.1} parent=0
    _
  %s25 = ssub.s32 1, %s23
  %s26 = scalar_select 0, %s25, %s23
  // Predicated region
  $region2: #{selection_from_all_forward.1} parent=0 // pred_check
    _
  $region3: #{selection_from_all_forward.1} parent=0 // pred_check_branch
    %28 = sbr.rel (0) target = $region5
  $region4: #{selection_from_all_forward.1} parent=0 // pred_region
    _
  $region5: #{selection_from_all_forward.1} parent=0 // pred_fallthru
    _
  // Predicated region
  $region6: #{selection_from_all_forward.1} parent=0 // pred_check
    _
  $region7: #{selection_from_all_forward.1} parent=0 // pred_check_branch
    %30 = sbr.rel (0) target = $region9
  $region8: #{selection_from_all_forward.1} parent=0 // pred_region
    _
  $region9: #{selection_from_all_forward.1} parent=0 // pred_fallthru
    _
  // Predicated region
  $region10: #{selection_from_all_forward.1} parent=0 // pred_check
    _
  $region11: #{selection_from_all_forward.1} parent=0 // pred_check_branch
    %32 = sbr.rel (0) target = $region13
  $region12: #{selection_from_all_forward.1} parent=0 // pred_region
    _
  $region13: #{selection_from_all_forward.1} parent=0 // pred_fallthru
    _
  // Predicated region
  $region14: #{selection_from_all_forward.1} parent=0 // pred_check
    _
  $region15: #{selection_from_all_forward.1} parent=0 // pred_check_branch
    %34 = sbr.rel (0) target = $region17
  $region16: #{selection_from_all_forward.1} parent=0 // pred_region
    _
  $region17: #{selection_from_all_forward.1} parent=0 // pred_fallthru
    _
  // Predicated region
  $region18: #{selection_from_all_forward.1} parent=0 // pred_check
    _
  $region19: #{selection_from_all_forward.1} parent=0 // pred_check_branch
    %36 = sbr.rel (0) target = $region21
  $region20: #{selection_from_all_forward.1} parent=0 // pred_region
    _
  $region21: #{selection_from_all_forward.1} parent=0 // pred_fallthru
    _
  // Predicated region
  $region22: #{selection_from_all_forward.1} parent=0 // pred_check
    _
  $region23: #{selection_from_all_forward.1} parent=0 // pred_check_branch
    %38 = sbr.rel (0) target = $region25
  $region24: #{selection_from_all_forward.1} parent=0 // pred_region
    _
  $region25: #{selection_from_all_forward.1} parent=0 // pred_fallthru
    _
  // Predicated region
  $region26: #{selection_from_all_forward.1} parent=0 // pred_check
    _
  $region27: #{selection_from_all_forward.1} parent=0 // pred_check_branch
    %40 = sbr.rel (0) target = $region29
  $region28: #{selection_from_all_forward.1} parent=0 // pred_region
    _
  $region29: #{selection_from_all_forward.1} parent=0 // pred_fallthru
    _
  // Predicated region
  $region30: #{selection_from_all_forward.1} parent=0 // pred_check
    _
  $region31: #{selection_from_all_forward.1} parent=0 // pred_check_branch
    %42 = sbr.rel (0) target = $region33
  $region32: #{selection_from_all_forward.1} parent=0 // pred_region
    _
  $region33: #{selection_from_all_forward.1} parent=0 // pred_fallthru
    _
  // Predicated region
  $region34: #{selection_from_all_forward.1} parent=0 // pred_check
    _
  $region35: #{selection_from_all_forward.1} parent=0 // pred_check_branch
    %44 = sbr.rel (0) target = $region37
  $region36: #{selection_from_all_forward.1} parent=0 // pred_region
    _
  $region37: #{selection_from_all_forward.1} parent=0 // pred_fallthru
    _
  // Predicated region
  $region38: #{selection_from_all_forward.1} parent=0 // pred_check
    _
  $region39: #{selection_from_all_forward.1} parent=0 // pred_check_branch
    %46 = sbr.rel (0) target = $region41
  $region40: #{selection_from_all_forward.1} parent=0 // pred_region
    _
  $region41: #{selection_from_all_forward.1} parent=0 // pred_fallthru
    _
  // Predicated region
  $region42: #{selection_from_all_forward.1} parent=0 // pred_check
    _
  $region43: #{selection_from_all_forward.1} parent=0 // pred_check_branch
    %48 = sbr.rel (0) target = $region45
  $region44: #{selection_from_all_forward.1} parent=0 // pred_region
    _
  $region45: #{selection_from_all_forward.1} parent=0 // pred_fallthru
    _
  // Predicated region
  $region46: #{selection_from_all_forward.1} parent=0 // pred_check
    _
  $region47: #{selection_from_all_forward.1} parent=0 // pred_check_branch
    %50 = sbr.rel (0) target = $region49
  $region48: #{selection_from_all_forward.1} parent=0 // pred_region
    _
  $region49: #{selection_from_all_forward.1} parent=0 // pred_fallthru
    _
  // Predicated region
  $region50: #{selection_from_all_forward.1} parent=0 // pred_check
    _
  $region51: #{selection_from_all_forward.1} parent=0 // pred_check_branch
    %52 = sbr.rel (0) target = $region53
  $region52: #{selection_from_all_forward.1} parent=0 // pred_region
    _
  $region53: #{selection_from_all_forward.1} parent=0 // pred_fallthru
    _
  // Predicated region
  $region54: #{selection_from_all_forward.1} parent=0 // pred_check
    _
  $region55: #{selection_from_all_forward.1} parent=0 // pred_check_branch
    %54 = sbr.rel (0) target = $region57
  $region56: #{selection_from_all_forward.1} parent=0 // pred_region
    _
  $region57: #{selection_from_all_forward.1} parent=0 // pred_fallthru
    _
  // Predicated region
  $region58: #{selection_from_all_forward.1} parent=0 // pred_check
    _
  $region59: #{selection_from_all_forward.1} parent=0 // pred_check_branch
    %56 = sbr.rel (0) target = $region61
  $region60: #{selection_from_all_forward.1} parent=0 // pred_region
    _
  $region61: #{selection_from_all_forward.1} parent=0 // pred_fallthru
    _
  // Predicated region
  $region62: #{selection_from_all_forward.1} parent=0 // pred_check
    _
  $region63: #{selection_from_all_forward.1} parent=0 // pred_check_branch
    %58 = sbr.rel (0) target = $region65
  $region64: #{selection_from_all_forward.1} parent=0 // pred_region
    _
  $region65: #{selection_from_all_forward.1} parent=0 // pred_fallthru
    _
  // Predicated region
  $region66: #{selection_from_all_forward.1} parent=0 // pred_check
    _
  $region67: #{selection_from_all_forward.1} parent=0 // pred_check_branch
    %60 = sbr.rel (0) target = $region69
  $region68: #{selection_from_all_forward.1} parent=0 // pred_region
    _
  $region69: #{selection_from_all_forward.1} parent=0 // pred_fallthru
    _
  // Predicated region
  $region70: #{selection_from_all_forward.1} parent=0 // pred_check
    _
  $region71: #{selection_from_all_forward.1} parent=0 // pred_check_branch
    %62 = sbr.rel (0) target = $region73
  $region72: #{selection_from_all_forward.1} parent=0 // pred_region
    _
  $region73: #{selection_from_all_forward.1} parent=0 // pred_fallthru
    _
  // Predicated region
  $region74: #{selection_from_all_forward.1} parent=0 // pred_check
    _
  $region75: #{selection_from_all_forward.1} parent=0 // pred_check_branch
    %64 = sbr.rel (0) target = $region77
  $region76: #{selection_from_all_forward.1} parent=0 // pred_region
    _
  $region77: #{selection_from_all_forward.1} parent=0 // pred_fallthru
    _
  // Predicated region
  $region78: #{selection_from_all_forward.1} parent=0 // pred_check
    _
  $region79: #{selection_from_all_forward.1} parent=0 // pred_check_branch
    %66 = sbr.rel (0) target = $region81
  $region80: #{selection_from_all_forward.1} parent=0 // pred_region
    _
  $region81: #{selection_from_all_forward.1} parent=0 // pred_fallthru
    _
  // Predicated region
  $region82: #{selection_from_all_forward.1} parent=0 // pred_check
    _
  $region83: #{selection_from_all_forward.1} parent=0 // pred_check_branch
    %68 = sbr.rel (0) target = $region85
  $region84: #{selection_from_all_forward.1} parent=0 // pred_region
    _
  $region85: #{selection_from_all_forward.1} parent=0 // pred_fallthru
    _
  // Predicated region
  $region86: #{selection_from_all_forward.1} parent=0 // pred_check
    _
  $region87: #{selection_from_all_forward.1} parent=0 // pred_check_branch
    %70 = sbr.rel (0) target = $region89
  $region88: #{selection_from_all_forward.1} parent=0 // pred_region
    _
  $region89: #{selection_from_all_forward.1} parent=0 // pred_fallthru
    _
  %v71 = vld [vmem:[%s0] sm:$0xf]
  %v72 = vld [vmem:[%s0 + $0x4] sm:$0xf]
  %v73 = vld [vmem:[%s0 + $0x8] sm:$0xf]
  %v74 = vld [vmem:[%s0 + $0xc] sm:$0xf]
  %v75 = vld [vmem:[%s0 + $0x10] sm:$0xf]
  %v76 = vld [vmem:[%s0 + $0x14] sm:$0xf]
  %v77 = vld [vmem:[%s0 + $0x18] sm:$0xf]
  %v78 = vld [vmem:[%s0 + $0x1c] sm:$0xf]
  %v79 = vld [vmem:[%s0 + $0x20] sm:$0xf]
  %v80 = vld [vmem:[%s0 + $0x24] sm:$0xf]
  %v81 = vld [vmem:[%s0 + $0x28] sm:$0xf]
  %v82 = vld [vmem:[%s0 + $0x2c] sm:$0xf]
  %v83 = vld [vmem:[%s0 + $0x30] sm:$0xf]
  %v84 = vld [vmem:[%s0 + $0x34] sm:$0xf]
  %v85 = vld [vmem:[%s0 + $0x38] sm:$0xf]
  %v86 = vld [vmem:[%s0 + $0x3c] sm:$0xf]
  %v87 = vld [vmem:[%s0 + $0x40] sm:$0xf]
  %v88 = vld [vmem:[%s0 + $0x44] sm:$0xf]
  %v89 = vld [vmem:[%s0 + $0x48] sm:$0xf]
  %v90 = vld [vmem:[%s0 + $0x4c] sm:$0xf]
  %v91 = vld [vmem:[%s0 + $0x50] sm:$0xf]
  %v92 = vld [vmem:[%s0 + $0x54] sm:$0xf]
  %v93 = vld [vmem:[%s0 + $0x58] sm:$0xf]
  %v94 = vld [vmem:[%s0 + $0x5c] sm:$0xf]
  %v95 = vld [vmem:[%s0 + $0x60] sm:$0xf]
  %v96 = vld [vmem:[%s0 + $0x64] sm:$0xf]
  %v97 = vld [vmem:[%s0 + $0x68] sm:$0xf]
  %v98 = vld [vmem:[%s0 + $0x6c] sm:$0xf]
  %v99 = vld [vmem:[%s0 + $0x70] sm:$0xf]
  %v100 = vld [vmem:[%s0 + $0x74] sm:$0xf]
  %v101 = vld [vmem:[%s0 + $0x78] sm:$0xf]
  %v102 = vld [vmem:[%s0 + $0x7c] sm:$0xf]
  %v103 = vld [vmem:[%s0 + $0x80] sm:$0xf]
  %v104 = vld [vmem:[%s0 + $0x84] sm:$0xf]
  %v105 = vld [vmem:[%s0 + $0x88] sm:$0xf]
  %v106 = vld [vmem:[%s0 + $0x8c] sm:$0xf]
  %v107 = vld [vmem:[%s0 + $0x90] sm:$0xf]
  %v108 = vld [vmem:[%s0 + $0x94] sm:$0xf]
  %v109 = vld [vmem:[%s0 + $0x98] sm:$0xf]
  %v110 = vld [vmem:[%s0 + $0x9c] sm:$0xf]
  %v111 = vld [vmem:[%s0 + $0xa0] sm:$0xf]
  %v112 = vld [vmem:[%s0 + $0xa4] sm:$0xf]
  %v113 = vld [vmem:[%s0 + $0xa8] sm:$0xf]
  %v114 = vld [vmem:[%s0 + $0xac] sm:$0xf]
  %v115 = vld [vmem:[%s0 + $0xb0] sm:$0xf]
  %v116 = vld [vmem:[%s0 + $0xb4] sm:$0xf]
  %v117 = vld [vmem:[%s0 + $0xb8] sm:$0xf]
  %v118 = vld [vmem:[%s0 + $0xbc] sm:$0xf]
  %v119 = vld [vmem:[%s0 + $0xc0] sm:$0xf]
  %v120 = vld [vmem:[%s0 + $0xc4] sm:$0xf]
  %v121 = vld [vmem:[%s0 + $0xc8] sm:$0xf]
  %v122 = vld [vmem:[%s0 + $0xcc] sm:$0xf]
  %v123 = vld [vmem:[%s0 + $0xd0] sm:$0xf]
  %v124 = vld [vmem:[%s0 + $0xd4] sm:$0xf]
  %v125 = vld [vmem:[%s0 + $0xd8] sm:$0xf]
  %v126 = vld [vmem:[%s0 + $0xdc] sm:$0xf]
  %v127 = vld [vmem:[%s0 + $0xe0] sm:$0xf]
  %v128 = vld [vmem:[%s0 + $0xe4] sm:$0xf]
  %v129 = vld [vmem:[%s0 + $0xe8] sm:$0xf]
  %v130 = vld [vmem:[%s0 + $0xec] sm:$0xf]
  %v131 = vld [vmem:[%s0 + $0xf0] sm:$0xf]
  %v132 = vld [vmem:[%s0 + $0xf4] sm:$0xf]
  %v133 = vld [vmem:[%s0 + $0xf8] sm:$0xf]
  %v134 = vld [vmem:[%s0 + $0xfc] sm:$0xf]
  %v135 = vld [vmem:[%s0 + $0x100] sm:$0xf]
  %v136 = vld [vmem:[%s0 + $0x104] sm:$0xf]
  %v137 = vld [vmem:[%s0 + $0x108] sm:$0xf]
  %v138 = vld [vmem:[%s0 + $0x10c] sm:$0xf]
  %v139 = vld [vmem:[%s0 + $0x110] sm:$0xf]
  %v140 = vld [vmem:[%s0 + $0x114] sm:$0xf]
  %v141 = vld [vmem:[%s0 + $0x118] sm:$0xf]
  %v142 = vld [vmem:[%s0 + $0x11c] sm:$0xf]
  %v143 = vld [vmem:[%s0 + $0x120] sm:$0xf]
  %v144 = vld [vmem:[%s0 + $0x124] sm:$0xf]
  %v145 = vld [vmem:[%s0 + $0x128] sm:$0xf]
  %v146 = vld [vmem:[%s0 + $0x12c] sm:$0xf]
  %v147 = vld [vmem:[%s0 + $0x130] sm:$0xf]
  %v148 = vld [vmem:[%s0 + $0x134] sm:$0xf]
  %v149 = vld [vmem:[%s0 + $0x138] sm:$0xf]
  %v150 = vld [vmem:[%s0 + $0x13c] sm:$0xf]
  %v151 = vld [vmem:[%s0 + $0x140] sm:$0xf]
  %v152 = vld [vmem:[%s0 + $0x144] sm:$0xf]
  %v153 = vld [vmem:[%s0 + $0x148] sm:$0xf]
  %v154 = vld [vmem:[%s0 + $0x14c] sm:$0xf]
  %v155 = vld [vmem:[%s0 + $0x150] sm:$0xf]
  %v156 = vld [vmem:[%s0 + $0x154] sm:$0xf]
  %v157 = vld [vmem:[%s0 + $0x158] sm:$0xf]
  %v158 = vld [vmem:[%s0 + $0x15c] sm:$0xf]
  %v159 = vld [vmem:[%s0 + $0x160] sm:$0xf]
  %v160 = vld [vmem:[%s0 + $0x164] sm:$0xf]
  %v161 = vld [vmem:[%s0 + $0x168] sm:$0xf]
  %v162 = vld [vmem:[%s0 + $0x16c] sm:$0xf]
  %v163 = vld [vmem:[%s0 + $0x170] sm:$0xf]
  %v164 = vld [vmem:[%s0 + $0x174] sm:$0xf]
  %v165 = vld [vmem:[%s0 + $0x178] sm:$0xf]
  %v166 = vld [vmem:[%s0 + $0x17c] sm:$0xf]
  %v167 = vld [vmem:[%s0 + $0x180] sm:$0xf]
  %v168 = vld [vmem:[%s0 + $0x184] sm:$0xf]
  %v169 = vld [vmem:[%s0 + $0x188] sm:$0xf]
  %v170 = vld [vmem:[%s0 + $0x18c] sm:$0xf]
  %v171 = vld [vmem:[%s0 + $0x190] sm:$0xf]
  %v172 = vld [vmem:[%s0 + $0x194] sm:$0xf]
  %v173 = vld [vmem:[%s0 + $0x198] sm:$0xf]
  %v174 = vld [vmem:[%s0 + $0x19c] sm:$0xf]
  %v175 = vld [vmem:[%s0 + $0x1a0] sm:$0xf]
  %v176 = vld [vmem:[%s0 + $0x1a4] sm:$0xf]
  %v177 = vld [vmem:[%s0 + $0x1a8] sm:$0xf]
  %v178 = vld [vmem:[%s0 + $0x1ac] sm:$0xf]
  %v179 = vld [vmem:[%s0 + $0x1b0] sm:$0xf]
  %v180 = vld [vmem:[%s0 + $0x1b4] sm:$0xf]
  %v181 = vld [vmem:[%s0 + $0x1b8] sm:$0xf]
  %v182 = vld [vmem:[%s0 + $0x1bc] sm:$0xf]
  %v183 = vld [vmem:[%s0 + $0x1c0] sm:$0xf]
  %v184 = vld [vmem:[%s0 + $0x1c4] sm:$0xf]
  %v185 = vld [vmem:[%s0 + $0x1c8] sm:$0xf]
  %v186 = vld [vmem:[%s0 + $0x1cc] sm:$0xf]
  %v187 = vld [vmem:[%s0 + $0x1d0] sm:$0xf]
  %v188 = vld [vmem:[%s0 + $0x1d4] sm:$0xf]
  %v189 = vld [vmem:[%s0 + $0x1d8] sm:$0xf]
  %v190 = vld [vmem:[%s0 + $0x1dc] sm:$0xf]
  %v191 = vld [vmem:[%s0 + $0x1e0] sm:$0xf]
  %v192 = vld [vmem:[%s0 + $0x1e4] sm:$0xf]
  %v193 = vld [vmem:[%s0 + $0x1e8] sm:$0xf]
  %v194 = vld [vmem:[%s0 + $0x1ec] sm:$0xf]
  %v195 = vld [vmem:[%s0 + $0x1f0] sm:$0xf]
  %v196 = vld [vmem:[%s0 + $0x1f4] sm:$0xf]
  %v197 = vld [vmem:[%s0 + $0x1f8] sm:$0xf]
  %v198 = vld [vmem:[%s0 + $0x1fc] sm:$0xf]
  %v199 = vld [vmem:[%s0 + $0x200] sm:$0xf]
  %v200 = vld [vmem:[%s0 + $0x204] sm:$0xf]
  %v201 = vld [vmem:[%s0 + $0x208] sm:$0xf]
  %v202 = vld [vmem:[%s0 + $0x20c] sm:$0xf]
  %v203 = vld [vmem:[%s0 + $0x210] sm:$0xf]
  %v204 = vld [vmem:[%s0 + $0x214] sm:$0xf]
  %v205 = vld [vmem:[%s0 + $0x218] sm:$0xf]
  %v206 = vld [vmem:[%s0 + $0x21c] sm:$0xf]
  %v207 = vld [vmem:[%s0 + $0x220] sm:$0xf]
  %v208 = vld [vmem:[%s0 + $0x224] sm:$0xf]
  %v209 = vld [vmem:[%s0 + $0x228] sm:$0xf]
  %v210 = vld [vmem:[%s0 + $0x22c] sm:$0xf]
  %v211 = vld [vmem:[%s0 + $0x230] sm:$0xf]
  %v212 = vld [vmem:[%s0 + $0x234] sm:$0xf]
  %v213 = vld [vmem:[%s0 + $0x238] sm:$0xf]
  %v214 = vld [vmem:[%s0 + $0x23c] sm:$0xf]
  %v215 = vld [vmem:[%s0 + $0x240] sm:$0xf]
  %v216 = vld [vmem:[%s0 + $0x244] sm:$0xf]
  %v217 = vld [vmem:[%s0 + $0x248] sm:$0xf]
  %v218 = vld [vmem:[%s0 + $0x24c] sm:$0xf]
  %v219 = vld [vmem:[%s0 + $0x250] sm:$0xf]
  %v220 = vld [vmem:[%s0 + $0x254] sm:$0xf]
  %v221 = vld [vmem:[%s0 + $0x258] sm:$0xf]
  %v222 = vld [vmem:[%s0 + $0x25c] sm:$0xf]
  %v223 = vld [vmem:[%s0 + $0x260] sm:$0xf]
  %v224 = vld [vmem:[%s0 + $0x264] sm:$0xf]
  %v225 = vld [vmem:[%s0 + $0x268] sm:$0xf]
  %v226 = vld [vmem:[%s0 + $0x26c] sm:$0xf]
  %v227 = vld [vmem:[%s0 + $0x270] sm:$0xf]
  %v228 = vld [vmem:[%s0 + $0x274] sm:$0xf]
  %v229 = vld [vmem:[%s0 + $0x278] sm:$0xf]
  %v230 = vld [vmem:[%s0 + $0x27c] sm:$0xf]
  %v231 = vld [vmem:[%s0 + $0x280] sm:$0xf]
  %v232 = vld [vmem:[%s0 + $0x284] sm:$0xf]
  %v233 = vld [vmem:[%s0 + $0x288] sm:$0xf]
  %v234 = vld [vmem:[%s0 + $0x28c] sm:$0xf]
  %v235 = vld [vmem:[%s0 + $0x290] sm:$0xf]
  %v236 = vld [vmem:[%s0 + $0x294] sm:$0xf]
  %v237 = vld [vmem:[%s0 + $0x298] sm:$0xf]
  %v238 = vld [vmem:[%s0 + $0x29c] sm:$0xf]
  %v239 = vld [vmem:[%s0 + $0x2a0] sm:$0xf]
  %v240 = vld [vmem:[%s0 + $0x2a4] sm:$0xf]
  %v241 = vld [vmem:[%s0 + $0x2a8] sm:$0xf]
  %v242 = vld [vmem:[%s0 + $0x2ac] sm:$0xf]
  %v243 = vld [vmem:[%s0 + $0x2b0] sm:$0xf]
  %v244 = vld [vmem:[%s0 + $0x2b4] sm:$0xf]
  %v245 = vld [vmem:[%s0 + $0x2b8] sm:$0xf]
  %v246 = vld [vmem:[%s0 + $0x2bc] sm:$0xf]
  %v247 = vld [vmem:[%s0 + $0x2c0] sm:$0xf]
  %v248 = vld [vmem:[%s0 + $0x2c4] sm:$0xf]
  %v249 = vld [vmem:[%s0 + $0x2c8] sm:$0xf]
  %v250 = vld [vmem:[%s0 + $0x2cc] sm:$0xf]
  %v251 = vld [vmem:[%s0 + $0x2d0] sm:$0xf]
  %v252 = vld [vmem:[%s0 + $0x2d4] sm:$0xf]
  %v253 = vld [vmem:[%s0 + $0x2d8] sm:$0xf]
  %v254 = vld [vmem:[%s0 + $0x2dc] sm:$0xf]
  %v255 = vld [vmem:[%s0 + $0x2e0] sm:$0xf]
  %v256 = vld [vmem:[%s0 + $0x2e4] sm:$0xf]
  %v257 = vld [vmem:[%s0 + $0x2e8] sm:$0xf]
  %v258 = vld [vmem:[%s0 + $0x2ec] sm:$0xf]
  %v259 = vld [vmem:[%s0 + $0x2f0] sm:$0xf]
  %v260 = vld [vmem:[%s0 + $0x2f4] sm:$0xf]
  %v261 = vld [vmem:[%s0 + $0x2f8] sm:$0xf]
  %v262 = vld [vmem:[%s0 + $0x2fc] sm:$0xf]
  %v263 = vld [vmem:[%s0 + $0x300] sm:$0xf]
  %v264 = vld [vmem:[%s0 + $0x304] sm:$0xf]
  %v265 = vld [vmem:[%s0 + $0x308] sm:$0xf]
  %v266 = vld [vmem:[%s0 + $0x30c] sm:$0xf]
  %v267 = vld [vmem:[%s0 + $0x310] sm:$0xf]
  %v268 = vld [vmem:[%s0 + $0x314] sm:$0xf]
  %v269 = vld [vmem:[%s0 + $0x318] sm:$0xf]
  %v270 = vld [vmem:[%s0 + $0x31c] sm:$0xf]
  %v271 = vld [vmem:[%s0 + $0x320] sm:$0xf]
  %v272 = vld [vmem:[%s0 + $0x324] sm:$0xf]
  %v273 = vld [vmem:[%s0 + $0x328] sm:$0xf]
  %v274 = vld [vmem:[%s0 + $0x32c] sm:$0xf]
  %v275 = vld [vmem:[%s0 + $0x330] sm:$0xf]
  %v276 = vld [vmem:[%s0 + $0x334] sm:$0xf]
  %v277 = vld [vmem:[%s0 + $0x338] sm:$0xf]
  %v278 = vld [vmem:[%s0 + $0x33c] sm:$0xf]
  %v279 = vld [vmem:[%s0 + $0x340] sm:$0xf]
  %v280 = vld [vmem:[%s0 + $0x344] sm:$0xf]
  %v281 = vld [vmem:[%s0 + $0x348] sm:$0xf]
  %v282 = vld [vmem:[%s0 + $0x34c] sm:$0xf]
  %v283 = vld [vmem:[%s0 + $0x350] sm:$0xf]
  %v284 = vld [vmem:[%s0 + $0x354] sm:$0xf]
  %v285 = vld [vmem:[%s0 + $0x358] sm:$0xf]
  %v286 = vld [vmem:[%s0 + $0x35c] sm:$0xf]
  %v287 = vld [vmem:[%s0 + $0x360] sm:$0xf]
  %v288 = vld [vmem:[%s0 + $0x364] sm:$0xf]
  %v289 = vld [vmem:[%s0 + $0x368] sm:$0xf]
  %v290 = vld [vmem:[%s0 + $0x36c] sm:$0xf]
  %v291 = vld [vmem:[%s0 + $0x370] sm:$0xf]
  %v292 = vld [vmem:[%s0 + $0x374] sm:$0xf]
  %v293 = vld [vmem:[%s0 + $0x378] sm:$0xf]
  %v294 = vld [vmem:[%s0 + $0x37c] sm:$0xf]
  %v295 = vld [vmem:[%s0 + $0x380] sm:$0xf]
  %v296 = vld [vmem:[%s0 + $0x384] sm:$0xf]
  %v297 = vld [vmem:[%s0 + $0x388] sm:$0xf]
  %v298 = vld [vmem:[%s0 + $0x38c] sm:$0xf]
  %v299 = vld [vmem:[%s0 + $0x390] sm:$0xf]
  %v300 = vld [vmem:[%s0 + $0x394] sm:$0xf]
  %v301 = vld [vmem:[%s0 + $0x398] sm:$0xf]
  %v302 = vld [vmem:[%s0 + $0x39c] sm:$0xf]
  %v303 = vld [vmem:[%s0 + $0x3a0] sm:$0xf]
  %v304 = vld [vmem:[%s0 + $0x3a4] sm:$0xf]
  %v305 = vld [vmem:[%s0 + $0x3a8] sm:$0xf]
  %v306 = vld [vmem:[%s0 + $0x3ac] sm:$0xf]
  %v307 = vld [vmem:[%s0 + $0x3b0] sm:$0xf]
  %v308 = vld [vmem:[%s0 + $0x3b4] sm:$0xf]
  %v309 = vld [vmem:[%s0 + $0x3b8] sm:$0xf]
  %v310 = vld [vmem:[%s0 + $0x3bc] sm:$0xf]
  %v311 = vld [vmem:[%s0 + $0x3c0] sm:$0xf]
  %v312 = vld [vmem:[%s0 + $0x3c4] sm:$0xf]
  %v313 = vld [vmem:[%s0 + $0x3c8] sm:$0xf]
  %v314 = vld [vmem:[%s0 + $0x3cc] sm:$0xf]
  %v315 = vld [vmem:[%s0 + $0x3d0] sm:$0xf]
  %v316 = vld [vmem:[%s0 + $0x3d4] sm:$0xf]
  %v317 = vld [vmem:[%s0 + $0x3d8] sm:$0xf]
  %v318 = vld [vmem:[%s0 + $0x3dc] sm:$0xf]
  %v319 = vld [vmem:[%s0 + $0x3e0] sm:$0xf]
  %v320 = vld [vmem:[%s0 + $0x3e4] sm:$0xf]
  %v321 = vld [vmem:[%s0 + $0x3e8] sm:$0xf]
  %v322 = vld [vmem:[%s0 + $0x3ec] sm:$0xf]
  %v323 = vld [vmem:[%s0 + $0x3f0] sm:$0xf]
  %v324 = vld [vmem:[%s0 + $0x3f4] sm:$0xf]
  %v325 = vld [vmem:[%s0 + $0x3f8] sm:$0xf]
  %v326 = vld [vmem:[%s0 + $0x3fc] sm:$0xf]
  %v327 = vld [vmem:[%s2] sm:$0xf]
  %v328 = vld [vmem:[%s2 + $0x4] sm:$0xf]
  %v329 = vld [vmem:[%s2 + $0x8] sm:$0xf]
  %v330 = vld [vmem:[%s2 + $0xc] sm:$0xf]
  %v331 = vld [vmem:[%s2 + $0x10] sm:$0xf]
  %v332 = vld [vmem:[%s2 + $0x14] sm:$0xf]
  %v333 = vld [vmem:[%s2 + $0x18] sm:$0xf]
  %v334 = vld [vmem:[%s2 + $0x1c] sm:$0xf]
  %v335 = vld [vmem:[%s2 + $0x20] sm:$0xf]
  %v336 = vld [vmem:[%s2 + $0x24] sm:$0xf]
  %v337 = vld [vmem:[%s2 + $0x28] sm:$0xf]
  %v338 = vld [vmem:[%s2 + $0x2c] sm:$0xf]
  %v339 = vld [vmem:[%s2 + $0x30] sm:$0xf]
  %v340 = vld [vmem:[%s2 + $0x34] sm:$0xf]
  %v341 = vld [vmem:[%s2 + $0x38] sm:$0xf]
  %v342 = vld [vmem:[%s2 + $0x3c] sm:$0xf]
  %v343 = vld [vmem:[%s3] sm:$0x1]
  %v345 = vperm.slane %v343, 0
  %v603 = vunpack.c.l.b16 %v71
  %v604 = vunpack.c.l.b16 %v72
  %v605 = vunpack.c.l.b16 %v73
  %v606 = vunpack.c.l.b16 %v74
  %v607 = vunpack.c.l.b16 %v75
  %v608 = vunpack.c.l.b16 %v76
  %v609 = vunpack.c.l.b16 %v77
  %v610 = vunpack.c.l.b16 %v78
  %v611 = vunpack.c.l.b16 %v79
  %v612 = vunpack.c.l.b16 %v80
  %v613 = vunpack.c.l.b16 %v81
  %v614 = vunpack.c.l.b16 %v82
  %v615 = vunpack.c.l.b16 %v83
  %v616 = vunpack.c.l.b16 %v84
  %v617 = vunpack.c.l.b16 %v85
  %v618 = vunpack.c.l.b16 %v86
  %v619 = vunpack.c.l.b16 %v87
  %v620 = vunpack.c.l.b16 %v88
  %v621 = vunpack.c.l.b16 %v89
  %v622 = vunpack.c.l.b16 %v90
  %v623 = vunpack.c.l.b16 %v91
  %v624 = vunpack.c.l.b16 %v92
  %v625 = vunpack.c.l.b16 %v93
  %v626 = vunpack.c.l.b16 %v94
  %v627 = vunpack.c.l.b16 %v95
  %v628 = vunpack.c.l.b16 %v96
  %v629 = vunpack.c.l.b16 %v97
  %v630 = vunpack.c.l.b16 %v98
  %v631 = vunpack.c.l.b16 %v99
  %v632 = vunpack.c.l.b16 %v100
  %v633 = vunpack.c.l.b16 %v101
  %v634 = vunpack.c.l.b16 %v102
  %v635 = vunpack.c.l.b16 %v103
  %v636 = vunpack.c.l.b16 %v104
  %v637 = vunpack.c.l.b16 %v105
  %v638 = vunpack.c.l.b16 %v106
  %v639 = vunpack.c.l.b16 %v107
  %v640 = vunpack.c.l.b16 %v108
  %v641 = vunpack.c.l.b16 %v109
  %v642 = vunpack.c.l.b16 %v110
  %v643 = vunpack.c.l.b16 %v111
  %v644 = vunpack.c.l.b16 %v112
  %v645 = vunpack.c.l.b16 %v113
  %v646 = vunpack.c.l.b16 %v114
  %v647 = vunpack.c.l.b16 %v115
  %v648 = vunpack.c.l.b16 %v116
  %v649 = vunpack.c.l.b16 %v117
  %v650 = vunpack.c.l.b16 %v118
  %v651 = vunpack.c.l.b16 %v119
  %v652 = vunpack.c.l.b16 %v120
  %v653 = vunpack.c.l.b16 %v121
  %v654 = vunpack.c.l.b16 %v122
  %v655 = vunpack.c.l.b16 %v123
  %v656 = vunpack.c.l.b16 %v124
  %v657 = vunpack.c.l.b16 %v125
  %v658 = vunpack.c.l.b16 %v126
  %v659 = vunpack.c.l.b16 %v127
  %v660 = vunpack.c.l.b16 %v128
  %v661 = vunpack.c.l.b16 %v129
  %v662 = vunpack.c.l.b16 %v130
  %v663 = vunpack.c.l.b16 %v131
  %v664 = vunpack.c.l.b16 %v132
  %v665 = vunpack.c.l.b16 %v133
  %v666 = vunpack.c.l.b16 %v134
  %v667 = vunpack.c.l.b16 %v135
  %v668 = vunpack.c.l.b16 %v136
  %v669 = vunpack.c.l.b16 %v137
  %v670 = vunpack.c.l.b16 %v138
  %v671 = vunpack.c.l.b16 %v139
  %v672 = vunpack.c.l.b16 %v140
  %v673 = vunpack.c.l.b16 %v141
  %v674 = vunpack.c.l.b16 %v142
  %v675 = vunpack.c.l.b16 %v143
  %v676 = vunpack.c.l.b16 %v144
  %v677 = vunpack.c.l.b16 %v145
  %v678 = vunpack.c.l.b16 %v146
  %v679 = vunpack.c.l.b16 %v147
  %v680 = vunpack.c.l.b16 %v148
  %v681 = vunpack.c.l.b16 %v149
  %v682 = vunpack.c.l.b16 %v150
  %v683 = vunpack.c.l.b16 %v151
  %v684 = vunpack.c.l.b16 %v152
  %v685 = vunpack.c.l.b16 %v153
  %v686 = vunpack.c.l.b16 %v154
  %v687 = vunpack.c.l.b16 %v155
  %v688 = vunpack.c.l.b16 %v156
  %v689 = vunpack.c.l.b16 %v157
  %v690 = vunpack.c.l.b16 %v158
  %v691 = vunpack.c.l.b16 %v159
  %v692 = vunpack.c.l.b16 %v160
  %v693 = vunpack.c.l.b16 %v161
  %v694 = vunpack.c.l.b16 %v162
  %v695 = vunpack.c.l.b16 %v163
  %v696 = vunpack.c.l.b16 %v164
  %v697 = vunpack.c.l.b16 %v165
  %v698 = vunpack.c.l.b16 %v166
  %v699 = vunpack.c.l.b16 %v167
  %v700 = vunpack.c.l.b16 %v168
  %v701 = vunpack.c.l.b16 %v169
  %v702 = vunpack.c.l.b16 %v170
  %v703 = vunpack.c.l.b16 %v171
  %v704 = vunpack.c.l.b16 %v172
  %v705 = vunpack.c.l.b16 %v173
  %v706 = vunpack.c.l.b16 %v174
  %v707 = vunpack.c.l.b16 %v175
  %v708 = vunpack.c.l.b16 %v176
  %v709 = vunpack.c.l.b16 %v177
  %v710 = vunpack.c.l.b16 %v178
  %v711 = vunpack.c.l.b16 %v179
  %v712 = vunpack.c.l.b16 %v180
  %v713 = vunpack.c.l.b16 %v181
  %v714 = vunpack.c.l.b16 %v182
  %v715 = vunpack.c.l.b16 %v183
  %v716 = vunpack.c.l.b16 %v184
  %v717 = vunpack.c.l.b16 %v185
  %v718 = vunpack.c.l.b16 %v186
  %v719 = vunpack.c.l.b16 %v187
  %v720 = vunpack.c.l.b16 %v188
  %v721 = vunpack.c.l.b16 %v189
  %v722 = vunpack.c.l.b16 %v190
  %v723 = vunpack.c.l.b16 %v191
  %v724 = vunpack.c.l.b16 %v192
  %v725 = vunpack.c.l.b16 %v193
  %v726 = vunpack.c.l.b16 %v194
  %v727 = vunpack.c.l.b16 %v195
  %v728 = vunpack.c.l.b16 %v196
  %v729 = vunpack.c.l.b16 %v197
  %v730 = vunpack.c.l.b16 %v198
  %v731 = vunpack.c.l.b16 %v199
  %v732 = vunpack.c.l.b16 %v200
  %v733 = vunpack.c.l.b16 %v201
  %v734 = vunpack.c.l.b16 %v202
  %v735 = vunpack.c.l.b16 %v203
  %v736 = vunpack.c.l.b16 %v204
  %v737 = vunpack.c.l.b16 %v205
  %v738 = vunpack.c.l.b16 %v206
  %v739 = vunpack.c.l.b16 %v207
  %v740 = vunpack.c.l.b16 %v208
  %v741 = vunpack.c.l.b16 %v209
  %v742 = vunpack.c.l.b16 %v210
  %v743 = vunpack.c.l.b16 %v211
  %v744 = vunpack.c.l.b16 %v212
  %v745 = vunpack.c.l.b16 %v213
  %v746 = vunpack.c.l.b16 %v214
  %v747 = vunpack.c.l.b16 %v215
  %v748 = vunpack.c.l.b16 %v216
  %v749 = vunpack.c.l.b16 %v217
  %v750 = vunpack.c.l.b16 %v218
  %v751 = vunpack.c.l.b16 %v219
  %v752 = vunpack.c.l.b16 %v220
  %v753 = vunpack.c.l.b16 %v221
  %v754 = vunpack.c.l.b16 %v222
  %v755 = vunpack.c.l.b16 %v223
  %v756 = vunpack.c.l.b16 %v224
  %v757 = vunpack.c.l.b16 %v225
  %v758 = vunpack.c.l.b16 %v226
  %v759 = vunpack.c.l.b16 %v227
  %v760 = vunpack.c.l.b16 %v228
  %v761 = vunpack.c.l.b16 %v229
  %v762 = vunpack.c.l.b16 %v230
  %v763 = vunpack.c.l.b16 %v231
  %v764 = vunpack.c.l.b16 %v232
  %v765 = vunpack.c.l.b16 %v233
  %v766 = vunpack.c.l.b16 %v234
  %v767 = vunpack.c.l.b16 %v235
  %v768 = vunpack.c.l.b16 %v236
  %v769 = vunpack.c.l.b16 %v237
  %v770 = vunpack.c.l.b16 %v238
  %v771 = vunpack.c.l.b16 %v239
  %v772 = vunpack.c.l.b16 %v240
  %v773 = vunpack.c.l.b16 %v241
  %v774 = vunpack.c.l.b16 %v242
  %v775 = vunpack.c.l.b16 %v243
  %v776 = vunpack.c.l.b16 %v244
  %v777 = vunpack.c.l.b16 %v245
  %v778 = vunpack.c.l.b16 %v246
  %v779 = vunpack.c.l.b16 %v247
  %v780 = vunpack.c.l.b16 %v248
  %v781 = vunpack.c.l.b16 %v249
  %v782 = vunpack.c.l.b16 %v250
  %v783 = vunpack.c.l.b16 %v251
  %v784 = vunpack.c.l.b16 %v252
  %v785 = vunpack.c.l.b16 %v253
  %v786 = vunpack.c.l.b16 %v254
  %v787 = vunpack.c.l.b16 %v255
  %v788 = vunpack.c.l.b16 %v256
  %v789 = vunpack.c.l.b16 %v257
  %v790 = vunpack.c.l.b16 %v258
  %v791 = vunpack.c.l.b16 %v259
  %v792 = vunpack.c.l.b16 %v260
  %v793 = vunpack.c.l.b16 %v261
  %v794 = vunpack.c.l.b16 %v262
  %v795 = vunpack.c.l.b16 %v263
  %v796 = vunpack.c.l.b16 %v264
  %v797 = vunpack.c.l.b16 %v265
  %v798 = vunpack.c.l.b16 %v266
  %v799 = vunpack.c.l.b16 %v267
  %v800 = vunpack.c.l.b16 %v268
  %v801 = vunpack.c.l.b16 %v269
  %v802 = vunpack.c.l.b16 %v270
  %v803 = vunpack.c.l.b16 %v271
  %v804 = vunpack.c.l.b16 %v272
  %v805 = vunpack.c.l.b16 %v273
  %v806 = vunpack.c.l.b16 %v274
  %v807 = vunpack.c.l.b16 %v275
  %v808 = vunpack.c.l.b16 %v276
  %v809 = vunpack.c.l.b16 %v277
  %v810 = vunpack.c.l.b16 %v278
  %v811 = vunpack.c.l.b16 %v279
  %v812 = vunpack.c.l.b16 %v280
  %v813 = vunpack.c.l.b16 %v281
  %v814 = vunpack.c.l.b16 %v282
  %v815 = vunpack.c.l.b16 %v283
  %v816 = vunpack.c.l.b16 %v284
  %v817 = vunpack.c.l.b16 %v285
  %v818 = vunpack.c.l.b16 %v286
  %v819 = vunpack.c.l.b16 %v287
  %v820 = vunpack.c.l.b16 %v288
  %v821 = vunpack.c.l.b16 %v289
  %v822 = vunpack.c.l.b16 %v290
  %v823 = vunpack.c.l.b16 %v291
  %v824 = vunpack.c.l.b16 %v292
  %v825 = vunpack.c.l.b16 %v293
  %v826 = vunpack.c.l.b16 %v294
  %v827 = vunpack.c.l.b16 %v295
  %v828 = vunpack.c.l.b16 %v296
  %v829 = vunpack.c.l.b16 %v297
  %v830 = vunpack.c.l.b16 %v298
  %v831 = vunpack.c.l.b16 %v299
  %v832 = vunpack.c.l.b16 %v300
  %v833 = vunpack.c.l.b16 %v301
  %v834 = vunpack.c.l.b16 %v302
  %v835 = vunpack.c.l.b16 %v303
  %v836 = vunpack.c.l.b16 %v304
  %v837 = vunpack.c.l.b16 %v305
  %v838 = vunpack.c.l.b16 %v306
  %v839 = vunpack.c.l.b16 %v307
  %v840 = vunpack.c.l.b16 %v308
  %v841 = vunpack.c.l.b16 %v309
  %v842 = vunpack.c.l.b16 %v310
  %v843 = vunpack.c.l.b16 %v311
  %v844 = vunpack.c.l.b16 %v312
  %v845 = vunpack.c.l.b16 %v313
  %v846 = vunpack.c.l.b16 %v314
  %v847 = vunpack.c.l.b16 %v315
  %v848 = vunpack.c.l.b16 %v316
  %v849 = vunpack.c.l.b16 %v317
  %v850 = vunpack.c.l.b16 %v318
  %v851 = vunpack.c.l.b16 %v319
  %v852 = vunpack.c.l.b16 %v320
  %v853 = vunpack.c.l.b16 %v321
  %v854 = vunpack.c.l.b16 %v322
  %v855 = vunpack.c.l.b16 %v323
  %v856 = vunpack.c.l.b16 %v324
  %v857 = vunpack.c.l.b16 %v325
  %v858 = vunpack.c.l.b16 %v326
  %v859 = vpack.c.b16 %v604, %v603
  %v860 = vpack.c.b16 %v606, %v605
  %v861 = vpack.c.b16 %v608, %v607
  %v862 = vpack.c.b16 %v610, %v609
  %v863 = vpack.c.b16 %v612, %v611
  %v864 = vpack.c.b16 %v614, %v613
  %v865 = vpack.c.b16 %v616, %v615
  %v866 = vpack.c.b16 %v618, %v617
  %v867 = vpack.c.b16 %v620, %v619
  %v868 = vpack.c.b16 %v622, %v621
  %v869 = vpack.c.b16 %v624, %v623
  %v870 = vpack.c.b16 %v626, %v625
  %v871 = vpack.c.b16 %v628, %v627
  %v872 = vpack.c.b16 %v630, %v629
  %v873 = vpack.c.b16 %v632, %v631
  %v874 = vpack.c.b16 %v634, %v633
  %v875 = vpack.c.b16 %v636, %v635
  %v876 = vpack.c.b16 %v638, %v637
  %v877 = vpack.c.b16 %v640, %v639
  %v878 = vpack.c.b16 %v642, %v641
  %v879 = vpack.c.b16 %v644, %v643
  %v880 = vpack.c.b16 %v646, %v645
  %v881 = vpack.c.b16 %v648, %v647
  %v882 = vpack.c.b16 %v650, %v649
  %v883 = vpack.c.b16 %v652, %v651
  %v884 = vpack.c.b16 %v654, %v653
  %v885 = vpack.c.b16 %v656, %v655
  %v886 = vpack.c.b16 %v658, %v657
  %v887 = vpack.c.b16 %v660, %v659
  %v888 = vpack.c.b16 %v662, %v661
  %v889 = vpack.c.b16 %v664, %v663
  %v890 = vpack.c.b16 %v666, %v665
  %v891 = vpack.c.b16 %v668, %v667
  %v892 = vpack.c.b16 %v670, %v669
  %v893 = vpack.c.b16 %v672, %v671
  %v894 = vpack.c.b16 %v674, %v673
  %v895 = vpack.c.b16 %v676, %v675
  %v896 = vpack.c.b16 %v678, %v677
  %v897 = vpack.c.b16 %v680, %v679
  %v898 = vpack.c.b16 %v682, %v681
  %v899 = vpack.c.b16 %v684, %v683
  %v900 = vpack.c.b16 %v686, %v685
  %v901 = vpack.c.b16 %v688, %v687
  %v902 = vpack.c.b16 %v690, %v689
  %v903 = vpack.c.b16 %v692, %v691
  %v904 = vpack.c.b16 %v694, %v693
  %v905 = vpack.c.b16 %v696, %v695
  %v906 = vpack.c.b16 %v698, %v697
  %v907 = vpack.c.b16 %v700, %v699
  %v908 = vpack.c.b16 %v702, %v701
  %v909 = vpack.c.b16 %v704, %v703
  %v910 = vpack.c.b16 %v706, %v705
  %v911 = vpack.c.b16 %v708, %v707
  %v912 = vpack.c.b16 %v710, %v709
  %v913 = vpack.c.b16 %v712, %v711
  %v914 = vpack.c.b16 %v714, %v713
  %v915 = vpack.c.b16 %v716, %v715
  %v916 = vpack.c.b16 %v718, %v717
  %v917 = vpack.c.b16 %v720, %v719
  %v918 = vpack.c.b16 %v722, %v721
  %v919 = vpack.c.b16 %v724, %v723
  %v920 = vpack.c.b16 %v726, %v725
  %v921 = vpack.c.b16 %v728, %v727
  %v922 = vpack.c.b16 %v730, %v729
  %v923 = vpack.c.b16 %v732, %v731
  %v924 = vpack.c.b16 %v734, %v733
  %v925 = vpack.c.b16 %v736, %v735
  %v926 = vpack.c.b16 %v738, %v737
  %v927 = vpack.c.b16 %v740, %v739
  %v928 = vpack.c.b16 %v742, %v741
  %v929 = vpack.c.b16 %v744, %v743
  %v930 = vpack.c.b16 %v746, %v745
  %v931 = vpack.c.b16 %v748, %v747
  %v932 = vpack.c.b16 %v750, %v749
  %v933 = vpack.c.b16 %v752, %v751
  %v934 = vpack.c.b16 %v754, %v753
  %v935 = vpack.c.b16 %v756, %v755
  %v936 = vpack.c.b16 %v758, %v757
  %v937 = vpack.c.b16 %v760, %v759
  %v938 = vpack.c.b16 %v762, %v761
  %v939 = vpack.c.b16 %v764, %v763
  %v940 = vpack.c.b16 %v766, %v765
  %v941 = vpack.c.b16 %v768, %v767
  %v942 = vpack.c.b16 %v770, %v769
  %v943 = vpack.c.b16 %v772, %v771
  %v944 = vpack.c.b16 %v774, %v773
  %v945 = vpack.c.b16 %v776, %v775
  %v946 = vpack.c.b16 %v778, %v777
  %v947 = vpack.c.b16 %v780, %v779
  %v948 = vpack.c.b16 %v782, %v781
  %v949 = vpack.c.b16 %v784, %v783
  %v950 = vpack.c.b16 %v786, %v785
  %v951 = vpack.c.b16 %v788, %v787
  %v952 = vpack.c.b16 %v790, %v789
  %v953 = vpack.c.b16 %v792, %v791
  %v954 = vpack.c.b16 %v794, %v793
  %v955 = vpack.c.b16 %v796, %v795
  %v956 = vpack.c.b16 %v798, %v797
  %v957 = vpack.c.b16 %v800, %v799
  %v958 = vpack.c.b16 %v802, %v801
  %v959 = vpack.c.b16 %v804, %v803
  %v960 = vpack.c.b16 %v806, %v805
  %v961 = vpack.c.b16 %v808, %v807
  %v962 = vpack.c.b16 %v810, %v809
  %v963 = vpack.c.b16 %v812, %v811
  %v964 = vpack.c.b16 %v814, %v813
  %v965 = vpack.c.b16 %v816, %v815
  %v966 = vpack.c.b16 %v818, %v817
  %v967 = vpack.c.b16 %v820, %v819
  %v968 = vpack.c.b16 %v822, %v821
  %v969 = vpack.c.b16 %v824, %v823
  %v970 = vpack.c.b16 %v826, %v825
  %v971 = vpack.c.b16 %v828, %v827
  %v972 = vpack.c.b16 %v830, %v829
  %v973 = vpack.c.b16 %v832, %v831
  %v974 = vpack.c.b16 %v834, %v833
  %v975 = vpack.c.b16 %v836, %v835
  %v976 = vpack.c.b16 %v838, %v837
  %v977 = vpack.c.b16 %v840, %v839
  %v978 = vpack.c.b16 %v842, %v841
  %v979 = vpack.c.b16 %v844, %v843
  %v980 = vpack.c.b16 %v846, %v845
  %v981 = vpack.c.b16 %v848, %v847
  %v982 = vpack.c.b16 %v850, %v849
  %v983 = vpack.c.b16 %v852, %v851
  %v984 = vpack.c.b16 %v854, %v853
  %v985 = vpack.c.b16 %v856, %v855
  %v986 = vpack.c.b16 %v858, %v857
  %v1131 = vunpack.c.l.b16 %v327
  %v1132 = vunpack.c.l.b16 %v328
  %v1133 = vunpack.c.l.b16 %v329
  %v1134 = vunpack.c.l.b16 %v330
  %v1135 = vunpack.c.l.b16 %v331
  %v1136 = vunpack.c.l.b16 %v332
  %v1137 = vunpack.c.l.b16 %v333
  %v1138 = vunpack.c.l.b16 %v334
  %v1139 = vunpack.c.l.b16 %v335
  %v1140 = vunpack.c.l.b16 %v336
  %v1141 = vunpack.c.l.b16 %v337
  %v1142 = vunpack.c.l.b16 %v338
  %v1143 = vunpack.c.l.b16 %v339
  %v1144 = vunpack.c.l.b16 %v340
  %v1145 = vunpack.c.l.b16 %v341
  %v1146 = vunpack.c.l.b16 %v342
  %v1147 = vpack.c.b16 %v1132, %v1131
  %v1148 = vpack.c.b16 %v1134, %v1133
  %v1149 = vpack.c.b16 %v1136, %v1135
  %v1150 = vpack.c.b16 %v1138, %v1137
  %v1151 = vpack.c.b16 %v1140, %v1139
  %v1152 = vpack.c.b16 %v1142, %v1141
  %v1153 = vpack.c.b16 %v1144, %v1143
  %v1154 = vpack.c.b16 %v1146, %v1145
  %1163 = vmatpush.bf16.msra.mxu0 %v1154
  %1164 = vmatpush.bf16.msra.mxu0 %v1153
  %1165 = vmatpush.bf16.msra.mxu0 %v1152
  %1166 = vmatpush.bf16.msra.mxu0 %v1151
  %1167 = vmatpush.bf16.msra.mxu0 %v1150
  %1168 = vmatpush.bf16.msra.mxu0 %v1149
  %1169 = vmatpush.bf16.msra.mxu0 %v1148
  %1170 = vmatpush.bf16.msra.mxu0 %v1147
  %1171 = vmatmul.bf16.gmra.mxu0 %v859
  %v1172 = vpop.f32.mrf.mxu0
  %v1173 = vadd.f32 %v345, %v1172
  %v1174 = vpop.f32.mrf.mxu0
  %v1175 = vadd.f32 %v345, %v1174
  %1176 = vmatmul.bf16.gmra.mxu0 %v860
  %v1177 = vpop.f32.mrf.mxu0
  %v1178 = vadd.f32 %v345, %v1177
  %v1179 = vpop.f32.mrf.mxu0
  %v1180 = vadd.f32 %v345, %v1179
  %1181 = vmatmul.bf16.gmra.mxu0 %v861
  %v1182 = vpop.f32.mrf.mxu0
  %v1183 = vadd.f32 %v345, %v1182
  %v1184 = vpop.f32.mrf.mxu0
  %v1185 = vadd.f32 %v345, %v1184
  %1186 = vmatmul.bf16.gmra.mxu0 %v862
  %v1187 = vpop.f32.mrf.mxu0
  %v1188 = vadd.f32 %v345, %v1187
  %v1189 = vpop.f32.mrf.mxu0
  %v1190 = vadd.f32 %v345, %v1189
  %1191 = vmatmul.bf16.gmra.mxu0 %v863
  %v1192 = vpop.f32.mrf.mxu0
  %v1193 = vadd.f32 %v345, %v1192
  %v1194 = vpop.f32.mrf.mxu0
  %v1195 = vadd.f32 %v345, %v1194
  %1196 = vmatmul.bf16.gmra.mxu0 %v864
  %v1197 = vpop.f32.mrf.mxu0
  %v1198 = vadd.f32 %v345, %v1197
  %v1199 = vpop.f32.mrf.mxu0
  %v1200 = vadd.f32 %v345, %v1199
  %1201 = vmatmul.bf16.gmra.mxu0 %v865
  %v1202 = vpop.f32.mrf.mxu0
  %v1203 = vadd.f32 %v345, %v1202
  %v1204 = vpop.f32.mrf.mxu0
  %v1205 = vadd.f32 %v345, %v1204
  %1206 = vmatmul.bf16.gmra.mxu0 %v866
  %v1207 = vpop.f32.mrf.mxu0
  %v1208 = vadd.f32 %v345, %v1207
  %v1209 = vpop.f32.mrf.mxu0
  %v1210 = vadd.f32 %v345, %v1209
  %1211 = vmatmul.bf16.gmra.mxu0 %v867
  %v1212 = vpop.f32.mrf.mxu0
  %v1213 = vadd.f32 %v345, %v1212
  %v1214 = vpop.f32.mrf.mxu0
  %v1215 = vadd.f32 %v345, %v1214
  %1216 = vmatmul.bf16.gmra.mxu0 %v868
  %v1217 = vpop.f32.mrf.mxu0
  %v1218 = vadd.f32 %v345, %v1217
  %v1219 = vpop.f32.mrf.mxu0
  %v1220 = vadd.f32 %v345, %v1219
  %1221 = vmatmul.bf16.gmra.mxu0 %v869
  %v1222 = vpop.f32.mrf.mxu0
  %v1223 = vadd.f32 %v345, %v1222
  %v1224 = vpop.f32.mrf.mxu0
  %v1225 = vadd.f32 %v345, %v1224
  %1226 = vmatmul.bf16.gmra.mxu0 %v870
  %v1227 = vpop.f32.mrf.mxu0
  %v1228 = vadd.f32 %v345, %v1227
  %v1229 = vpop.f32.mrf.mxu0
  %v1230 = vadd.f32 %v345, %v1229
  %1231 = vmatmul.bf16.gmra.mxu0 %v871
  %v1232 = vpop.f32.mrf.mxu0
  %v1233 = vadd.f32 %v345, %v1232
  %v1234 = vpop.f32.mrf.mxu0
  %v1235 = vadd.f32 %v345, %v1234
  %1236 = vmatmul.bf16.gmra.mxu0 %v872
  %v1237 = vpop.f32.mrf.mxu0
  %v1238 = vadd.f32 %v345, %v1237
  %v1239 = vpop.f32.mrf.mxu0
  %v1240 = vadd.f32 %v345, %v1239
  %1241 = vmatmul.bf16.gmra.mxu0 %v873
  %v1242 = vpop.f32.mrf.mxu0
  %v1243 = vadd.f32 %v345, %v1242
  %v1244 = vpop.f32.mrf.mxu0
  %v1245 = vadd.f32 %v345, %v1244
  %1246 = vmatmul.bf16.gmra.mxu0 %v874
  %v1247 = vpop.f32.mrf.mxu0
  %v1248 = vadd.f32 %v345, %v1247
  %v1249 = vpop.f32.mrf.mxu0
  %v1250 = vadd.f32 %v345, %v1249
  %1251 = vmatmul.bf16.gmra.mxu0 %v875
  %v1252 = vpop.f32.mrf.mxu0
  %v1253 = vadd.f32 %v345, %v1252
  %v1254 = vpop.f32.mrf.mxu0
  %v1255 = vadd.f32 %v345, %v1254
  %1256 = vmatmul.bf16.gmra.mxu0 %v876
  %v1257 = vpop.f32.mrf.mxu0
  %v1258 = vadd.f32 %v345, %v1257
  %v1259 = vpop.f32.mrf.mxu0
  %v1260 = vadd.f32 %v345, %v1259
  %1261 = vmatmul.bf16.gmra.mxu0 %v877
  %v1262 = vpop.f32.mrf.mxu0
  %v1263 = vadd.f32 %v345, %v1262
  %v1264 = vpop.f32.mrf.mxu0
  %v1265 = vadd.f32 %v345, %v1264
  %1266 = vmatmul.bf16.gmra.mxu0 %v878
  %v1267 = vpop.f32.mrf.mxu0
  %v1268 = vadd.f32 %v345, %v1267
  %v1269 = vpop.f32.mrf.mxu0
  %v1270 = vadd.f32 %v345, %v1269
  %1271 = vmatmul.bf16.gmra.mxu0 %v879
  %v1272 = vpop.f32.mrf.mxu0
  %v1273 = vadd.f32 %v345, %v1272
  %v1274 = vpop.f32.mrf.mxu0
  %v1275 = vadd.f32 %v345, %v1274
  %1276 = vmatmul.bf16.gmra.mxu0 %v880
  %v1277 = vpop.f32.mrf.mxu0
  %v1278 = vadd.f32 %v345, %v1277
  %v1279 = vpop.f32.mrf.mxu0
  %v1280 = vadd.f32 %v345, %v1279
  %1281 = vmatmul.bf16.gmra.mxu0 %v881
  %v1282 = vpop.f32.mrf.mxu0
  %v1283 = vadd.f32 %v345, %v1282
  %v1284 = vpop.f32.mrf.mxu0
  %v1285 = vadd.f32 %v345, %v1284
  %1286 = vmatmul.bf16.gmra.mxu0 %v882
  %v1287 = vpop.f32.mrf.mxu0
  %v1288 = vadd.f32 %v345, %v1287
  %v1289 = vpop.f32.mrf.mxu0
  %v1290 = vadd.f32 %v345, %v1289
  %1291 = vmatmul.bf16.gmra.mxu0 %v883
  %v1292 = vpop.f32.mrf.mxu0
  %v1293 = vadd.f32 %v345, %v1292
  %v1294 = vpop.f32.mrf.mxu0
  %v1295 = vadd.f32 %v345, %v1294
  %1296 = vmatmul.bf16.gmra.mxu0 %v884
  %v1297 = vpop.f32.mrf.mxu0
  %v1298 = vadd.f32 %v345, %v1297
  %v1299 = vpop.f32.mrf.mxu0
  %v1300 = vadd.f32 %v345, %v1299
  %1301 = vmatmul.bf16.gmra.mxu0 %v885
  %v1302 = vpop.f32.mrf.mxu0
  %v1303 = vadd.f32 %v345, %v1302
  %v1304 = vpop.f32.mrf.mxu0
  %v1305 = vadd.f32 %v345, %v1304
  %1306 = vmatmul.bf16.gmra.mxu0 %v886
  %v1307 = vpop.f32.mrf.mxu0
  %v1308 = vadd.f32 %v345, %v1307
  %v1309 = vpop.f32.mrf.mxu0
  %v1310 = vadd.f32 %v345, %v1309
  %1311 = vmatmul.bf16.gmra.mxu0 %v887
  %v1312 = vpop.f32.mrf.mxu0
  %v1313 = vadd.f32 %v345, %v1312
  %v1314 = vpop.f32.mrf.mxu0
  %v1315 = vadd.f32 %v345, %v1314
  %1316 = vmatmul.bf16.gmra.mxu0 %v888
  %v1317 = vpop.f32.mrf.mxu0
  %v1318 = vadd.f32 %v345, %v1317
  %v1319 = vpop.f32.mrf.mxu0
  %v1320 = vadd.f32 %v345, %v1319
  %1321 = vmatmul.bf16.gmra.mxu0 %v889
  %v1322 = vpop.f32.mrf.mxu0
  %v1323 = vadd.f32 %v345, %v1322
  %v1324 = vpop.f32.mrf.mxu0
  %v1325 = vadd.f32 %v345, %v1324
  %1326 = vmatmul.bf16.gmra.mxu0 %v890
  %v1327 = vpop.f32.mrf.mxu0
  %v1328 = vadd.f32 %v345, %v1327
  %v1329 = vpop.f32.mrf.mxu0
  %v1330 = vadd.f32 %v345, %v1329
  %1331 = vmatmul.bf16.gmra.mxu0 %v891
  %v1332 = vpop.f32.mrf.mxu0
  %v1333 = vadd.f32 %v345, %v1332
  %v1334 = vpop.f32.mrf.mxu0
  %v1335 = vadd.f32 %v345, %v1334
  %1336 = vmatmul.bf16.gmra.mxu0 %v892
  %v1337 = vpop.f32.mrf.mxu0
  %v1338 = vadd.f32 %v345, %v1337
  %v1339 = vpop.f32.mrf.mxu0
  %v1340 = vadd.f32 %v345, %v1339
  %1341 = vmatmul.bf16.gmra.mxu0 %v893
  %v1342 = vpop.f32.mrf.mxu0
  %v1343 = vadd.f32 %v345, %v1342
  %v1344 = vpop.f32.mrf.mxu0
  %v1345 = vadd.f32 %v345, %v1344
  %1346 = vmatmul.bf16.gmra.mxu0 %v894
  %v1347 = vpop.f32.mrf.mxu0
  %v1348 = vadd.f32 %v345, %v1347
  %v1349 = vpop.f32.mrf.mxu0
  %v1350 = vadd.f32 %v345, %v1349
  %1351 = vmatmul.bf16.gmra.mxu0 %v895
  %v1352 = vpop.f32.mrf.mxu0
  %v1353 = vadd.f32 %v345, %v1352
  %v1354 = vpop.f32.mrf.mxu0
  %v1355 = vadd.f32 %v345, %v1354
  %1356 = vmatmul.bf16.gmra.mxu0 %v896
  %v1357 = vpop.f32.mrf.mxu0
  %v1358 = vadd.f32 %v345, %v1357
  %v1359 = vpop.f32.mrf.mxu0
  %v1360 = vadd.f32 %v345, %v1359
  %1361 = vmatmul.bf16.gmra.mxu0 %v897
  %v1362 = vpop.f32.mrf.mxu0
  %v1363 = vadd.f32 %v345, %v1362
  %v1364 = vpop.f32.mrf.mxu0
  %v1365 = vadd.f32 %v345, %v1364
  %1366 = vmatmul.bf16.gmra.mxu0 %v898
  %v1367 = vpop.f32.mrf.mxu0
  %v1368 = vadd.f32 %v345, %v1367
  %v1369 = vpop.f32.mrf.mxu0
  %v1370 = vadd.f32 %v345, %v1369
  %1371 = vmatmul.bf16.gmra.mxu0 %v899
  %v1372 = vpop.f32.mrf.mxu0
  %v1373 = vadd.f32 %v345, %v1372
  %v1374 = vpop.f32.mrf.mxu0
  %v1375 = vadd.f32 %v345, %v1374
  %1376 = vmatmul.bf16.gmra.mxu0 %v900
  %v1377 = vpop.f32.mrf.mxu0
  %v1378 = vadd.f32 %v345, %v1377
  %v1379 = vpop.f32.mrf.mxu0
  %v1380 = vadd.f32 %v345, %v1379
  %1381 = vmatmul.bf16.gmra.mxu0 %v901
  %v1382 = vpop.f32.mrf.mxu0
  %v1383 = vadd.f32 %v345, %v1382
  %v1384 = vpop.f32.mrf.mxu0
  %v1385 = vadd.f32 %v345, %v1384
  %1386 = vmatmul.bf16.gmra.mxu0 %v902
  %v1387 = vpop.f32.mrf.mxu0
  %v1388 = vadd.f32 %v345, %v1387
  %v1389 = vpop.f32.mrf.mxu0
  %v1390 = vadd.f32 %v345, %v1389
  %1391 = vmatmul.bf16.gmra.mxu0 %v903
  %v1392 = vpop.f32.mrf.mxu0
  %v1393 = vadd.f32 %v345, %v1392
  %v1394 = vpop.f32.mrf.mxu0
  %v1395 = vadd.f32 %v345, %v1394
  %1396 = vmatmul.bf16.gmra.mxu0 %v904
  %v1397 = vpop.f32.mrf.mxu0
  %v1398 = vadd.f32 %v345, %v1397
  %v1399 = vpop.f32.mrf.mxu0
  %v1400 = vadd.f32 %v345, %v1399
  %1401 = vmatmul.bf16.gmra.mxu0 %v905
  %v1402 = vpop.f32.mrf.mxu0
  %v1403 = vadd.f32 %v345, %v1402
  %v1404 = vpop.f32.mrf.mxu0
  %v1405 = vadd.f32 %v345, %v1404
  %1406 = vmatmul.bf16.gmra.mxu0 %v906
  %v1407 = vpop.f32.mrf.mxu0
  %v1408 = vadd.f32 %v345, %v1407
  %v1409 = vpop.f32.mrf.mxu0
  %v1410 = vadd.f32 %v345, %v1409
  %1411 = vmatmul.bf16.gmra.mxu0 %v907
  %v1412 = vpop.f32.mrf.mxu0
  %v1413 = vadd.f32 %v345, %v1412
  %v1414 = vpop.f32.mrf.mxu0
  %v1415 = vadd.f32 %v345, %v1414
  %1416 = vmatmul.bf16.gmra.mxu0 %v908
  %v1417 = vpop.f32.mrf.mxu0
  %v1418 = vadd.f32 %v345, %v1417
  %v1419 = vpop.f32.mrf.mxu0
  %v1420 = vadd.f32 %v345, %v1419
  %1421 = vmatmul.bf16.gmra.mxu0 %v909
  %v1422 = vpop.f32.mrf.mxu0
  %v1423 = vadd.f32 %v345, %v1422
  %v1424 = vpop.f32.mrf.mxu0
  %v1425 = vadd.f32 %v345, %v1424
  %1426 = vmatmul.bf16.gmra.mxu0 %v910
  %v1427 = vpop.f32.mrf.mxu0
  %v1428 = vadd.f32 %v345, %v1427
  %v1429 = vpop.f32.mrf.mxu0
  %v1430 = vadd.f32 %v345, %v1429
  %1431 = vmatmul.bf16.gmra.mxu0 %v911
  %v1432 = vpop.f32.mrf.mxu0
  %v1433 = vadd.f32 %v345, %v1432
  %v1434 = vpop.f32.mrf.mxu0
  %v1435 = vadd.f32 %v345, %v1434
  %1436 = vmatmul.bf16.gmra.mxu0 %v912
  %v1437 = vpop.f32.mrf.mxu0
  %v1438 = vadd.f32 %v345, %v1437
  %v1439 = vpop.f32.mrf.mxu0
  %v1440 = vadd.f32 %v345, %v1439
  %1441 = vmatmul.bf16.gmra.mxu0 %v913
  %v1442 = vpop.f32.mrf.mxu0
  %v1443 = vadd.f32 %v345, %v1442
  %v1444 = vpop.f32.mrf.mxu0
  %v1445 = vadd.f32 %v345, %v1444
  %1446 = vmatmul.bf16.gmra.mxu0 %v914
  %v1447 = vpop.f32.mrf.mxu0
  %v1448 = vadd.f32 %v345, %v1447
  %v1449 = vpop.f32.mrf.mxu0
  %v1450 = vadd.f32 %v345, %v1449
  %1451 = vmatmul.bf16.gmra.mxu0 %v915
  %v1452 = vpop.f32.mrf.mxu0
  %v1453 = vadd.f32 %v345, %v1452
  %v1454 = vpop.f32.mrf.mxu0
  %v1455 = vadd.f32 %v345, %v1454
  %1456 = vmatmul.bf16.gmra.mxu0 %v916
  %v1457 = vpop.f32.mrf.mxu0
  %v1458 = vadd.f32 %v345, %v1457
  %v1459 = vpop.f32.mrf.mxu0
  %v1460 = vadd.f32 %v345, %v1459
  %1461 = vmatmul.bf16.gmra.mxu0 %v917
  %v1462 = vpop.f32.mrf.mxu0
  %v1463 = vadd.f32 %v345, %v1462
  %v1464 = vpop.f32.mrf.mxu0
  %v1465 = vadd.f32 %v345, %v1464
  %1466 = vmatmul.bf16.gmra.mxu0 %v918
  %v1467 = vpop.f32.mrf.mxu0
  %v1468 = vadd.f32 %v345, %v1467
  %v1469 = vpop.f32.mrf.mxu0
  %v1470 = vadd.f32 %v345, %v1469
  %1471 = vmatmul.bf16.gmra.mxu0 %v919
  %v1472 = vpop.f32.mrf.mxu0
  %v1473 = vadd.f32 %v345, %v1472
  %v1474 = vpop.f32.mrf.mxu0
  %v1475 = vadd.f32 %v345, %v1474
  %1476 = vmatmul.bf16.gmra.mxu0 %v920
  %v1477 = vpop.f32.mrf.mxu0
  %v1478 = vadd.f32 %v345, %v1477
  %v1479 = vpop.f32.mrf.mxu0
  %v1480 = vadd.f32 %v345, %v1479
  %1481 = vmatmul.bf16.gmra.mxu0 %v921
  %v1482 = vpop.f32.mrf.mxu0
  %v1483 = vadd.f32 %v345, %v1482
  %v1484 = vpop.f32.mrf.mxu0
  %v1485 = vadd.f32 %v345, %v1484
  %1486 = vmatmul.bf16.gmra.mxu0 %v922
  %v1487 = vpop.f32.mrf.mxu0
  %v1488 = vadd.f32 %v345, %v1487
  %v1489 = vpop.f32.mrf.mxu0
  %v1490 = vadd.f32 %v345, %v1489
  %1491 = vmatmul.bf16.gmra.mxu0 %v923
  %v1492 = vpop.f32.mrf.mxu0
  %v1493 = vadd.f32 %v345, %v1492
  %v1494 = vpop.f32.mrf.mxu0
  %v1495 = vadd.f32 %v345, %v1494
  %1496 = vmatmul.bf16.gmra.mxu0 %v924
  %v1497 = vpop.f32.mrf.mxu0
  %v1498 = vadd.f32 %v345, %v1497
  %v1499 = vpop.f32.mrf.mxu0
  %v1500 = vadd.f32 %v345, %v1499
  %1501 = vmatmul.bf16.gmra.mxu0 %v925
  %v1502 = vpop.f32.mrf.mxu0
  %v1503 = vadd.f32 %v345, %v1502
  %v1504 = vpop.f32.mrf.mxu0
  %v1505 = vadd.f32 %v345, %v1504
  %1506 = vmatmul.bf16.gmra.mxu0 %v926
  %v1507 = vpop.f32.mrf.mxu0
  %v1508 = vadd.f32 %v345, %v1507
  %v1509 = vpop.f32.mrf.mxu0
  %v1510 = vadd.f32 %v345, %v1509
  %1511 = vmatmul.bf16.gmra.mxu0 %v927
  %v1512 = vpop.f32.mrf.mxu0
  %v1513 = vadd.f32 %v345, %v1512
  %v1514 = vpop.f32.mrf.mxu0
  %v1515 = vadd.f32 %v345, %v1514
  %1516 = vmatmul.bf16.gmra.mxu0 %v928
  %v1517 = vpop.f32.mrf.mxu0
  %v1518 = vadd.f32 %v345, %v1517
  %v1519 = vpop.f32.mrf.mxu0
  %v1520 = vadd.f32 %v345, %v1519
  %1521 = vmatmul.bf16.gmra.mxu0 %v929
  %v1522 = vpop.f32.mrf.mxu0
  %v1523 = vadd.f32 %v345, %v1522
  %v1524 = vpop.f32.mrf.mxu0
  %v1525 = vadd.f32 %v345, %v1524
  %1526 = vmatmul.bf16.gmra.mxu0 %v930
  %v1527 = vpop.f32.mrf.mxu0
  %v1528 = vadd.f32 %v345, %v1527
  %v1529 = vpop.f32.mrf.mxu0
  %v1530 = vadd.f32 %v345, %v1529
  %1531 = vmatmul.bf16.gmra.mxu0 %v931
  %v1532 = vpop.f32.mrf.mxu0
  %v1533 = vadd.f32 %v345, %v1532
  %v1534 = vpop.f32.mrf.mxu0
  %v1535 = vadd.f32 %v345, %v1534
  %1536 = vmatmul.bf16.gmra.mxu0 %v932
  %v1537 = vpop.f32.mrf.mxu0
  %v1538 = vadd.f32 %v345, %v1537
  %v1539 = vpop.f32.mrf.mxu0
  %v1540 = vadd.f32 %v345, %v1539
  %1541 = vmatmul.bf16.gmra.mxu0 %v933
  %v1542 = vpop.f32.mrf.mxu0
  %v1543 = vadd.f32 %v345, %v1542
  %v1544 = vpop.f32.mrf.mxu0
  %v1545 = vadd.f32 %v345, %v1544
  %1546 = vmatmul.bf16.gmra.mxu0 %v934
  %v1547 = vpop.f32.mrf.mxu0
  %v1548 = vadd.f32 %v345, %v1547
  %v1549 = vpop.f32.mrf.mxu0
  %v1550 = vadd.f32 %v345, %v1549
  %1551 = vmatmul.bf16.gmra.mxu0 %v935
  %v1552 = vpop.f32.mrf.mxu0
  %v1553 = vadd.f32 %v345, %v1552
  %v1554 = vpop.f32.mrf.mxu0
  %v1555 = vadd.f32 %v345, %v1554
  %1556 = vmatmul.bf16.gmra.mxu0 %v936
  %v1557 = vpop.f32.mrf.mxu0
  %v1558 = vadd.f32 %v345, %v1557
  %v1559 = vpop.f32.mrf.mxu0
  %v1560 = vadd.f32 %v345, %v1559
  %1561 = vmatmul.bf16.gmra.mxu0 %v937
  %v1562 = vpop.f32.mrf.mxu0
  %v1563 = vadd.f32 %v345, %v1562
  %v1564 = vpop.f32.mrf.mxu0
  %v1565 = vadd.f32 %v345, %v1564
  %1566 = vmatmul.bf16.gmra.mxu0 %v938
  %v1567 = vpop.f32.mrf.mxu0
  %v1568 = vadd.f32 %v345, %v1567
  %v1569 = vpop.f32.mrf.mxu0
  %v1570 = vadd.f32 %v345, %v1569
  %1571 = vmatmul.bf16.gmra.mxu0 %v939
  %v1572 = vpop.f32.mrf.mxu0
  %v1573 = vadd.f32 %v345, %v1572
  %v1574 = vpop.f32.mrf.mxu0
  %v1575 = vadd.f32 %v345, %v1574
  %1576 = vmatmul.bf16.gmra.mxu0 %v940
  %v1577 = vpop.f32.mrf.mxu0
  %v1578 = vadd.f32 %v345, %v1577
  %v1579 = vpop.f32.mrf.mxu0
  %v1580 = vadd.f32 %v345, %v1579
  %1581 = vmatmul.bf16.gmra.mxu0 %v941
  %v1582 = vpop.f32.mrf.mxu0
  %v1583 = vadd.f32 %v345, %v1582
  %v1584 = vpop.f32.mrf.mxu0
  %v1585 = vadd.f32 %v345, %v1584
  %1586 = vmatmul.bf16.gmra.mxu0 %v942
  %v1587 = vpop.f32.mrf.mxu0
  %v1588 = vadd.f32 %v345, %v1587
  %v1589 = vpop.f32.mrf.mxu0
  %v1590 = vadd.f32 %v345, %v1589
  %1591 = vmatmul.bf16.gmra.mxu0 %v943
  %v1592 = vpop.f32.mrf.mxu0
  %v1593 = vadd.f32 %v345, %v1592
  %v1594 = vpop.f32.mrf.mxu0
  %v1595 = vadd.f32 %v345, %v1594
  %1596 = vmatmul.bf16.gmra.mxu0 %v944
  %v1597 = vpop.f32.mrf.mxu0
  %v1598 = vadd.f32 %v345, %v1597
  %v1599 = vpop.f32.mrf.mxu0
  %v1600 = vadd.f32 %v345, %v1599
  %1601 = vmatmul.bf16.gmra.mxu0 %v945
  %v1602 = vpop.f32.mrf.mxu0
  %v1603 = vadd.f32 %v345, %v1602
  %v1604 = vpop.f32.mrf.mxu0
  %v1605 = vadd.f32 %v345, %v1604
  %1606 = vmatmul.bf16.gmra.mxu0 %v946
  %v1607 = vpop.f32.mrf.mxu0
  %v1608 = vadd.f32 %v345, %v1607
  %v1609 = vpop.f32.mrf.mxu0
  %v1610 = vadd.f32 %v345, %v1609
  %1611 = vmatmul.bf16.gmra.mxu0 %v947
  %v1612 = vpop.f32.mrf.mxu0
  %v1613 = vadd.f32 %v345, %v1612
  %v1614 = vpop.f32.mrf.mxu0
  %v1615 = vadd.f32 %v345, %v1614
  %1616 = vmatmul.bf16.gmra.mxu0 %v948
  %v1617 = vpop.f32.mrf.mxu0
  %v1618 = vadd.f32 %v345, %v1617
  %v1619 = vpop.f32.mrf.mxu0
  %v1620 = vadd.f32 %v345, %v1619
  %1621 = vmatmul.bf16.gmra.mxu0 %v949
  %v1622 = vpop.f32.mrf.mxu0
  %v1623 = vadd.f32 %v345, %v1622
  %v1624 = vpop.f32.mrf.mxu0
  %v1625 = vadd.f32 %v345, %v1624
  %1626 = vmatmul.bf16.gmra.mxu0 %v950
  %v1627 = vpop.f32.mrf.mxu0
  %v1628 = vadd.f32 %v345, %v1627
  %v1629 = vpop.f32.mrf.mxu0
  %v1630 = vadd.f32 %v345, %v1629
  %1631 = vmatmul.bf16.gmra.mxu0 %v951
  %v1632 = vpop.f32.mrf.mxu0
  %v1633 = vadd.f32 %v345, %v1632
  %v1634 = vpop.f32.mrf.mxu0
  %v1635 = vadd.f32 %v345, %v1634
  %1636 = vmatmul.bf16.gmra.mxu0 %v952
  %v1637 = vpop.f32.mrf.mxu0
  %v1638 = vadd.f32 %v345, %v1637
  %v1639 = vpop.f32.mrf.mxu0
  %v1640 = vadd.f32 %v345, %v1639
  %1641 = vmatmul.bf16.gmra.mxu0 %v953
  %v1642 = vpop.f32.mrf.mxu0
  %v1643 = vadd.f32 %v345, %v1642
  %v1644 = vpop.f32.mrf.mxu0
  %v1645 = vadd.f32 %v345, %v1644
  %1646 = vmatmul.bf16.gmra.mxu0 %v954
  %v1647 = vpop.f32.mrf.mxu0
  %v1648 = vadd.f32 %v345, %v1647
  %v1649 = vpop.f32.mrf.mxu0
  %v1650 = vadd.f32 %v345, %v1649
  %1651 = vmatmul.bf16.gmra.mxu0 %v955
  %v1652 = vpop.f32.mrf.mxu0
  %v1653 = vadd.f32 %v345, %v1652
  %v1654 = vpop.f32.mrf.mxu0
  %v1655 = vadd.f32 %v345, %v1654
  %1656 = vmatmul.bf16.gmra.mxu0 %v956
  %v1657 = vpop.f32.mrf.mxu0
  %v1658 = vadd.f32 %v345, %v1657
  %v1659 = vpop.f32.mrf.mxu0
  %v1660 = vadd.f32 %v345, %v1659
  %1661 = vmatmul.bf16.gmra.mxu0 %v957
  %v1662 = vpop.f32.mrf.mxu0
  %v1663 = vadd.f32 %v345, %v1662
  %v1664 = vpop.f32.mrf.mxu0
  %v1665 = vadd.f32 %v345, %v1664
  %1666 = vmatmul.bf16.gmra.mxu0 %v958
  %v1667 = vpop.f32.mrf.mxu0
  %v1668 = vadd.f32 %v345, %v1667
  %v1669 = vpop.f32.mrf.mxu0
  %v1670 = vadd.f32 %v345, %v1669
  %1671 = vmatmul.bf16.gmra.mxu0 %v959
  %v1672 = vpop.f32.mrf.mxu0
  %v1673 = vadd.f32 %v345, %v1672
  %v1674 = vpop.f32.mrf.mxu0
  %v1675 = vadd.f32 %v345, %v1674
  %1676 = vmatmul.bf16.gmra.mxu0 %v960
  %v1677 = vpop.f32.mrf.mxu0
  %v1678 = vadd.f32 %v345, %v1677
  %v1679 = vpop.f32.mrf.mxu0
  %v1680 = vadd.f32 %v345, %v1679
  %1681 = vmatmul.bf16.gmra.mxu0 %v961
  %v1682 = vpop.f32.mrf.mxu0
  %v1683 = vadd.f32 %v345, %v1682
  %v1684 = vpop.f32.mrf.mxu0
  %v1685 = vadd.f32 %v345, %v1684
  %1686 = vmatmul.bf16.gmra.mxu0 %v962
  %v1687 = vpop.f32.mrf.mxu0
  %v1688 = vadd.f32 %v345, %v1687
  %v1689 = vpop.f32.mrf.mxu0
  %v1690 = vadd.f32 %v345, %v1689
  %1691 = vmatmul.bf16.gmra.mxu0 %v963
  %v1692 = vpop.f32.mrf.mxu0
  %v1693 = vadd.f32 %v345, %v1692
  %v1694 = vpop.f32.mrf.mxu0
  %v1695 = vadd.f32 %v345, %v1694
  %1696 = vmatmul.bf16.gmra.mxu0 %v964
  %v1697 = vpop.f32.mrf.mxu0
  %v1698 = vadd.f32 %v345, %v1697
  %v1699 = vpop.f32.mrf.mxu0
  %v1700 = vadd.f32 %v345, %v1699
  %1701 = vmatmul.bf16.gmra.mxu0 %v965
  %v1702 = vpop.f32.mrf.mxu0
  %v1703 = vadd.f32 %v345, %v1702
  %v1704 = vpop.f32.mrf.mxu0
  %v1705 = vadd.f32 %v345, %v1704
  %1706 = vmatmul.bf16.gmra.mxu0 %v966
  %v1707 = vpop.f32.mrf.mxu0
  %v1708 = vadd.f32 %v345, %v1707
  %v1709 = vpop.f32.mrf.mxu0
  %v1710 = vadd.f32 %v345, %v1709
  %1711 = vmatmul.bf16.gmra.mxu0 %v967
  %v1712 = vpop.f32.mrf.mxu0
  %v1713 = vadd.f32 %v345, %v1712
  %v1714 = vpop.f32.mrf.mxu0
  %v1715 = vadd.f32 %v345, %v1714
  %1716 = vmatmul.bf16.gmra.mxu0 %v968
  %v1717 = vpop.f32.mrf.mxu0
  %v1718 = vadd.f32 %v345, %v1717
  %v1719 = vpop.f32.mrf.mxu0
  %v1720 = vadd.f32 %v345, %v1719
  %1721 = vmatmul.bf16.gmra.mxu0 %v969
  %v1722 = vpop.f32.mrf.mxu0
  %v1723 = vadd.f32 %v345, %v1722
  %v1724 = vpop.f32.mrf.mxu0
  %v1725 = vadd.f32 %v345, %v1724
  %1726 = vmatmul.bf16.gmra.mxu0 %v970
  %v1727 = vpop.f32.mrf.mxu0
  %v1728 = vadd.f32 %v345, %v1727
  %v1729 = vpop.f32.mrf.mxu0
  %v1730 = vadd.f32 %v345, %v1729
  %1731 = vmatmul.bf16.gmra.mxu0 %v971
  %v1732 = vpop.f32.mrf.mxu0
  %v1733 = vadd.f32 %v345, %v1732
  %v1734 = vpop.f32.mrf.mxu0
  %v1735 = vadd.f32 %v345, %v1734
  %1736 = vmatmul.bf16.gmra.mxu0 %v972
  %v1737 = vpop.f32.mrf.mxu0
  %v1738 = vadd.f32 %v345, %v1737
  %v1739 = vpop.f32.mrf.mxu0
  %v1740 = vadd.f32 %v345, %v1739
  %1741 = vmatmul.bf16.gmra.mxu0 %v973
  %v1742 = vpop.f32.mrf.mxu0
  %v1743 = vadd.f32 %v345, %v1742
  %v1744 = vpop.f32.mrf.mxu0
  %v1745 = vadd.f32 %v345, %v1744
  %1746 = vmatmul.bf16.gmra.mxu0 %v974
  %v1747 = vpop.f32.mrf.mxu0
  %v1748 = vadd.f32 %v345, %v1747
  %v1749 = vpop.f32.mrf.mxu0
  %v1750 = vadd.f32 %v345, %v1749
  %1751 = vmatmul.bf16.gmra.mxu0 %v975
  %v1752 = vpop.f32.mrf.mxu0
  %v1753 = vadd.f32 %v345, %v1752
  %v1754 = vpop.f32.mrf.mxu0
  %v1755 = vadd.f32 %v345, %v1754
  %1756 = vmatmul.bf16.gmra.mxu0 %v976
  %v1757 = vpop.f32.mrf.mxu0
  %v1758 = vadd.f32 %v345, %v1757
  %v1759 = vpop.f32.mrf.mxu0
  %v1760 = vadd.f32 %v345, %v1759
  %1761 = vmatmul.bf16.gmra.mxu0 %v977
  %v1762 = vpop.f32.mrf.mxu0
  %v1763 = vadd.f32 %v345, %v1762
  %v1764 = vpop.f32.mrf.mxu0
  %v1765 = vadd.f32 %v345, %v1764
  %1766 = vmatmul.bf16.gmra.mxu0 %v978
  %v1767 = vpop.f32.mrf.mxu0
  %v1768 = vadd.f32 %v345, %v1767
  %v1769 = vpop.f32.mrf.mxu0
  %v1770 = vadd.f32 %v345, %v1769
  %1771 = vmatmul.bf16.gmra.mxu0 %v979
  %v1772 = vpop.f32.mrf.mxu0
  %v1773 = vadd.f32 %v345, %v1772
  %v1774 = vpop.f32.mrf.mxu0
  %v1775 = vadd.f32 %v345, %v1774
  %1776 = vmatmul.bf16.gmra.mxu0 %v980
  %v1777 = vpop.f32.mrf.mxu0
  %v1778 = vadd.f32 %v345, %v1777
  %v1779 = vpop.f32.mrf.mxu0
  %v1780 = vadd.f32 %v345, %v1779
  %1781 = vmatmul.bf16.gmra.mxu0 %v981
  %v1782 = vpop.f32.mrf.mxu0
  %v1783 = vadd.f32 %v345, %v1782
  %v1784 = vpop.f32.mrf.mxu0
  %v1785 = vadd.f32 %v345, %v1784
  %1786 = vmatmul.bf16.gmra.mxu0 %v982
  %v1787 = vpop.f32.mrf.mxu0
  %v1788 = vadd.f32 %v345, %v1787
  %v1789 = vpop.f32.mrf.mxu0
  %v1790 = vadd.f32 %v345, %v1789
  %1791 = vmatmul.bf16.gmra.mxu0 %v983
  %v1792 = vpop.f32.mrf.mxu0
  %v1793 = vadd.f32 %v345, %v1792
  %v1794 = vpop.f32.mrf.mxu0
  %v1795 = vadd.f32 %v345, %v1794
  %1796 = vmatmul.bf16.gmra.mxu0 %v984
  %v1797 = vpop.f32.mrf.mxu0
  %v1798 = vadd.f32 %v345, %v1797
  %v1799 = vpop.f32.mrf.mxu0
  %v1800 = vadd.f32 %v345, %v1799
  %1801 = vmatmul.bf16.gmra.mxu0 %v985
  %v1802 = vpop.f32.mrf.mxu0
  %v1803 = vadd.f32 %v345, %v1802
  %v1804 = vpop.f32.mrf.mxu0
  %v1805 = vadd.f32 %v345, %v1804
  %1806 = vmatmul.bf16.gmra.mxu0 %v986
  %v1807 = vpop.f32.mrf.mxu0
  %v1808 = vadd.f32 %v345, %v1807
  %v1809 = vpop.f32.mrf.mxu0
  %v1810 = vadd.f32 %v345, %v1809
  %1811 = vdwg.mxu0
  %v1812 = vmax.f32 %v1173, 0.0
  %v1813 = vmax.f32 %v1175, 0.0
  %v1814 = vmax.f32 %v1178, 0.0
  %v1815 = vmax.f32 %v1180, 0.0
  %v1816 = vmax.f32 %v1183, 0.0
  %v1817 = vmax.f32 %v1185, 0.0
  %v1818 = vmax.f32 %v1188, 0.0
  %v1819 = vmax.f32 %v1190, 0.0
  %v1820 = vmax.f32 %v1193, 0.0
  %v1821 = vmax.f32 %v1195, 0.0
  %v1822 = vmax.f32 %v1198, 0.0
  %v1823 = vmax.f32 %v1200, 0.0
  %v1824 = vmax.f32 %v1203, 0.0
  %v1825 = vmax.f32 %v1205, 0.0
  %v1826 = vmax.f32 %v1208, 0.0
  %v1827 = vmax.f32 %v1210, 0.0
  %v1828 = vmax.f32 %v1213, 0.0
  %v1829 = vmax.f32 %v1215, 0.0
  %v1830 = vmax.f32 %v1218, 0.0
  %v1831 = vmax.f32 %v1220, 0.0
  %v1832 = vmax.f32 %v1223, 0.0
  %v1833 = vmax.f32 %v1225, 0.0
  %v1834 = vmax.f32 %v1228, 0.0
  %v1835 = vmax.f32 %v1230, 0.0
  %v1836 = vmax.f32 %v1233, 0.0
  %v1837 = vmax.f32 %v1235, 0.0
  %v1838 = vmax.f32 %v1238, 0.0
  %v1839 = vmax.f32 %v1240, 0.0
  %v1840 = vmax.f32 %v1243, 0.0
  %v1841 = vmax.f32 %v1245, 0.0
  %v1842 = vmax.f32 %v1248, 0.0
  %v1843 = vmax.f32 %v1250, 0.0
  %v1844 = vmax.f32 %v1253, 0.0
  %v1845 = vmax.f32 %v1255, 0.0
  %v1846 = vmax.f32 %v1258, 0.0
  %v1847 = vmax.f32 %v1260, 0.0
  %v1848 = vmax.f32 %v1263, 0.0
  %v1849 = vmax.f32 %v1265, 0.0
  %v1850 = vmax.f32 %v1268, 0.0
  %v1851 = vmax.f32 %v1270, 0.0
  %v1852 = vmax.f32 %v1273, 0.0
  %v1853 = vmax.f32 %v1275, 0.0
  %v1854 = vmax.f32 %v1278, 0.0
  %v1855 = vmax.f32 %v1280, 0.0
  %v1856 = vmax.f32 %v1283, 0.0
  %v1857 = vmax.f32 %v1285, 0.0
  %v1858 = vmax.f32 %v1288, 0.0
  %v1859 = vmax.f32 %v1290, 0.0
  %v1860 = vmax.f32 %v1293, 0.0
  %v1861 = vmax.f32 %v1295, 0.0
  %v1862 = vmax.f32 %v1298, 0.0
  %v1863 = vmax.f32 %v1300, 0.0
  %v1864 = vmax.f32 %v1303, 0.0
  %v1865 = vmax.f32 %v1305, 0.0
  %v1866 = vmax.f32 %v1308, 0.0
  %v1867 = vmax.f32 %v1310, 0.0
  %v1868 = vmax.f32 %v1313, 0.0
  %v1869 = vmax.f32 %v1315, 0.0
  %v1870 = vmax.f32 %v1318, 0.0
  %v1871 = vmax.f32 %v1320, 0.0
  %v1872 = vmax.f32 %v1323, 0.0
  %v1873 = vmax.f32 %v1325, 0.0
  %v1874 = vmax.f32 %v1328, 0.0
  %v1875 = vmax.f32 %v1330, 0.0
  %v1876 = vmax.f32 %v1333, 0.0
  %v1877 = vmax.f32 %v1335, 0.0
  %v1878 = vmax.f32 %v1338, 0.0
  %v1879 = vmax.f32 %v1340, 0.0
  %v1880 = vmax.f32 %v1343, 0.0
  %v1881 = vmax.f32 %v1345, 0.0
  %v1882 = vmax.f32 %v1348, 0.0
  %v1883 = vmax.f32 %v1350, 0.0
  %v1884 = vmax.f32 %v1353, 0.0
  %v1885 = vmax.f32 %v1355, 0.0
  %v1886 = vmax.f32 %v1358, 0.0
  %v1887 = vmax.f32 %v1360, 0.0
  %v1888 = vmax.f32 %v1363, 0.0
  %v1889 = vmax.f32 %v1365, 0.0
  %v1890 = vmax.f32 %v1368, 0.0
  %v1891 = vmax.f32 %v1370, 0.0
  %v1892 = vmax.f32 %v1373, 0.0
  %v1893 = vmax.f32 %v1375, 0.0
  %v1894 = vmax.f32 %v1378, 0.0
  %v1895 = vmax.f32 %v1380, 0.0
  %v1896 = vmax.f32 %v1383, 0.0
  %v1897 = vmax.f32 %v1385, 0.0
  %v1898 = vmax.f32 %v1388, 0.0
  %v1899 = vmax.f32 %v1390, 0.0
  %v1900 = vmax.f32 %v1393, 0.0
  %v1901 = vmax.f32 %v1395, 0.0
  %v1902 = vmax.f32 %v1398, 0.0
  %v1903 = vmax.f32 %v1400, 0.0
  %v1904 = vmax.f32 %v1403, 0.0
  %v1905 = vmax.f32 %v1405, 0.0
  %v1906 = vmax.f32 %v1408, 0.0
  %v1907 = vmax.f32 %v1410, 0.0
  %v1908 = vmax.f32 %v1413, 0.0
  %v1909 = vmax.f32 %v1415, 0.0
  %v1910 = vmax.f32 %v1418, 0.0
  %v1911 = vmax.f32 %v1420, 0.0
  %v1912 = vmax.f32 %v1423, 0.0
  %v1913 = vmax.f32 %v1425, 0.0
  %v1914 = vmax.f32 %v1428, 0.0
  %v1915 = vmax.f32 %v1430, 0.0
  %v1916 = vmax.f32 %v1433, 0.0
  %v1917 = vmax.f32 %v1435, 0.0
  %v1918 = vmax.f32 %v1438, 0.0
  %v1919 = vmax.f32 %v1440, 0.0
  %v1920 = vmax.f32 %v1443, 0.0
  %v1921 = vmax.f32 %v1445, 0.0
  %v1922 = vmax.f32 %v1448, 0.0
  %v1923 = vmax.f32 %v1450, 0.0
  %v1924 = vmax.f32 %v1453, 0.0
  %v1925 = vmax.f32 %v1455, 0.0
  %v1926 = vmax.f32 %v1458, 0.0
  %v1927 = vmax.f32 %v1460, 0.0
  %v1928 = vmax.f32 %v1463, 0.0
  %v1929 = vmax.f32 %v1465, 0.0
  %v1930 = vmax.f32 %v1468, 0.0
  %v1931 = vmax.f32 %v1470, 0.0
  %v1932 = vmax.f32 %v1473, 0.0
  %v1933 = vmax.f32 %v1475, 0.0
  %v1934 = vmax.f32 %v1478, 0.0
  %v1935 = vmax.f32 %v1480, 0.0
  %v1936 = vmax.f32 %v1483, 0.0
  %v1937 = vmax.f32 %v1485, 0.0
  %v1938 = vmax.f32 %v1488, 0.0
  %v1939 = vmax.f32 %v1490, 0.0
  %v1940 = vmax.f32 %v1493, 0.0
  %v1941 = vmax.f32 %v1495, 0.0
  %v1942 = vmax.f32 %v1498, 0.0
  %v1943 = vmax.f32 %v1500, 0.0
  %v1944 = vmax.f32 %v1503, 0.0
  %v1945 = vmax.f32 %v1505, 0.0
  %v1946 = vmax.f32 %v1508, 0.0
  %v1947 = vmax.f32 %v1510, 0.0
  %v1948 = vmax.f32 %v1513, 0.0
  %v1949 = vmax.f32 %v1515, 0.0
  %v1950 = vmax.f32 %v1518, 0.0
  %v1951 = vmax.f32 %v1520, 0.0
  %v1952 = vmax.f32 %v1523, 0.0
  %v1953 = vmax.f32 %v1525, 0.0
  %v1954 = vmax.f32 %v1528, 0.0
  %v1955 = vmax.f32 %v1530, 0.0
  %v1956 = vmax.f32 %v1533, 0.0
  %v1957 = vmax.f32 %v1535, 0.0
  %v1958 = vmax.f32 %v1538, 0.0
  %v1959 = vmax.f32 %v1540, 0.0
  %v1960 = vmax.f32 %v1543, 0.0
  %v1961 = vmax.f32 %v1545, 0.0
  %v1962 = vmax.f32 %v1548, 0.0
  %v1963 = vmax.f32 %v1550, 0.0
  %v1964 = vmax.f32 %v1553, 0.0
  %v1965 = vmax.f32 %v1555, 0.0
  %v1966 = vmax.f32 %v1558, 0.0
  %v1967 = vmax.f32 %v1560, 0.0
  %v1968 = vmax.f32 %v1563, 0.0
  %v1969 = vmax.f32 %v1565, 0.0
  %v1970 = vmax.f32 %v1568, 0.0
  %v1971 = vmax.f32 %v1570, 0.0
  %v1972 = vmax.f32 %v1573, 0.0
  %v1973 = vmax.f32 %v1575, 0.0
  %v1974 = vmax.f32 %v1578, 0.0
  %v1975 = vmax.f32 %v1580, 0.0
  %v1976 = vmax.f32 %v1583, 0.0
  %v1977 = vmax.f32 %v1585, 0.0
  %v1978 = vmax.f32 %v1588, 0.0
  %v1979 = vmax.f32 %v1590, 0.0
  %v1980 = vmax.f32 %v1593, 0.0
  %v1981 = vmax.f32 %v1595, 0.0
  %v1982 = vmax.f32 %v1598, 0.0
  %v1983 = vmax.f32 %v1600, 0.0
  %v1984 = vmax.f32 %v1603, 0.0
  %v1985 = vmax.f32 %v1605, 0.0
  %v1986 = vmax.f32 %v1608, 0.0
  %v1987 = vmax.f32 %v1610, 0.0
  %v1988 = vmax.f32 %v1613, 0.0
  %v1989 = vmax.f32 %v1615, 0.0
  %v1990 = vmax.f32 %v1618, 0.0
  %v1991 = vmax.f32 %v1620, 0.0
  %v1992 = vmax.f32 %v1623, 0.0
  %v1993 = vmax.f32 %v1625, 0.0
  %v1994 = vmax.f32 %v1628, 0.0
  %v1995 = vmax.f32 %v1630, 0.0
  %v1996 = vmax.f32 %v1633, 0.0
  %v1997 = vmax.f32 %v1635, 0.0
  %v1998 = vmax.f32 %v1638, 0.0
  %v1999 = vmax.f32 %v1640, 0.0
  %v2000 = vmax.f32 %v1643, 0.0
  %v2001 = vmax.f32 %v1645, 0.0
  %v2002 = vmax.f32 %v1648, 0.0
  %v2003 = vmax.f32 %v1650, 0.0
  %v2004 = vmax.f32 %v1653, 0.0
  %v2005 = vmax.f32 %v1655, 0.0
  %v2006 = vmax.f32 %v1658, 0.0
  %v2007 = vmax.f32 %v1660, 0.0
  %v2008 = vmax.f32 %v1663, 0.0
  %v2009 = vmax.f32 %v1665, 0.0
  %v2010 = vmax.f32 %v1668, 0.0
  %v2011 = vmax.f32 %v1670, 0.0
  %v2012 = vmax.f32 %v1673, 0.0
  %v2013 = vmax.f32 %v1675, 0.0
  %v2014 = vmax.f32 %v1678, 0.0
  %v2015 = vmax.f32 %v1680, 0.0
  %v2016 = vmax.f32 %v1683, 0.0
  %v2017 = vmax.f32 %v1685, 0.0
  %v2018 = vmax.f32 %v1688, 0.0
  %v2019 = vmax.f32 %v1690, 0.0
  %v2020 = vmax.f32 %v1693, 0.0
  %v2021 = vmax.f32 %v1695, 0.0
  %v2022 = vmax.f32 %v1698, 0.0
  %v2023 = vmax.f32 %v1700, 0.0
  %v2024 = vmax.f32 %v1703, 0.0
  %v2025 = vmax.f32 %v1705, 0.0
  %v2026 = vmax.f32 %v1708, 0.0
  %v2027 = vmax.f32 %v1710, 0.0
  %v2028 = vmax.f32 %v1713, 0.0
  %v2029 = vmax.f32 %v1715, 0.0
  %v2030 = vmax.f32 %v1718, 0.0
  %v2031 = vmax.f32 %v1720, 0.0
  %v2032 = vmax.f32 %v1723, 0.0
  %v2033 = vmax.f32 %v1725, 0.0
  %v2034 = vmax.f32 %v1728, 0.0
  %v2035 = vmax.f32 %v1730, 0.0
  %v2036 = vmax.f32 %v1733, 0.0
  %v2037 = vmax.f32 %v1735, 0.0
  %v2038 = vmax.f32 %v1738, 0.0
  %v2039 = vmax.f32 %v1740, 0.0
  %v2040 = vmax.f32 %v1743, 0.0
  %v2041 = vmax.f32 %v1745, 0.0
  %v2042 = vmax.f32 %v1748, 0.0
  %v2043 = vmax.f32 %v1750, 0.0
  %v2044 = vmax.f32 %v1753, 0.0
  %v2045 = vmax.f32 %v1755, 0.0
  %v2046 = vmax.f32 %v1758, 0.0
  %v2047 = vmax.f32 %v1760, 0.0
  %v2048 = vmax.f32 %v1763, 0.0
  %v2049 = vmax.f32 %v1765, 0.0
  %v2050 = vmax.f32 %v1768, 0.0
  %v2051 = vmax.f32 %v1770, 0.0
  %v2052 = vmax.f32 %v1773, 0.0
  %v2053 = vmax.f32 %v1775, 0.0
  %v2054 = vmax.f32 %v1778, 0.0
  %v2055 = vmax.f32 %v1780, 0.0
  %v2056 = vmax.f32 %v1783, 0.0
  %v2057 = vmax.f32 %v1785, 0.0
  %v2058 = vmax.f32 %v1788, 0.0
  %v2059 = vmax.f32 %v1790, 0.0
  %v2060 = vmax.f32 %v1793, 0.0
  %v2061 = vmax.f32 %v1795, 0.0
  %v2062 = vmax.f32 %v1798, 0.0
  %v2063 = vmax.f32 %v1800, 0.0
  %v2064 = vmax.f32 %v1803, 0.0
  %v2065 = vmax.f32 %v1805, 0.0
  %v2066 = vmax.f32 %v1808, 0.0
  %v2067 = vmax.f32 %v1810, 0.0
  %v2068 = vadd.f32 %v1812, %v1813
  %v2069 = vadd.f32 %v2068, %v1814
  %v2070 = vadd.f32 %v2069, %v1815
  %v2071 = vadd.f32 %v2070, %v1816
  %v2072 = vadd.f32 %v2071, %v1817
  %v2073 = vadd.f32 %v2072, %v1818
  %v2074 = vadd.f32 %v2073, %v1819
  %v2075 = vadd.f32 %v2074, %v1820
  %v2076 = vadd.f32 %v2075, %v1821
  %v2077 = vadd.f32 %v2076, %v1822
  %v2078 = vadd.f32 %v2077, %v1823
  %v2079 = vadd.f32 %v2078, %v1824
  %v2080 = vadd.f32 %v2079, %v1825
  %v2081 = vadd.f32 %v2080, %v1826
  %v2082 = vadd.f32 %v2081, %v1827
  %v2083 = vadd.f32 %v2082, %v1828
  %v2084 = vadd.f32 %v2083, %v1829
  %v2085 = vadd.f32 %v2084, %v1830
  %v2086 = vadd.f32 %v2085, %v1831
  %v2087 = vadd.f32 %v2086, %v1832
  %v2088 = vadd.f32 %v2087, %v1833
  %v2089 = vadd.f32 %v2088, %v1834
  %v2090 = vadd.f32 %v2089, %v1835
  %v2091 = vadd.f32 %v2090, %v1836
  %v2092 = vadd.f32 %v2091, %v1837
  %v2093 = vadd.f32 %v2092, %v1838
  %v2094 = vadd.f32 %v2093, %v1839
  %v2095 = vadd.f32 %v2094, %v1840
  %v2096 = vadd.f32 %v2095, %v1841
  %v2097 = vadd.f32 %v2096, %v1842
  %v2098 = vadd.f32 %v2097, %v1843
  %v2099 = vrot.slane %v2098, 4
  %v2100 = vadd.f32 %v2098, %v2099
  %v2101 = vrot.slane %v2100, 2
  %v2102 = vadd.f32 %v2100, %v2101
  %v2103 = vrot.slane %v2102, 1
  %v2104 = vadd.f32 %v2102, %v2103
  %v2105 = vadd.f32 %v1844, %v1845
  %v2106 = vadd.f32 %v2105, %v1846
  %v2107 = vadd.f32 %v2106, %v1847
  %v2108 = vadd.f32 %v2107, %v1848
  %v2109 = vadd.f32 %v2108, %v1849
  %v2110 = vadd.f32 %v2109, %v1850
  %v2111 = vadd.f32 %v2110, %v1851
  %v2112 = vadd.f32 %v2111, %v1852
  %v2113 = vadd.f32 %v2112, %v1853
  %v2114 = vadd.f32 %v2113, %v1854
  %v2115 = vadd.f32 %v2114, %v1855
  %v2116 = vadd.f32 %v2115, %v1856
  %v2117 = vadd.f32 %v2116, %v1857
  %v2118 = vadd.f32 %v2117, %v1858
  %v2119 = vadd.f32 %v2118, %v1859
  %v2120 = vadd.f32 %v2119, %v1860
  %v2121 = vadd.f32 %v2120, %v1861
  %v2122 = vadd.f32 %v2121, %v1862
  %v2123 = vadd.f32 %v2122, %v1863
  %v2124 = vadd.f32 %v2123, %v1864
  %v2125 = vadd.f32 %v2124, %v1865
  %v2126 = vadd.f32 %v2125, %v1866
  %v2127 = vadd.f32 %v2126, %v1867
  %v2128 = vadd.f32 %v2127, %v1868
  %v2129 = vadd.f32 %v2128, %v1869
  %v2130 = vadd.f32 %v2129, %v1870
  %v2131 = vadd.f32 %v2130, %v1871
  %v2132 = vadd.f32 %v2131, %v1872
  %v2133 = vadd.f32 %v2132, %v1873
  %v2134 = vadd.f32 %v2133, %v1874
  %v2135 = vadd.f32 %v2134, %v1875
  %v2136 = vrot.slane %v2135, 4
  %v2137 = vadd.f32 %v2135, %v2136
  %v2138 = vrot.slane %v2137, 2
  %v2139 = vadd.f32 %v2137, %v2138
  %v2140 = vrot.slane %v2139, 1
  %v2141 = vadd.f32 %v2139, %v2140
  %v2142 = vadd.f32 %v1876, %v1877
  %v2143 = vadd.f32 %v2142, %v1878
  %v2144 = vadd.f32 %v2143, %v1879
  %v2145 = vadd.f32 %v2144, %v1880
  %v2146 = vadd.f32 %v2145, %v1881
  %v2147 = vadd.f32 %v2146, %v1882
  %v2148 = vadd.f32 %v2147, %v1883
  %v2149 = vadd.f32 %v2148, %v1884
  %v2150 = vadd.f32 %v2149, %v1885
  %v2151 = vadd.f32 %v2150, %v1886
  %v2152 = vadd.f32 %v2151, %v1887
  %v2153 = vadd.f32 %v2152, %v1888
  %v2154 = vadd.f32 %v2153, %v1889
  %v2155 = vadd.f32 %v2154, %v1890
  %v2156 = vadd.f32 %v2155, %v1891
  %v2157 = vadd.f32 %v2156, %v1892
  %v2158 = vadd.f32 %v2157, %v1893
  %v2159 = vadd.f32 %v2158, %v1894
  %v2160 = vadd.f32 %v2159, %v1895
  %v2161 = vadd.f32 %v2160, %v1896
  %v2162 = vadd.f32 %v2161, %v1897
  %v2163 = vadd.f32 %v2162, %v1898
  %v2164 = vadd.f32 %v2163, %v1899
  %v2165 = vadd.f32 %v2164, %v1900
  %v2166 = vadd.f32 %v2165, %v1901
  %v2167 = vadd.f32 %v2166, %v1902
  %v2168 = vadd.f32 %v2167, %v1903
  %v2169 = vadd.f32 %v2168, %v1904
  %v2170 = vadd.f32 %v2169, %v1905
  %v2171 = vadd.f32 %v2170, %v1906
  %v2172 = vadd.f32 %v2171, %v1907
  %v2173 = vrot.slane %v2172, 4
  %v2174 = vadd.f32 %v2172, %v2173
  %v2175 = vrot.slane %v2174, 2
  %v2176 = vadd.f32 %v2174, %v2175
  %v2177 = vrot.slane %v2176, 1
  %v2178 = vadd.f32 %v2176, %v2177
  %v2179 = vadd.f32 %v1908, %v1909
  %v2180 = vadd.f32 %v2179, %v1910
  %v2181 = vadd.f32 %v2180, %v1911
  %v2182 = vadd.f32 %v2181, %v1912
  %v2183 = vadd.f32 %v2182, %v1913
  %v2184 = vadd.f32 %v2183, %v1914
  %v2185 = vadd.f32 %v2184, %v1915
  %v2186 = vadd.f32 %v2185, %v1916
  %v2187 = vadd.f32 %v2186, %v1917
  %v2188 = vadd.f32 %v2187, %v1918
  %v2189 = vadd.f32 %v2188, %v1919
  %v2190 = vadd.f32 %v2189, %v1920
  %v2191 = vadd.f32 %v2190, %v1921
  %v2192 = vadd.f32 %v2191, %v1922
  %v2193 = vadd.f32 %v2192, %v1923
  %v2194 = vadd.f32 %v2193, %v1924
  %v2195 = vadd.f32 %v2194, %v1925
  %v2196 = vadd.f32 %v2195, %v1926
  %v2197 = vadd.f32 %v2196, %v1927
  %v2198 = vadd.f32 %v2197, %v1928
  %v2199 = vadd.f32 %v2198, %v1929
  %v2200 = vadd.f32 %v2199, %v1930
  %v2201 = vadd.f32 %v2200, %v1931
  %v2202 = vadd.f32 %v2201, %v1932
  %v2203 = vadd.f32 %v2202, %v1933
  %v2204 = vadd.f32 %v2203, %v1934
  %v2205 = vadd.f32 %v2204, %v1935
  %v2206 = vadd.f32 %v2205, %v1936
  %v2207 = vadd.f32 %v2206, %v1937
  %v2208 = vadd.f32 %v2207, %v1938
  %v2209 = vadd.f32 %v2208, %v1939
  %v2210 = vrot.slane %v2209, 4
  %v2211 = vadd.f32 %v2209, %v2210
  %v2212 = vrot.slane %v2211, 2
  %v2213 = vadd.f32 %v2211, %v2212
  %v2214 = vrot.slane %v2213, 1
  %v2215 = vadd.f32 %v2213, %v2214
  %v2216 = vadd.f32 %v1940, %v1941
  %v2217 = vadd.f32 %v2216, %v1942
  %v2218 = vadd.f32 %v2217, %v1943
  %v2219 = vadd.f32 %v2218, %v1944
  %v2220 = vadd.f32 %v2219, %v1945
  %v2221 = vadd.f32 %v2220, %v1946
  %v2222 = vadd.f32 %v2221, %v1947
  %v2223 = vadd.f32 %v2222, %v1948
  %v2224 = vadd.f32 %v2223, %v1949
  %v2225 = vadd.f32 %v2224, %v1950
  %v2226 = vadd.f32 %v2225, %v1951
  %v2227 = vadd.f32 %v2226, %v1952
  %v2228 = vadd.f32 %v2227, %v1953
  %v2229 = vadd.f32 %v2228, %v1954
  %v2230 = vadd.f32 %v2229, %v1955
  %v2231 = vadd.f32 %v2230, %v1956
  %v2232 = vadd.f32 %v2231, %v1957
  %v2233 = vadd.f32 %v2232, %v1958
  %v2234 = vadd.f32 %v2233, %v1959
  %v2235 = vadd.f32 %v2234, %v1960
  %v2236 = vadd.f32 %v2235, %v1961
  %v2237 = vadd.f32 %v2236, %v1962
  %v2238 = vadd.f32 %v2237, %v1963
  %v2239 = vadd.f32 %v2238, %v1964
  %v2240 = vadd.f32 %v2239, %v1965
  %v2241 = vadd.f32 %v2240, %v1966
  %v2242 = vadd.f32 %v2241, %v1967
  %v2243 = vadd.f32 %v2242, %v1968
  %v2244 = vadd.f32 %v2243, %v1969
  %v2245 = vadd.f32 %v2244, %v1970
  %v2246 = vadd.f32 %v2245, %v1971
  %v2247 = vrot.slane %v2246, 4
  %v2248 = vadd.f32 %v2246, %v2247
  %v2249 = vrot.slane %v2248, 2
  %v2250 = vadd.f32 %v2248, %v2249
  %v2251 = vrot.slane %v2250, 1
  %v2252 = vadd.f32 %v2250, %v2251
  %v2253 = vadd.f32 %v1972, %v1973
  %v2254 = vadd.f32 %v2253, %v1974
  %v2255 = vadd.f32 %v2254, %v1975
  %v2256 = vadd.f32 %v2255, %v1976
  %v2257 = vadd.f32 %v2256, %v1977
  %v2258 = vadd.f32 %v2257, %v1978
  %v2259 = vadd.f32 %v2258, %v1979
  %v2260 = vadd.f32 %v2259, %v1980
  %v2261 = vadd.f32 %v2260, %v1981
  %v2262 = vadd.f32 %v2261, %v1982
  %v2263 = vadd.f32 %v2262, %v1983
  %v2264 = vadd.f32 %v2263, %v1984
  %v2265 = vadd.f32 %v2264, %v1985
  %v2266 = vadd.f32 %v2265, %v1986
  %v2267 = vadd.f32 %v2266, %v1987
  %v2268 = vadd.f32 %v2267, %v1988
  %v2269 = vadd.f32 %v2268, %v1989
  %v2270 = vadd.f32 %v2269, %v1990
  %v2271 = vadd.f32 %v2270, %v1991
  %v2272 = vadd.f32 %v2271, %v1992
  %v2273 = vadd.f32 %v2272, %v1993
  %v2274 = vadd.f32 %v2273, %v1994
  %v2275 = vadd.f32 %v2274, %v1995
  %v2276 = vadd.f32 %v2275, %v1996
  %v2277 = vadd.f32 %v2276, %v1997
  %v2278 = vadd.f32 %v2277, %v1998
  %v2279 = vadd.f32 %v2278, %v1999
  %v2280 = vadd.f32 %v2279, %v2000
  %v2281 = vadd.f32 %v2280, %v2001
  %v2282 = vadd.f32 %v2281, %v2002
  %v2283 = vadd.f32 %v2282, %v2003
  %v2284 = vrot.slane %v2283, 4
  %v2285 = vadd.f32 %v2283, %v2284
  %v2286 = vrot.slane %v2285, 2
  %v2287 = vadd.f32 %v2285, %v2286
  %v2288 = vrot.slane %v2287, 1
  %v2289 = vadd.f32 %v2287, %v2288
  %v2290 = vadd.f32 %v2004, %v2005
  %v2291 = vadd.f32 %v2290, %v2006
  %v2292 = vadd.f32 %v2291, %v2007
  %v2293 = vadd.f32 %v2292, %v2008
  %v2294 = vadd.f32 %v2293, %v2009
  %v2295 = vadd.f32 %v2294, %v2010
  %v2296 = vadd.f32 %v2295, %v2011
  %v2297 = vadd.f32 %v2296, %v2012
  %v2298 = vadd.f32 %v2297, %v2013
  %v2299 = vadd.f32 %v2298, %v2014
  %v2300 = vadd.f32 %v2299, %v2015
  %v2301 = vadd.f32 %v2300, %v2016
  %v2302 = vadd.f32 %v2301, %v2017
  %v2303 = vadd.f32 %v2302, %v2018
  %v2304 = vadd.f32 %v2303, %v2019
  %v2305 = vadd.f32 %v2304, %v2020
  %v2306 = vadd.f32 %v2305, %v2021
  %v2307 = vadd.f32 %v2306, %v2022
  %v2308 = vadd.f32 %v2307, %v2023
  %v2309 = vadd.f32 %v2308, %v2024
  %v2310 = vadd.f32 %v2309, %v2025
  %v2311 = vadd.f32 %v2310, %v2026
  %v2312 = vadd.f32 %v2311, %v2027
  %v2313 = vadd.f32 %v2312, %v2028
  %v2314 = vadd.f32 %v2313, %v2029
  %v2315 = vadd.f32 %v2314, %v2030
  %v2316 = vadd.f32 %v2315, %v2031
  %v2317 = vadd.f32 %v2316, %v2032
  %v2318 = vadd.f32 %v2317, %v2033
  %v2319 = vadd.f32 %v2318, %v2034
  %v2320 = vadd.f32 %v2319, %v2035
  %v2321 = vrot.slane %v2320, 4
  %v2322 = vadd.f32 %v2320, %v2321
  %v2323 = vrot.slane %v2322, 2
  %v2324 = vadd.f32 %v2322, %v2323
  %v2325 = vrot.slane %v2324, 1
  %v2326 = vadd.f32 %v2324, %v2325
  %v2327 = vadd.f32 %v2036, %v2037
  %v2328 = vadd.f32 %v2327, %v2038
  %v2329 = vadd.f32 %v2328, %v2039
  %v2330 = vadd.f32 %v2329, %v2040
  %v2331 = vadd.f32 %v2330, %v2041
  %v2332 = vadd.f32 %v2331, %v2042
  %v2333 = vadd.f32 %v2332, %v2043
  %v2334 = vadd.f32 %v2333, %v2044
  %v2335 = vadd.f32 %v2334, %v2045
  %v2336 = vadd.f32 %v2335, %v2046
  %v2337 = vadd.f32 %v2336, %v2047
  %v2338 = vadd.f32 %v2337, %v2048
  %v2339 = vadd.f32 %v2338, %v2049
  %v2340 = vadd.f32 %v2339, %v2050
  %v2341 = vadd.f32 %v2340, %v2051
  %v2342 = vadd.f32 %v2341, %v2052
  %v2343 = vadd.f32 %v2342, %v2053
  %v2344 = vadd.f32 %v2343, %v2054
  %v2345 = vadd.f32 %v2344, %v2055
  %v2346 = vadd.f32 %v2345, %v2056
  %v2347 = vadd.f32 %v2346, %v2057
  %v2348 = vadd.f32 %v2347, %v2058
  %v2349 = vadd.f32 %v2348, %v2059
  %v2350 = vadd.f32 %v2349, %v2060
  %v2351 = vadd.f32 %v2350, %v2061
  %v2352 = vadd.f32 %v2351, %v2062
  %v2353 = vadd.f32 %v2352, %v2063
  %v2354 = vadd.f32 %v2353, %v2064
  %v2355 = vadd.f32 %v2354, %v2065
  %v2356 = vadd.f32 %v2355, %v2066
  %v2357 = vadd.f32 %v2356, %v2067
  %v2358 = vrot.slane %v2357, 4
  %v2359 = vadd.f32 %v2357, %v2358
  %v2360 = vrot.slane %v2359, 2
  %v2361 = vadd.f32 %v2359, %v2360
  %v2362 = vrot.slane %v2361, 1
  %v2363 = vadd.f32 %v2361, %v2362
  %v2364 = vrcp.pop 256.0
  %v2365 = vmul.f32 256.0, %v2364
  %v2366 = vsub.f32 1.0, %v2365
  %v2367 = vmul.f32 %v2364, %v2366
  %v2368 = vadd.f32 %v2364, %v2367
  %vm2369 = vweird.f32 %v2364
  %v2370 = vsel %vm2369, %v2364, %v2368
  %v2371 = vmul.f32 %v2104, %v2370
  %v2372 = vmul.f32 %v2141, %v2370
  %v2373 = vmul.f32 %v2178, %v2370
  %v2374 = vmul.f32 %v2215, %v2370
  %v2375 = vmul.f32 %v2252, %v2370
  %v2376 = vmul.f32 %v2289, %v2370
  %v2377 = vmul.f32 %v2326, %v2370
  %v2378 = vmul.f32 %v2363, %v2370
  %v2379 = vpack.c.bf16 %v2371, %v2371
  %v2380 = vpack.c.bf16 %v2372, %v2372
  %v2381 = vpack.c.bf16 %v2373, %v2373
  %v2382 = vpack.c.bf16 %v2374, %v2374
  %v2383 = vpack.c.bf16 %v2375, %v2375
  %v2384 = vpack.c.bf16 %v2376, %v2376
  %v2385 = vpack.c.bf16 %v2377, %v2377
  %v2386 = vpack.c.bf16 %v2378, %v2378
  %v2387 = vld [vmem:[%s4] sm:$0xff]
  %v2388 = vld [vmem:[%s4 + $0x8] sm:$0xff]
  %v2389 = vld [vmem:[%s4 + $0x10] sm:$0xff]
  %v2390 = vld [vmem:[%s4 + $0x18] sm:$0xff]
  %v2391 = vld [vmem:[%s4 + $0x20] sm:$0xff]
  %v2392 = vld [vmem:[%s4 + $0x28] sm:$0xff]
  %v2393 = vld [vmem:[%s4 + $0x30] sm:$0xff]
  %v2394 = vld [vmem:[%s4 + $0x38] sm:$0xff]
  %v2395 = vld [vmem:[%s4 + $0x40] sm:$0xff]
  %v2396 = vld [vmem:[%s4 + $0x48] sm:$0xff]
  %v2397 = vld [vmem:[%s4 + $0x50] sm:$0xff]
  %v2398 = vld [vmem:[%s4 + $0x58] sm:$0xff]
  %v2399 = vld [vmem:[%s4 + $0x60] sm:$0xff]
  %v2400 = vld [vmem:[%s4 + $0x68] sm:$0xff]
  %v2401 = vld [vmem:[%s4 + $0x70] sm:$0xff]
  %v2402 = vld [vmem:[%s4 + $0x78] sm:$0xff]
  %v2403 = vld [vmem:[%s1] sm:$0xf]
  %v2404 = vld [vmem:[%s5] sm:$0xff]
  %v2405 = vld [vmem:[%s5 + $0x8] sm:$0xff]
  %v2406 = vld [vmem:[%s5 + $0x10] sm:$0xff]
  %v2407 = vld [vmem:[%s5 + $0x18] sm:$0xff]
  %v2408 = vld [vmem:[%s5 + $0x20] sm:$0xff]
  %v2409 = vld [vmem:[%s5 + $0x28] sm:$0xff]
  %v2410 = vld [vmem:[%s5 + $0x30] sm:$0xff]
  %v2411 = vld [vmem:[%s5 + $0x38] sm:$0xff]
  %v2412 = vld [vmem:[%s5 + $0x40] sm:$0xff]
  %v2413 = vld [vmem:[%s5 + $0x48] sm:$0xff]
  %v2414 = vld [vmem:[%s5 + $0x50] sm:$0xff]
  %v2415 = vld [vmem:[%s5 + $0x58] sm:$0xff]
  %v2416 = vld [vmem:[%s5 + $0x60] sm:$0xff]
  %v2417 = vld [vmem:[%s5 + $0x68] sm:$0xff]
  %v2418 = vld [vmem:[%s5 + $0x70] sm:$0xff]
  %v2419 = vld [vmem:[%s5 + $0x78] sm:$0xff]
  %v2436 = vunpack.c.l.b16 %v2404
  %v2437 = vunpack.c.h.b16 %v2404
  %v2438 = vunpack.c.l.b16 %v2405
  %v2439 = vunpack.c.h.b16 %v2405
  %v2440 = vunpack.c.l.b16 %v2406
  %v2441 = vunpack.c.h.b16 %v2406
  %v2442 = vunpack.c.l.b16 %v2407
  %v2443 = vunpack.c.h.b16 %v2407
  %v2444 = vunpack.c.l.b16 %v2408
  %v2445 = vunpack.c.h.b16 %v2408
  %v2446 = vunpack.c.l.b16 %v2409
  %v2447 = vunpack.c.h.b16 %v2409
  %v2448 = vunpack.c.l.b16 %v2410
  %v2449 = vunpack.c.h.b16 %v2410
  %v2450 = vunpack.c.l.b16 %v2411
  %v2451 = vunpack.c.h.b16 %v2411
  %v2452 = vunpack.c.l.b16 %v2412
  %v2453 = vunpack.c.h.b16 %v2412
  %v2454 = vunpack.c.l.b16 %v2413
  %v2455 = vunpack.c.h.b16 %v2413
  %v2456 = vunpack.c.l.b16 %v2414
  %v2457 = vunpack.c.h.b16 %v2414
  %v2458 = vunpack.c.l.b16 %v2415
  %v2459 = vunpack.c.h.b16 %v2415
  %v2460 = vunpack.c.l.b16 %v2416
  %v2461 = vunpack.c.h.b16 %v2416
  %v2462 = vunpack.c.l.b16 %v2417
  %v2463 = vunpack.c.h.b16 %v2417
  %v2464 = vunpack.c.l.b16 %v2418
  %v2465 = vunpack.c.h.b16 %v2418
  %v2466 = vunpack.c.l.b16 %v2419
  %v2467 = vunpack.c.h.b16 %v2419
  %v2468 = vpack.c.b16 %v2438, %v2436
  %v2469 = vpack.c.b16 %v2439, %v2437
  %v2470 = vpack.c.b16 %v2442, %v2440
  %v2471 = vpack.c.b16 %v2443, %v2441
  %v2472 = vpack.c.b16 %v2446, %v2444
  %v2473 = vpack.c.b16 %v2447, %v2445
  %v2474 = vpack.c.b16 %v2450, %v2448
  %v2475 = vpack.c.b16 %v2451, %v2449
  %v2476 = vpack.c.b16 %v2454, %v2452
  %v2477 = vpack.c.b16 %v2455, %v2453
  %v2478 = vpack.c.b16 %v2458, %v2456
  %v2479 = vpack.c.b16 %v2459, %v2457
  %v2480 = vpack.c.b16 %v2462, %v2460
  %v2481 = vpack.c.b16 %v2463, %v2461
  %v2482 = vpack.c.b16 %v2466, %v2464
  %v2483 = vpack.c.b16 %v2467, %v2465
  %2500 = vmatpush.bf16.msra.mxu0 %v2482
  %2501 = vmatpush.bf16.msra.mxu0 %v2480
  %2502 = vmatpush.bf16.msra.mxu0 %v2478
  %2503 = vmatpush.bf16.msra.mxu0 %v2476
  %2504 = vmatpush.bf16.msra.mxu0 %v2474
  %2505 = vmatpush.bf16.msra.mxu0 %v2472
  %2506 = vmatpush.bf16.msra.mxu0 %v2470
  %2507 = vmatpush.bf16.msra.mxu0 %v2468
  %2508 = vmatmul.bf16.gmra.mxu0 %v2403
  %v2509 = vpop.f32.mrf.mxu0
  %v2510 = vadd.f32 0.0, %v2509
  %v2511 = vpop.f32.mrf.mxu0
  %2512 = vdwg.mxu0
  %2513 = vmatpush.bf16.msra.mxu0 %v2483
  %2514 = vmatpush.bf16.msra.mxu0 %v2481
  %2515 = vmatpush.bf16.msra.mxu0 %v2479
  %2516 = vmatpush.bf16.msra.mxu0 %v2477
  %2517 = vmatpush.bf16.msra.mxu0 %v2475
  %2518 = vmatpush.bf16.msra.mxu0 %v2473
  %2519 = vmatpush.bf16.msra.mxu0 %v2471
  %2520 = vmatpush.bf16.msra.mxu0 %v2469
  %2521 = vmatmul.bf16.gmra.mxu0 %v2403
  %v2522 = vpop.f32.mrf.mxu0
  %v2523 = vadd.f32 0.0, %v2522
  %v2524 = vpop.f32.mrf.mxu0
  %2525 = vdwg.mxu0
  %v2534 = vunpack.c.l.b16 %v2379
  %v2535 = vunpack.c.l.b16 %v2380
  %v2536 = vunpack.c.l.b16 %v2381
  %v2537 = vunpack.c.l.b16 %v2382
  %v2538 = vunpack.c.l.b16 %v2383
  %v2539 = vunpack.c.l.b16 %v2384
  %v2540 = vunpack.c.l.b16 %v2385
  %v2541 = vunpack.c.l.b16 %v2386
  %vm2542 = vcmask 1041409
  %v2543 = vsel %vm2542, %v2535, %v2534
  %vm2544 = vcmask 1042434
  %v2545 = vsel %vm2544, %v2536, %v2543
  %vm2546 = vcmask 1043459
  %v2547 = vsel %vm2546, %v2537, %v2545
  %vm2548 = vcmask 1044484
  %v2549 = vsel %vm2548, %v2538, %v2547
  %vm2550 = vcmask 1045509
  %v2551 = vsel %vm2550, %v2539, %v2549
  %vm2552 = vcmask 1046534
  %v2553 = vsel %vm2552, %v2540, %v2551
  %vm2554 = vcmask 1047559
  %v2555 = vsel %vm2554, %v2541, %v2553
  %v2556 = vpack.c.b16 %v2555, %v2555
  %v2574 = vunpack.c.l.b16 %v2387
  %v2575 = vunpack.c.h.b16 %v2387
  %v2576 = vunpack.c.l.b16 %v2388
  %v2577 = vunpack.c.h.b16 %v2388
  %v2578 = vunpack.c.l.b16 %v2389
  %v2579 = vunpack.c.h.b16 %v2389
  %v2580 = vunpack.c.l.b16 %v2390
  %v2581 = vunpack.c.h.b16 %v2390
  %v2582 = vunpack.c.l.b16 %v2391
  %v2583 = vunpack.c.h.b16 %v2391
  %v2584 = vunpack.c.l.b16 %v2392
  %v2585 = vunpack.c.h.b16 %v2392
  %v2586 = vunpack.c.l.b16 %v2393
  %v2587 = vunpack.c.h.b16 %v2393
  %v2588 = vunpack.c.l.b16 %v2394
  %v2589 = vunpack.c.h.b16 %v2394
  %v2590 = vunpack.c.l.b16 %v2395
  %v2591 = vunpack.c.h.b16 %v2395
  %v2592 = vunpack.c.l.b16 %v2396
  %v2593 = vunpack.c.h.b16 %v2396
  %v2594 = vunpack.c.l.b16 %v2397
  %v2595 = vunpack.c.h.b16 %v2397
  %v2596 = vunpack.c.l.b16 %v2398
  %v2597 = vunpack.c.h.b16 %v2398
  %v2598 = vunpack.c.l.b16 %v2399
  %v2599 = vunpack.c.h.b16 %v2399
  %v2600 = vunpack.c.l.b16 %v2400
  %v2601 = vunpack.c.h.b16 %v2400
  %v2602 = vunpack.c.l.b16 %v2401
  %v2603 = vunpack.c.h.b16 %v2401
  %v2604 = vunpack.c.l.b16 %v2402
  %v2605 = vunpack.c.h.b16 %v2402
  %v2606 = vpack.c.b16 %v2576, %v2574
  %v2607 = vpack.c.b16 %v2577, %v2575
  %v2608 = vpack.c.b16 %v2580, %v2578
  %v2609 = vpack.c.b16 %v2581, %v2579
  %v2610 = vpack.c.b16 %v2584, %v2582
  %v2611 = vpack.c.b16 %v2585, %v2583
  %v2612 = vpack.c.b16 %v2588, %v2586
  %v2613 = vpack.c.b16 %v2589, %v2587
  %v2614 = vpack.c.b16 %v2592, %v2590
  %v2615 = vpack.c.b16 %v2593, %v2591
  %v2616 = vpack.c.b16 %v2596, %v2594
  %v2617 = vpack.c.b16 %v2597, %v2595
  %v2618 = vpack.c.b16 %v2600, %v2598
  %v2619 = vpack.c.b16 %v2601, %v2599
  %v2620 = vpack.c.b16 %v2604, %v2602
  %v2621 = vpack.c.b16 %v2605, %v2603
  %2638 = vmatpush.bf16.msra.mxu0 %v2620
  %2639 = vmatpush.bf16.msra.mxu0 %v2618
  %2640 = vmatpush.bf16.msra.mxu0 %v2616
  %2641 = vmatpush.bf16.msra.mxu0 %v2614
  %2642 = vmatpush.bf16.msra.mxu0 %v2612
  %2643 = vmatpush.bf16.msra.mxu0 %v2610
  %2644 = vmatpush.bf16.msra.mxu0 %v2608
  %2645 = vmatpush.bf16.msra.mxu0 %v2606
  %2646 = vmatmul.bf16.gmra.mxu0 %v2556
  %v2647 = vpop.f32.mrf.mxu0
  %v2648 = vadd.f32 %v2510, %v2647
  %v2649 = vpop.f32.mrf.mxu0
  %2650 = vdwg.mxu0
  %2651 = vmatpush.bf16.msra.mxu0 %v2621
  %2652 = vmatpush.bf16.msra.mxu0 %v2619
  %2653 = vmatpush.bf16.msra.mxu0 %v2617
  %2654 = vmatpush.bf16.msra.mxu0 %v2615
  %2655 = vmatpush.bf16.msra.mxu0 %v2613
  %2656 = vmatpush.bf16.msra.mxu0 %v2611
  %2657 = vmatpush.bf16.msra.mxu0 %v2609
  %2658 = vmatpush.bf16.msra.mxu0 %v2607
  %2659 = vmatmul.bf16.gmra.mxu0 %v2556
  %v2660 = vpop.f32.mrf.mxu0
  %v2661 = vadd.f32 %v2523, %v2660
  %v2662 = vpop.f32.mrf.mxu0
  %2663 = vdwg.mxu0
  %v2664 = vld [vmem:[%s6] sm:$0x3]
  %v2666 = vperm.slane %v2664, 0
  %v2667 = vperm.slane %v2664, 1
  %v2670 = vadd.f32 %v2648, %v2666
  %v2671 = vadd.f32 %v2661, %v2667
  %v2672 = vmax.f32 %v2670, 0.0
  %v2673 = vmax.f32 %v2671, 0.0
  %v2674 = vpack.c.bf16 %v2672, %v2672
  %v2675 = vpack.c.bf16 %v2673, %v2673
  %v2676 = vld [vmem:[%s7] sm:$0xff]
  %v2677 = vld [vmem:[%s7 + $0x8] sm:$0xff]
  %v2678 = vld [vmem:[%s7 + $0x10] sm:$0xff]
  %v2679 = vld [vmem:[%s7 + $0x18] sm:$0xff]
  %v2680 = vld [vmem:[%s7 + $0x20] sm:$0xff]
  %v2681 = vld [vmem:[%s7 + $0x28] sm:$0xff]
  %v2682 = vld [vmem:[%s7 + $0x30] sm:$0xff]
  %v2683 = vld [vmem:[%s7 + $0x38] sm:$0xff]
  %v2684 = vld [vmem:[%s7 + $0x40] sm:$0xff]
  %v2685 = vld [vmem:[%s7 + $0x48] sm:$0xff]
  %v2686 = vld [vmem:[%s7 + $0x50] sm:$0xff]
  %v2687 = vld [vmem:[%s7 + $0x58] sm:$0xff]
  %v2688 = vld [vmem:[%s7 + $0x60] sm:$0xff]
  %v2689 = vld [vmem:[%s7 + $0x68] sm:$0xff]
  %v2690 = vld [vmem:[%s7 + $0x70] sm:$0xff]
  %v2691 = vld [vmem:[%s7 + $0x78] sm:$0xff]
  %v2692 = vld [vmem:[%s7 + $0x80] sm:$0xff]
  %v2693 = vld [vmem:[%s7 + $0x88] sm:$0xff]
  %v2694 = vld [vmem:[%s7 + $0x90] sm:$0xff]
  %v2695 = vld [vmem:[%s7 + $0x98] sm:$0xff]
  %v2696 = vld [vmem:[%s7 + $0xa0] sm:$0xff]
  %v2697 = vld [vmem:[%s7 + $0xa8] sm:$0xff]
  %v2698 = vld [vmem:[%s7 + $0xb0] sm:$0xff]
  %v2699 = vld [vmem:[%s7 + $0xb8] sm:$0xff]
  %v2700 = vld [vmem:[%s7 + $0xc0] sm:$0xff]
  %v2701 = vld [vmem:[%s7 + $0xc8] sm:$0xff]
  %v2702 = vld [vmem:[%s7 + $0xd0] sm:$0xff]
  %v2703 = vld [vmem:[%s7 + $0xd8] sm:$0xff]
  %v2704 = vld [vmem:[%s7 + $0xe0] sm:$0xff]
  %v2705 = vld [vmem:[%s7 + $0xe8] sm:$0xff]
  %v2706 = vld [vmem:[%s7 + $0xf0] sm:$0xff]
  %v2707 = vld [vmem:[%s7 + $0xf8] sm:$0xff]
  %v2708 = vld [vmem:[%s8] sm:$0x3]
  %v2710 = vperm.slane %v2708, 0
  %v2711 = vperm.slane %v2708, 1
  %v2746 = vunpack.c.l.b16 %v2676
  %v2747 = vunpack.c.h.b16 %v2676
  %v2748 = vunpack.c.l.b16 %v2677
  %v2749 = vunpack.c.h.b16 %v2677
  %v2750 = vunpack.c.l.b16 %v2678
  %v2751 = vunpack.c.h.b16 %v2678
  %v2752 = vunpack.c.l.b16 %v2679
  %v2753 = vunpack.c.h.b16 %v2679
  %v2754 = vunpack.c.l.b16 %v2680
  %v2755 = vunpack.c.h.b16 %v2680
  %v2756 = vunpack.c.l.b16 %v2681
  %v2757 = vunpack.c.h.b16 %v2681
  %v2758 = vunpack.c.l.b16 %v2682
  %v2759 = vunpack.c.h.b16 %v2682
  %v2760 = vunpack.c.l.b16 %v2683
  %v2761 = vunpack.c.h.b16 %v2683
  %v2762 = vunpack.c.l.b16 %v2684
  %v2763 = vunpack.c.h.b16 %v2684
  %v2764 = vunpack.c.l.b16 %v2685
  %v2765 = vunpack.c.h.b16 %v2685
  %v2766 = vunpack.c.l.b16 %v2686
  %v2767 = vunpack.c.h.b16 %v2686
  %v2768 = vunpack.c.l.b16 %v2687
  %v2769 = vunpack.c.h.b16 %v2687
  %v2770 = vunpack.c.l.b16 %v2688
  %v2771 = vunpack.c.h.b16 %v2688
  %v2772 = vunpack.c.l.b16 %v2689
  %v2773 = vunpack.c.h.b16 %v2689
  %v2774 = vunpack.c.l.b16 %v2690
  %v2775 = vunpack.c.h.b16 %v2690
  %v2776 = vunpack.c.l.b16 %v2691
  %v2777 = vunpack.c.h.b16 %v2691
  %v2778 = vunpack.c.l.b16 %v2692
  %v2779 = vunpack.c.h.b16 %v2692
  %v2780 = vunpack.c.l.b16 %v2693
  %v2781 = vunpack.c.h.b16 %v2693
  %v2782 = vunpack.c.l.b16 %v2694
  %v2783 = vunpack.c.h.b16 %v2694
  %v2784 = vunpack.c.l.b16 %v2695
  %v2785 = vunpack.c.h.b16 %v2695
  %v2786 = vunpack.c.l.b16 %v2696
  %v2787 = vunpack.c.h.b16 %v2696
  %v2788 = vunpack.c.l.b16 %v2697
  %v2789 = vunpack.c.h.b16 %v2697
  %v2790 = vunpack.c.l.b16 %v2698
  %v2791 = vunpack.c.h.b16 %v2698
  %v2792 = vunpack.c.l.b16 %v2699
  %v2793 = vunpack.c.h.b16 %v2699
  %v2794 = vunpack.c.l.b16 %v2700
  %v2795 = vunpack.c.h.b16 %v2700
  %v2796 = vunpack.c.l.b16 %v2701
  %v2797 = vunpack.c.h.b16 %v2701
  %v2798 = vunpack.c.l.b16 %v2702
  %v2799 = vunpack.c.h.b16 %v2702
  %v2800 = vunpack.c.l.b16 %v2703
  %v2801 = vunpack.c.h.b16 %v2703
  %v2802 = vunpack.c.l.b16 %v2704
  %v2803 = vunpack.c.h.b16 %v2704
  %v2804 = vunpack.c.l.b16 %v2705
  %v2805 = vunpack.c.h.b16 %v2705
  %v2806 = vunpack.c.l.b16 %v2706
  %v2807 = vunpack.c.h.b16 %v2706
  %v2808 = vunpack.c.l.b16 %v2707
  %v2809 = vunpack.c.h.b16 %v2707
  %v2810 = vpack.c.b16 %v2748, %v2746
  %v2811 = vpack.c.b16 %v2749, %v2747
  %v2812 = vpack.c.b16 %v2752, %v2750
  %v2813 = vpack.c.b16 %v2753, %v2751
  %v2814 = vpack.c.b16 %v2756, %v2754
  %v2815 = vpack.c.b16 %v2757, %v2755
  %v2816 = vpack.c.b16 %v2760, %v2758
  %v2817 = vpack.c.b16 %v2761, %v2759
  %v2818 = vpack.c.b16 %v2764, %v2762
  %v2819 = vpack.c.b16 %v2765, %v2763
  %v2820 = vpack.c.b16 %v2768, %v2766
  %v2821 = vpack.c.b16 %v2769, %v2767
  %v2822 = vpack.c.b16 %v2772, %v2770
  %v2823 = vpack.c.b16 %v2773, %v2771
  %v2824 = vpack.c.b16 %v2776, %v2774
  %v2825 = vpack.c.b16 %v2777, %v2775
  %v2826 = vpack.c.b16 %v2780, %v2778
  %v2827 = vpack.c.b16 %v2781, %v2779
  %v2828 = vpack.c.b16 %v2784, %v2782
  %v2829 = vpack.c.b16 %v2785, %v2783
  %v2830 = vpack.c.b16 %v2788, %v2786
  %v2831 = vpack.c.b16 %v2789, %v2787
  %v2832 = vpack.c.b16 %v2792, %v2790
  %v2833 = vpack.c.b16 %v2793, %v2791
  %v2834 = vpack.c.b16 %v2796, %v2794
  %v2835 = vpack.c.b16 %v2797, %v2795
  %v2836 = vpack.c.b16 %v2800, %v2798
  %v2837 = vpack.c.b16 %v2801, %v2799
  %v2838 = vpack.c.b16 %v2804, %v2802
  %v2839 = vpack.c.b16 %v2805, %v2803
  %v2840 = vpack.c.b16 %v2808, %v2806
  %v2841 = vpack.c.b16 %v2809, %v2807
  %2874 = vmatpush.bf16.msra.mxu0 %v2824
  %2875 = vmatpush.bf16.msra.mxu0 %v2822
  %2876 = vmatpush.bf16.msra.mxu0 %v2820
  %2877 = vmatpush.bf16.msra.mxu0 %v2818
  %2878 = vmatpush.bf16.msra.mxu0 %v2816
  %2879 = vmatpush.bf16.msra.mxu0 %v2814
  %2880 = vmatpush.bf16.msra.mxu0 %v2812
  %2881 = vmatpush.bf16.msra.mxu0 %v2810
  %2882 = vmatmul.bf16.gmra.mxu0 %v2674
  %v2883 = vpop.f32.mrf.mxu0
  %v2884 = vadd.f32 %v2710, %v2883
  %v2885 = vpop.f32.mrf.mxu0
  %2886 = vdwg.mxu0
  %2887 = vmatpush.bf16.msra.mxu0 %v2840
  %2888 = vmatpush.bf16.msra.mxu0 %v2838
  %2889 = vmatpush.bf16.msra.mxu0 %v2836
  %2890 = vmatpush.bf16.msra.mxu0 %v2834
  %2891 = vmatpush.bf16.msra.mxu0 %v2832
  %2892 = vmatpush.bf16.msra.mxu0 %v2830
  %2893 = vmatpush.bf16.msra.mxu0 %v2828
  %2894 = vmatpush.bf16.msra.mxu0 %v2826
  %2895 = vmatmul.bf16.gmra.mxu0 %v2675
  %v2896 = vpop.f32.mrf.mxu0
  %v2897 = vadd.f32 %v2884, %v2896
  %v2898 = vpop.f32.mrf.mxu0
  %2899 = vdwg.mxu0
  %2900 = vmatpush.bf16.msra.mxu0 %v2825
  %2901 = vmatpush.bf16.msra.mxu0 %v2823
  %2902 = vmatpush.bf16.msra.mxu0 %v2821
  %2903 = vmatpush.bf16.msra.mxu0 %v2819
  %2904 = vmatpush.bf16.msra.mxu0 %v2817
  %2905 = vmatpush.bf16.msra.mxu0 %v2815
  %2906 = vmatpush.bf16.msra.mxu0 %v2813
  %2907 = vmatpush.bf16.msra.mxu0 %v2811
  %2908 = vmatmul.bf16.gmra.mxu0 %v2674
  %v2909 = vpop.f32.mrf.mxu0
  %v2910 = vadd.f32 %v2711, %v2909
  %v2911 = vpop.f32.mrf.mxu0
  %2912 = vdwg.mxu0
  %2913 = vmatpush.bf16.msra.mxu0 %v2841
  %2914 = vmatpush.bf16.msra.mxu0 %v2839
  %2915 = vmatpush.bf16.msra.mxu0 %v2837
  %2916 = vmatpush.bf16.msra.mxu0 %v2835
  %2917 = vmatpush.bf16.msra.mxu0 %v2833
  %2918 = vmatpush.bf16.msra.mxu0 %v2831
  %2919 = vmatpush.bf16.msra.mxu0 %v2829
  %2920 = vmatpush.bf16.msra.mxu0 %v2827
  %2921 = vmatmul.bf16.gmra.mxu0 %v2675
  %v2922 = vpop.f32.mrf.mxu0
  %v2923 = vadd.f32 %v2910, %v2922
  %v2924 = vpop.f32.mrf.mxu0
  %2925 = vdwg.mxu0
  %v2926 = vmax.f32 %v2897, 0.0
  %v2927 = vmax.f32 %v2923, 0.0
  %v2928 = vpack.c.bf16 %v2926, %v2926
  %v2929 = vpack.c.bf16 %v2927, %v2927
  %v2930 = vld [vmem:[%s9] sm:$0xff]
  %v2931 = vld [vmem:[%s9 + $0x8] sm:$0xff]
  %v2932 = vld [vmem:[%s9 + $0x10] sm:$0xff]
  %v2933 = vld [vmem:[%s9 + $0x18] sm:$0xff]
  %v2934 = vld [vmem:[%s9 + $0x20] sm:$0xff]
  %v2935 = vld [vmem:[%s9 + $0x28] sm:$0xff]
  %v2936 = vld [vmem:[%s9 + $0x30] sm:$0xff]
  %v2937 = vld [vmem:[%s9 + $0x38] sm:$0xff]
  %v2938 = vld [vmem:[%s9 + $0x40] sm:$0xff]
  %v2939 = vld [vmem:[%s9 + $0x48] sm:$0xff]
  %v2940 = vld [vmem:[%s9 + $0x50] sm:$0xff]
  %v2941 = vld [vmem:[%s9 + $0x58] sm:$0xff]
  %v2942 = vld [vmem:[%s9 + $0x60] sm:$0xff]
  %v2943 = vld [vmem:[%s9 + $0x68] sm:$0xff]
  %v2944 = vld [vmem:[%s9 + $0x70] sm:$0xff]
  %v2945 = vld [vmem:[%s9 + $0x78] sm:$0xff]
  %v2946 = vld [vmem:[%s9 + $0x80] sm:$0xff]
  %v2947 = vld [vmem:[%s9 + $0x88] sm:$0xff]
  %v2948 = vld [vmem:[%s9 + $0x90] sm:$0xff]
  %v2949 = vld [vmem:[%s9 + $0x98] sm:$0xff]
  %v2950 = vld [vmem:[%s9 + $0xa0] sm:$0xff]
  %v2951 = vld [vmem:[%s9 + $0xa8] sm:$0xff]
  %v2952 = vld [vmem:[%s9 + $0xb0] sm:$0xff]
  %v2953 = vld [vmem:[%s9 + $0xb8] sm:$0xff]
  %v2954 = vld [vmem:[%s9 + $0xc0] sm:$0xff]
  %v2955 = vld [vmem:[%s9 + $0xc8] sm:$0xff]
  %v2956 = vld [vmem:[%s9 + $0xd0] sm:$0xff]
  %v2957 = vld [vmem:[%s9 + $0xd8] sm:$0xff]
  %v2958 = vld [vmem:[%s9 + $0xe0] sm:$0xff]
  %v2959 = vld [vmem:[%s9 + $0xe8] sm:$0xff]
  %v2960 = vld [vmem:[%s9 + $0xf0] sm:$0xff]
  %v2961 = vld [vmem:[%s9 + $0xf8] sm:$0xff]
  %v2962 = vld [vmem:[%s10] sm:$0x3]
  %v2964 = vperm.slane %v2962, 0
  %v2965 = vperm.slane %v2962, 1
  %v3000 = vunpack.c.l.b16 %v2930
  %v3001 = vunpack.c.h.b16 %v2930
  %v3002 = vunpack.c.l.b16 %v2931
  %v3003 = vunpack.c.h.b16 %v2931
  %v3004 = vunpack.c.l.b16 %v2932
  %v3005 = vunpack.c.h.b16 %v2932
  %v3006 = vunpack.c.l.b16 %v2933
  %v3007 = vunpack.c.h.b16 %v2933
  %v3008 = vunpack.c.l.b16 %v2934
  %v3009 = vunpack.c.h.b16 %v2934
  %v3010 = vunpack.c.l.b16 %v2935
  %v3011 = vunpack.c.h.b16 %v2935
  %v3012 = vunpack.c.l.b16 %v2936
  %v3013 = vunpack.c.h.b16 %v2936
  %v3014 = vunpack.c.l.b16 %v2937
  %v3015 = vunpack.c.h.b16 %v2937
  %v3016 = vunpack.c.l.b16 %v2938
  %v3017 = vunpack.c.h.b16 %v2938
  %v3018 = vunpack.c.l.b16 %v2939
  %v3019 = vunpack.c.h.b16 %v2939
  %v3020 = vunpack.c.l.b16 %v2940
  %v3021 = vunpack.c.h.b16 %v2940
  %v3022 = vunpack.c.l.b16 %v2941
  %v3023 = vunpack.c.h.b16 %v2941
  %v3024 = vunpack.c.l.b16 %v2942
  %v3025 = vunpack.c.h.b16 %v2942
  %v3026 = vunpack.c.l.b16 %v2943
  %v3027 = vunpack.c.h.b16 %v2943
  %v3028 = vunpack.c.l.b16 %v2944
  %v3029 = vunpack.c.h.b16 %v2944
  %v3030 = vunpack.c.l.b16 %v2945
  %v3031 = vunpack.c.h.b16 %v2945
  %v3032 = vunpack.c.l.b16 %v2946
  %v3033 = vunpack.c.h.b16 %v2946
  %v3034 = vunpack.c.l.b16 %v2947
  %v3035 = vunpack.c.h.b16 %v2947
  %v3036 = vunpack.c.l.b16 %v2948
  %v3037 = vunpack.c.h.b16 %v2948
  %v3038 = vunpack.c.l.b16 %v2949
  %v3039 = vunpack.c.h.b16 %v2949
  %v3040 = vunpack.c.l.b16 %v2950
  %v3041 = vunpack.c.h.b16 %v2950
  %v3042 = vunpack.c.l.b16 %v2951
  %v3043 = vunpack.c.h.b16 %v2951
  %v3044 = vunpack.c.l.b16 %v2952
  %v3045 = vunpack.c.h.b16 %v2952
  %v3046 = vunpack.c.l.b16 %v2953
  %v3047 = vunpack.c.h.b16 %v2953
  %v3048 = vunpack.c.l.b16 %v2954
  %v3049 = vunpack.c.h.b16 %v2954
  %v3050 = vunpack.c.l.b16 %v2955
  %v3051 = vunpack.c.h.b16 %v2955
  %v3052 = vunpack.c.l.b16 %v2956
  %v3053 = vunpack.c.h.b16 %v2956
  %v3054 = vunpack.c.l.b16 %v2957
  %v3055 = vunpack.c.h.b16 %v2957
  %v3056 = vunpack.c.l.b16 %v2958
  %v3057 = vunpack.c.h.b16 %v2958
  %v3058 = vunpack.c.l.b16 %v2959
  %v3059 = vunpack.c.h.b16 %v2959
  %v3060 = vunpack.c.l.b16 %v2960
  %v3061 = vunpack.c.h.b16 %v2960
  %v3062 = vunpack.c.l.b16 %v2961
  %v3063 = vunpack.c.h.b16 %v2961
  %v3064 = vpack.c.b16 %v3002, %v3000
  %v3065 = vpack.c.b16 %v3003, %v3001
  %v3066 = vpack.c.b16 %v3006, %v3004
  %v3067 = vpack.c.b16 %v3007, %v3005
  %v3068 = vpack.c.b16 %v3010, %v3008
  %v3069 = vpack.c.b16 %v3011, %v3009
  %v3070 = vpack.c.b16 %v3014, %v3012
  %v3071 = vpack.c.b16 %v3015, %v3013
  %v3072 = vpack.c.b16 %v3018, %v3016
  %v3073 = vpack.c.b16 %v3019, %v3017
  %v3074 = vpack.c.b16 %v3022, %v3020
  %v3075 = vpack.c.b16 %v3023, %v3021
  %v3076 = vpack.c.b16 %v3026, %v3024
  %v3077 = vpack.c.b16 %v3027, %v3025
  %v3078 = vpack.c.b16 %v3030, %v3028
  %v3079 = vpack.c.b16 %v3031, %v3029
  %v3080 = vpack.c.b16 %v3034, %v3032
  %v3081 = vpack.c.b16 %v3035, %v3033
  %v3082 = vpack.c.b16 %v3038, %v3036
  %v3083 = vpack.c.b16 %v3039, %v3037
  %v3084 = vpack.c.b16 %v3042, %v3040
  %v3085 = vpack.c.b16 %v3043, %v3041
  %v3086 = vpack.c.b16 %v3046, %v3044
  %v3087 = vpack.c.b16 %v3047, %v3045
  %v3088 = vpack.c.b16 %v3050, %v3048
  %v3089 = vpack.c.b16 %v3051, %v3049
  %v3090 = vpack.c.b16 %v3054, %v3052
  %v3091 = vpack.c.b16 %v3055, %v3053
  %v3092 = vpack.c.b16 %v3058, %v3056
  %v3093 = vpack.c.b16 %v3059, %v3057
  %v3094 = vpack.c.b16 %v3062, %v3060
  %v3095 = vpack.c.b16 %v3063, %v3061
  %3128 = vmatpush.bf16.msra.mxu0 %v3078
  %3129 = vmatpush.bf16.msra.mxu0 %v3076
  %3130 = vmatpush.bf16.msra.mxu0 %v3074
  %3131 = vmatpush.bf16.msra.mxu0 %v3072
  %3132 = vmatpush.bf16.msra.mxu0 %v3070
  %3133 = vmatpush.bf16.msra.mxu0 %v3068
  %3134 = vmatpush.bf16.msra.mxu0 %v3066
  %3135 = vmatpush.bf16.msra.mxu0 %v3064
  %3136 = vmatmul.bf16.gmra.mxu0 %v2928
  %v3137 = vpop.f32.mrf.mxu0
  %v3138 = vadd.f32 %v2964, %v3137
  %v3139 = vpop.f32.mrf.mxu0
  %3140 = vdwg.mxu0
  %3141 = vmatpush.bf16.msra.mxu0 %v3094
  %3142 = vmatpush.bf16.msra.mxu0 %v3092
  %3143 = vmatpush.bf16.msra.mxu0 %v3090
  %3144 = vmatpush.bf16.msra.mxu0 %v3088
  %3145 = vmatpush.bf16.msra.mxu0 %v3086
  %3146 = vmatpush.bf16.msra.mxu0 %v3084
  %3147 = vmatpush.bf16.msra.mxu0 %v3082
  %3148 = vmatpush.bf16.msra.mxu0 %v3080
  %3149 = vmatmul.bf16.gmra.mxu0 %v2929
  %v3150 = vpop.f32.mrf.mxu0
  %v3151 = vadd.f32 %v3138, %v3150
  %v3152 = vpop.f32.mrf.mxu0
  %3153 = vdwg.mxu0
  %3154 = vmatpush.bf16.msra.mxu0 %v3079
  %3155 = vmatpush.bf16.msra.mxu0 %v3077
  %3156 = vmatpush.bf16.msra.mxu0 %v3075
  %3157 = vmatpush.bf16.msra.mxu0 %v3073
  %3158 = vmatpush.bf16.msra.mxu0 %v3071
  %3159 = vmatpush.bf16.msra.mxu0 %v3069
  %3160 = vmatpush.bf16.msra.mxu0 %v3067
  %3161 = vmatpush.bf16.msra.mxu0 %v3065
  %3162 = vmatmul.bf16.gmra.mxu0 %v2928
  %v3163 = vpop.f32.mrf.mxu0
  %v3164 = vadd.f32 %v2965, %v3163
  %v3165 = vpop.f32.mrf.mxu0
  %3166 = vdwg.mxu0
  %3167 = vmatpush.bf16.msra.mxu0 %v3095
  %3168 = vmatpush.bf16.msra.mxu0 %v3093
  %3169 = vmatpush.bf16.msra.mxu0 %v3091
  %3170 = vmatpush.bf16.msra.mxu0 %v3089
  %3171 = vmatpush.bf16.msra.mxu0 %v3087
  %3172 = vmatpush.bf16.msra.mxu0 %v3085
  %3173 = vmatpush.bf16.msra.mxu0 %v3083
  %3174 = vmatpush.bf16.msra.mxu0 %v3081
  %3175 = vmatmul.bf16.gmra.mxu0 %v2929
  %v3176 = vpop.f32.mrf.mxu0
  %v3177 = vadd.f32 %v3164, %v3176
  %v3178 = vpop.f32.mrf.mxu0
  %3179 = vdwg.mxu0
  %v3180 = vmax.f32 %v3151, 0.0
  %v3181 = vmax.f32 %v3177, 0.0
  %v3182 = vpack.c.bf16 %v3180, %v3180
  %v3183 = vpack.c.bf16 %v3181, %v3181
  %v3184 = vld [vmem:[%s11] sm:$0xff]
  %v3185 = vld [vmem:[%s11 + $0x8] sm:$0xff]
  %v3186 = vld [vmem:[%s11 + $0x10] sm:$0xff]
  %v3187 = vld [vmem:[%s11 + $0x18] sm:$0xff]
  %v3188 = vld [vmem:[%s11 + $0x20] sm:$0xff]
  %v3189 = vld [vmem:[%s11 + $0x28] sm:$0xff]
  %v3190 = vld [vmem:[%s11 + $0x30] sm:$0xff]
  %v3191 = vld [vmem:[%s11 + $0x38] sm:$0xff]
  %v3192 = vld [vmem:[%s11 + $0x40] sm:$0xff]
  %v3193 = vld [vmem:[%s11 + $0x48] sm:$0xff]
  %v3194 = vld [vmem:[%s11 + $0x50] sm:$0xff]
  %v3195 = vld [vmem:[%s11 + $0x58] sm:$0xff]
  %v3196 = vld [vmem:[%s11 + $0x60] sm:$0xff]
  %v3197 = vld [vmem:[%s11 + $0x68] sm:$0xff]
  %v3198 = vld [vmem:[%s11 + $0x70] sm:$0xff]
  %v3199 = vld [vmem:[%s11 + $0x78] sm:$0xff]
  %v3200 = vld [vmem:[%s11 + $0x80] sm:$0xff]
  %v3201 = vld [vmem:[%s11 + $0x88] sm:$0xff]
  %v3202 = vld [vmem:[%s11 + $0x90] sm:$0xff]
  %v3203 = vld [vmem:[%s11 + $0x98] sm:$0xff]
  %v3204 = vld [vmem:[%s11 + $0xa0] sm:$0xff]
  %v3205 = vld [vmem:[%s11 + $0xa8] sm:$0xff]
  %v3206 = vld [vmem:[%s11 + $0xb0] sm:$0xff]
  %v3207 = vld [vmem:[%s11 + $0xb8] sm:$0xff]
  %v3208 = vld [vmem:[%s11 + $0xc0] sm:$0xff]
  %v3209 = vld [vmem:[%s11 + $0xc8] sm:$0xff]
  %v3210 = vld [vmem:[%s11 + $0xd0] sm:$0xff]
  %v3211 = vld [vmem:[%s11 + $0xd8] sm:$0xff]
  %v3212 = vld [vmem:[%s11 + $0xe0] sm:$0xff]
  %v3213 = vld [vmem:[%s11 + $0xe8] sm:$0xff]
  %v3214 = vld [vmem:[%s11 + $0xf0] sm:$0xff]
  %v3215 = vld [vmem:[%s11 + $0xf8] sm:$0xff]
  %v3216 = vld [vmem:[%s12] sm:$0x3]
  %v3218 = vperm.slane %v3216, 0
  %v3219 = vperm.slane %v3216, 1
  %v3254 = vunpack.c.l.b16 %v3184
  %v3255 = vunpack.c.h.b16 %v3184
  %v3256 = vunpack.c.l.b16 %v3185
  %v3257 = vunpack.c.h.b16 %v3185
  %v3258 = vunpack.c.l.b16 %v3186
  %v3259 = vunpack.c.h.b16 %v3186
  %v3260 = vunpack.c.l.b16 %v3187
  %v3261 = vunpack.c.h.b16 %v3187
  %v3262 = vunpack.c.l.b16 %v3188
  %v3263 = vunpack.c.h.b16 %v3188
  %v3264 = vunpack.c.l.b16 %v3189
  %v3265 = vunpack.c.h.b16 %v3189
  %v3266 = vunpack.c.l.b16 %v3190
  %v3267 = vunpack.c.h.b16 %v3190
  %v3268 = vunpack.c.l.b16 %v3191
  %v3269 = vunpack.c.h.b16 %v3191
  %v3270 = vunpack.c.l.b16 %v3192
  %v3271 = vunpack.c.h.b16 %v3192
  %v3272 = vunpack.c.l.b16 %v3193
  %v3273 = vunpack.c.h.b16 %v3193
  %v3274 = vunpack.c.l.b16 %v3194
  %v3275 = vunpack.c.h.b16 %v3194
  %v3276 = vunpack.c.l.b16 %v3195
  %v3277 = vunpack.c.h.b16 %v3195
  %v3278 = vunpack.c.l.b16 %v3196
  %v3279 = vunpack.c.h.b16 %v3196
  %v3280 = vunpack.c.l.b16 %v3197
  %v3281 = vunpack.c.h.b16 %v3197
  %v3282 = vunpack.c.l.b16 %v3198
  %v3283 = vunpack.c.h.b16 %v3198
  %v3284 = vunpack.c.l.b16 %v3199
  %v3285 = vunpack.c.h.b16 %v3199
  %v3286 = vunpack.c.l.b16 %v3200
  %v3287 = vunpack.c.h.b16 %v3200
  %v3288 = vunpack.c.l.b16 %v3201
  %v3289 = vunpack.c.h.b16 %v3201
  %v3290 = vunpack.c.l.b16 %v3202
  %v3291 = vunpack.c.h.b16 %v3202
  %v3292 = vunpack.c.l.b16 %v3203
  %v3293 = vunpack.c.h.b16 %v3203
  %v3294 = vunpack.c.l.b16 %v3204
  %v3295 = vunpack.c.h.b16 %v3204
  %v3296 = vunpack.c.l.b16 %v3205
  %v3297 = vunpack.c.h.b16 %v3205
  %v3298 = vunpack.c.l.b16 %v3206
  %v3299 = vunpack.c.h.b16 %v3206
  %v3300 = vunpack.c.l.b16 %v3207
  %v3301 = vunpack.c.h.b16 %v3207
  %v3302 = vunpack.c.l.b16 %v3208
  %v3303 = vunpack.c.h.b16 %v3208
  %v3304 = vunpack.c.l.b16 %v3209
  %v3305 = vunpack.c.h.b16 %v3209
  %v3306 = vunpack.c.l.b16 %v3210
  %v3307 = vunpack.c.h.b16 %v3210
  %v3308 = vunpack.c.l.b16 %v3211
  %v3309 = vunpack.c.h.b16 %v3211
  %v3310 = vunpack.c.l.b16 %v3212
  %v3311 = vunpack.c.h.b16 %v3212
  %v3312 = vunpack.c.l.b16 %v3213
  %v3313 = vunpack.c.h.b16 %v3213
  %v3314 = vunpack.c.l.b16 %v3214
  %v3315 = vunpack.c.h.b16 %v3214
  %v3316 = vunpack.c.l.b16 %v3215
  %v3317 = vunpack.c.h.b16 %v3215
  %v3318 = vpack.c.b16 %v3256, %v3254
  %v3319 = vpack.c.b16 %v3257, %v3255
  %v3320 = vpack.c.b16 %v3260, %v3258
  %v3321 = vpack.c.b16 %v3261, %v3259
  %v3322 = vpack.c.b16 %v3264, %v3262
  %v3323 = vpack.c.b16 %v3265, %v3263
  %v3324 = vpack.c.b16 %v3268, %v3266
  %v3325 = vpack.c.b16 %v3269, %v3267
  %v3326 = vpack.c.b16 %v3272, %v3270
  %v3327 = vpack.c.b16 %v3273, %v3271
  %v3328 = vpack.c.b16 %v3276, %v3274
  %v3329 = vpack.c.b16 %v3277, %v3275
  %v3330 = vpack.c.b16 %v3280, %v3278
  %v3331 = vpack.c.b16 %v3281, %v3279
  %v3332 = vpack.c.b16 %v3284, %v3282
  %v3333 = vpack.c.b16 %v3285, %v3283
  %v3334 = vpack.c.b16 %v3288, %v3286
  %v3335 = vpack.c.b16 %v3289, %v3287
  %v3336 = vpack.c.b16 %v3292, %v3290
  %v3337 = vpack.c.b16 %v3293, %v3291
  %v3338 = vpack.c.b16 %v3296, %v3294
  %v3339 = vpack.c.b16 %v3297, %v3295
  %v3340 = vpack.c.b16 %v3300, %v3298
  %v3341 = vpack.c.b16 %v3301, %v3299
  %v3342 = vpack.c.b16 %v3304, %v3302
  %v3343 = vpack.c.b16 %v3305, %v3303
  %v3344 = vpack.c.b16 %v3308, %v3306
  %v3345 = vpack.c.b16 %v3309, %v3307
  %v3346 = vpack.c.b16 %v3312, %v3310
  %v3347 = vpack.c.b16 %v3313, %v3311
  %v3348 = vpack.c.b16 %v3316, %v3314
  %v3349 = vpack.c.b16 %v3317, %v3315
  %3382 = vmatpush.bf16.msra.mxu0 %v3332
  %3383 = vmatpush.bf16.msra.mxu0 %v3330
  %3384 = vmatpush.bf16.msra.mxu0 %v3328
  %3385 = vmatpush.bf16.msra.mxu0 %v3326
  %3386 = vmatpush.bf16.msra.mxu0 %v3324
  %3387 = vmatpush.bf16.msra.mxu0 %v3322
  %3388 = vmatpush.bf16.msra.mxu0 %v3320
  %3389 = vmatpush.bf16.msra.mxu0 %v3318
  %3390 = vmatmul.bf16.gmra.mxu0 %v3182
  %v3391 = vpop.f32.mrf.mxu0
  %v3392 = vadd.f32 %v3218, %v3391
  %v3393 = vpop.f32.mrf.mxu0
  %3394 = vdwg.mxu0
  %3395 = vmatpush.bf16.msra.mxu0 %v3348
  %3396 = vmatpush.bf16.msra.mxu0 %v3346
  %3397 = vmatpush.bf16.msra.mxu0 %v3344
  %3398 = vmatpush.bf16.msra.mxu0 %v3342
  %3399 = vmatpush.bf16.msra.mxu0 %v3340
  %3400 = vmatpush.bf16.msra.mxu0 %v3338
  %3401 = vmatpush.bf16.msra.mxu0 %v3336
  %3402 = vmatpush.bf16.msra.mxu0 %v3334
  %3403 = vmatmul.bf16.gmra.mxu0 %v3183
  %v3404 = vpop.f32.mrf.mxu0
  %v3405 = vadd.f32 %v3392, %v3404
  %v3406 = vpop.f32.mrf.mxu0
  %3407 = vdwg.mxu0
  %3408 = vmatpush.bf16.msra.mxu0 %v3333
  %3409 = vmatpush.bf16.msra.mxu0 %v3331
  %3410 = vmatpush.bf16.msra.mxu0 %v3329
  %3411 = vmatpush.bf16.msra.mxu0 %v3327
  %3412 = vmatpush.bf16.msra.mxu0 %v3325
  %3413 = vmatpush.bf16.msra.mxu0 %v3323
  %3414 = vmatpush.bf16.msra.mxu0 %v3321
  %3415 = vmatpush.bf16.msra.mxu0 %v3319
  %3416 = vmatmul.bf16.gmra.mxu0 %v3182
  %v3417 = vpop.f32.mrf.mxu0
  %v3418 = vadd.f32 %v3219, %v3417
  %v3419 = vpop.f32.mrf.mxu0
  %3420 = vdwg.mxu0
  %3421 = vmatpush.bf16.msra.mxu0 %v3349
  %3422 = vmatpush.bf16.msra.mxu0 %v3347
  %3423 = vmatpush.bf16.msra.mxu0 %v3345
  %3424 = vmatpush.bf16.msra.mxu0 %v3343
  %3425 = vmatpush.bf16.msra.mxu0 %v3341
  %3426 = vmatpush.bf16.msra.mxu0 %v3339
  %3427 = vmatpush.bf16.msra.mxu0 %v3337
  %3428 = vmatpush.bf16.msra.mxu0 %v3335
  %3429 = vmatmul.bf16.gmra.mxu0 %v3183
  %v3430 = vpop.f32.mrf.mxu0
  %v3431 = vadd.f32 %v3418, %v3430
  %v3432 = vpop.f32.mrf.mxu0
  %3433 = vdwg.mxu0
  %v3434 = vld [vmem:[%s13] sm:$0xff]
  %v3435 = vld [vmem:[%s13 + $0x8] sm:$0xff]
  %v3436 = vld [vmem:[%s13 + $0x10] sm:$0xff]
  %v3437 = vld [vmem:[%s13 + $0x18] sm:$0xff]
  %v3438 = vld [vmem:[%s13 + $0x20] sm:$0xff]
  %v3439 = vld [vmem:[%s13 + $0x28] sm:$0xff]
  %v3440 = vld [vmem:[%s13 + $0x30] sm:$0xff]
  %v3441 = vld [vmem:[%s13 + $0x38] sm:$0xff]
  %v3442 = vld [vmem:[%s13 + $0x40] sm:$0xff]
  %v3443 = vld [vmem:[%s13 + $0x48] sm:$0xff]
  %v3444 = vld [vmem:[%s13 + $0x50] sm:$0xff]
  %v3445 = vld [vmem:[%s13 + $0x58] sm:$0xff]
  %v3446 = vld [vmem:[%s13 + $0x60] sm:$0xff]
  %v3447 = vld [vmem:[%s13 + $0x68] sm:$0xff]
  %v3448 = vld [vmem:[%s13 + $0x70] sm:$0xff]
  %v3449 = vld [vmem:[%s13 + $0x78] sm:$0xff]
  %v3450 = vld [vmem:[%s13 + $0x80] sm:$0xff]
  %v3451 = vld [vmem:[%s13 + $0x88] sm:$0xff]
  %v3452 = vld [vmem:[%s13 + $0x90] sm:$0xff]
  %v3453 = vld [vmem:[%s13 + $0x98] sm:$0xff]
  %v3454 = vld [vmem:[%s13 + $0xa0] sm:$0xff]
  %v3455 = vld [vmem:[%s13 + $0xa8] sm:$0xff]
  %v3456 = vld [vmem:[%s13 + $0xb0] sm:$0xff]
  %v3457 = vld [vmem:[%s13 + $0xb8] sm:$0xff]
  %v3458 = vld [vmem:[%s13 + $0xc0] sm:$0xff]
  %v3459 = vld [vmem:[%s13 + $0xc8] sm:$0xff]
  %v3460 = vld [vmem:[%s13 + $0xd0] sm:$0xff]
  %v3461 = vld [vmem:[%s13 + $0xd8] sm:$0xff]
  %v3462 = vld [vmem:[%s13 + $0xe0] sm:$0xff]
  %v3463 = vld [vmem:[%s13 + $0xe8] sm:$0xff]
  %v3464 = vld [vmem:[%s13 + $0xf0] sm:$0xff]
  %v3465 = vld [vmem:[%s13 + $0xf8] sm:$0xff]
  %v3466 = vpack.c.bf16 %v3405, %v3405
  %v3467 = vpack.c.bf16 %v3431, %v3431
  %v3468 = vld [vmem:[%s14] sm:$0xff]
  %v3469 = vld [vmem:[%s14 + $0x8] sm:$0xff]
  %v3470 = vld [vmem:[%s14 + $0x10] sm:$0xff]
  %v3471 = vld [vmem:[%s14 + $0x18] sm:$0xff]
  %v3472 = vld [vmem:[%s14 + $0x20] sm:$0xff]
  %v3473 = vld [vmem:[%s14 + $0x28] sm:$0xff]
  %v3474 = vld [vmem:[%s14 + $0x30] sm:$0xff]
  %v3475 = vld [vmem:[%s14 + $0x38] sm:$0xff]
  %v3476 = vld [vmem:[%s14 + $0x40] sm:$0xff]
  %v3477 = vld [vmem:[%s14 + $0x48] sm:$0xff]
  %v3478 = vld [vmem:[%s14 + $0x50] sm:$0xff]
  %v3479 = vld [vmem:[%s14 + $0x58] sm:$0xff]
  %v3480 = vld [vmem:[%s14 + $0x60] sm:$0xff]
  %v3481 = vld [vmem:[%s14 + $0x68] sm:$0xff]
  %v3482 = vld [vmem:[%s14 + $0x70] sm:$0xff]
  %v3483 = vld [vmem:[%s14 + $0x78] sm:$0xff]
  %v3484 = vld [vmem:[%s14 + $0x80] sm:$0xff]
  %v3485 = vld [vmem:[%s14 + $0x88] sm:$0xff]
  %v3486 = vld [vmem:[%s14 + $0x90] sm:$0xff]
  %v3487 = vld [vmem:[%s14 + $0x98] sm:$0xff]
  %v3488 = vld [vmem:[%s14 + $0xa0] sm:$0xff]
  %v3489 = vld [vmem:[%s14 + $0xa8] sm:$0xff]
  %v3490 = vld [vmem:[%s14 + $0xb0] sm:$0xff]
  %v3491 = vld [vmem:[%s14 + $0xb8] sm:$0xff]
  %v3492 = vld [vmem:[%s14 + $0xc0] sm:$0xff]
  %v3493 = vld [vmem:[%s14 + $0xc8] sm:$0xff]
  %v3494 = vld [vmem:[%s14 + $0xd0] sm:$0xff]
  %v3495 = vld [vmem:[%s14 + $0xd8] sm:$0xff]
  %v3496 = vld [vmem:[%s14 + $0xe0] sm:$0xff]
  %v3497 = vld [vmem:[%s14 + $0xe8] sm:$0xff]
  %v3498 = vld [vmem:[%s14 + $0xf0] sm:$0xff]
  %v3499 = vld [vmem:[%s14 + $0xf8] sm:$0xff]
  %v3500 = vld [vmem:[%s14 + $0x100] sm:$0xff]
  %v3501 = vld [vmem:[%s14 + $0x108] sm:$0xff]
  %v3502 = vld [vmem:[%s14 + $0x110] sm:$0xff]
  %v3503 = vld [vmem:[%s14 + $0x118] sm:$0xff]
  %v3504 = vld [vmem:[%s14 + $0x120] sm:$0xff]
  %v3505 = vld [vmem:[%s14 + $0x128] sm:$0xff]
  %v3506 = vld [vmem:[%s14 + $0x130] sm:$0xff]
  %v3507 = vld [vmem:[%s14 + $0x138] sm:$0xff]
  %v3508 = vld [vmem:[%s14 + $0x140] sm:$0xff]
  %v3509 = vld [vmem:[%s14 + $0x148] sm:$0xff]
  %v3510 = vld [vmem:[%s14 + $0x150] sm:$0xff]
  %v3511 = vld [vmem:[%s14 + $0x158] sm:$0xff]
  %v3512 = vld [vmem:[%s14 + $0x160] sm:$0xff]
  %v3513 = vld [vmem:[%s14 + $0x168] sm:$0xff]
  %v3514 = vld [vmem:[%s14 + $0x170] sm:$0xff]
  %v3515 = vld [vmem:[%s14 + $0x178] sm:$0xff]
  %v3516 = vld [vmem:[%s14 + $0x180] sm:$0xff]
  %v3517 = vld [vmem:[%s14 + $0x188] sm:$0xff]
  %v3518 = vld [vmem:[%s14 + $0x190] sm:$0xff]
  %v3519 = vld [vmem:[%s14 + $0x198] sm:$0xff]
  %v3520 = vld [vmem:[%s14 + $0x1a0] sm:$0xff]
  %v3521 = vld [vmem:[%s14 + $0x1a8] sm:$0xff]
  %v3522 = vld [vmem:[%s14 + $0x1b0] sm:$0xff]
  %v3523 = vld [vmem:[%s14 + $0x1b8] sm:$0xff]
  %v3524 = vld [vmem:[%s14 + $0x1c0] sm:$0xff]
  %v3525 = vld [vmem:[%s14 + $0x1c8] sm:$0xff]
  %v3526 = vld [vmem:[%s14 + $0x1d0] sm:$0xff]
  %v3527 = vld [vmem:[%s14 + $0x1d8] sm:$0xff]
  %v3528 = vld [vmem:[%s14 + $0x1e0] sm:$0xff]
  %v3529 = vld [vmem:[%s14 + $0x1e8] sm:$0xff]
  %v3530 = vld [vmem:[%s14 + $0x1f0] sm:$0xff]
  %v3531 = vld [vmem:[%s14 + $0x1f8] sm:$0xff]
  %v3596 = vunpack.c.l.b16 %v3468
  %v3597 = vunpack.c.h.b16 %v3468
  %v3598 = vunpack.c.l.b16 %v3469
  %v3599 = vunpack.c.h.b16 %v3469
  %v3600 = vunpack.c.l.b16 %v3470
  %v3601 = vunpack.c.h.b16 %v3470
  %v3602 = vunpack.c.l.b16 %v3471
  %v3603 = vunpack.c.h.b16 %v3471
  %v3604 = vunpack.c.l.b16 %v3472
  %v3605 = vunpack.c.h.b16 %v3472
  %v3606 = vunpack.c.l.b16 %v3473
  %v3607 = vunpack.c.h.b16 %v3473
  %v3608 = vunpack.c.l.b16 %v3474
  %v3609 = vunpack.c.h.b16 %v3474
  %v3610 = vunpack.c.l.b16 %v3475
  %v3611 = vunpack.c.h.b16 %v3475
  %v3612 = vunpack.c.l.b16 %v3476
  %v3613 = vunpack.c.h.b16 %v3476
  %v3614 = vunpack.c.l.b16 %v3477
  %v3615 = vunpack.c.h.b16 %v3477
  %v3616 = vunpack.c.l.b16 %v3478
  %v3617 = vunpack.c.h.b16 %v3478
  %v3618 = vunpack.c.l.b16 %v3479
  %v3619 = vunpack.c.h.b16 %v3479
  %v3620 = vunpack.c.l.b16 %v3480
  %v3621 = vunpack.c.h.b16 %v3480
  %v3622 = vunpack.c.l.b16 %v3481
  %v3623 = vunpack.c.h.b16 %v3481
  %v3624 = vunpack.c.l.b16 %v3482
  %v3625 = vunpack.c.h.b16 %v3482
  %v3626 = vunpack.c.l.b16 %v3483
  %v3627 = vunpack.c.h.b16 %v3483
  %v3628 = vunpack.c.l.b16 %v3484
  %v3629 = vunpack.c.h.b16 %v3484
  %v3630 = vunpack.c.l.b16 %v3485
  %v3631 = vunpack.c.h.b16 %v3485
  %v3632 = vunpack.c.l.b16 %v3486
  %v3633 = vunpack.c.h.b16 %v3486
  %v3634 = vunpack.c.l.b16 %v3487
  %v3635 = vunpack.c.h.b16 %v3487
  %v3636 = vunpack.c.l.b16 %v3488
  %v3637 = vunpack.c.h.b16 %v3488
  %v3638 = vunpack.c.l.b16 %v3489
  %v3639 = vunpack.c.h.b16 %v3489
  %v3640 = vunpack.c.l.b16 %v3490
  %v3641 = vunpack.c.h.b16 %v3490
  %v3642 = vunpack.c.l.b16 %v3491
  %v3643 = vunpack.c.h.b16 %v3491
  %v3644 = vunpack.c.l.b16 %v3492
  %v3645 = vunpack.c.h.b16 %v3492
  %v3646 = vunpack.c.l.b16 %v3493
  %v3647 = vunpack.c.h.b16 %v3493
  %v3648 = vunpack.c.l.b16 %v3494
  %v3649 = vunpack.c.h.b16 %v3494
  %v3650 = vunpack.c.l.b16 %v3495
  %v3651 = vunpack.c.h.b16 %v3495
  %v3652 = vunpack.c.l.b16 %v3496
  %v3653 = vunpack.c.h.b16 %v3496
  %v3654 = vunpack.c.l.b16 %v3497
  %v3655 = vunpack.c.h.b16 %v3497
  %v3656 = vunpack.c.l.b16 %v3498
  %v3657 = vunpack.c.h.b16 %v3498
  %v3658 = vunpack.c.l.b16 %v3499
  %v3659 = vunpack.c.h.b16 %v3499
  %v3660 = vunpack.c.l.b16 %v3500
  %v3661 = vunpack.c.h.b16 %v3500
  %v3662 = vunpack.c.l.b16 %v3501
  %v3663 = vunpack.c.h.b16 %v3501
  %v3664 = vunpack.c.l.b16 %v3502
  %v3665 = vunpack.c.h.b16 %v3502
  %v3666 = vunpack.c.l.b16 %v3503
  %v3667 = vunpack.c.h.b16 %v3503
  %v3668 = vunpack.c.l.b16 %v3504
  %v3669 = vunpack.c.h.b16 %v3504
  %v3670 = vunpack.c.l.b16 %v3505
  %v3671 = vunpack.c.h.b16 %v3505
  %v3672 = vunpack.c.l.b16 %v3506
  %v3673 = vunpack.c.h.b16 %v3506
  %v3674 = vunpack.c.l.b16 %v3507
  %v3675 = vunpack.c.h.b16 %v3507
  %v3676 = vunpack.c.l.b16 %v3508
  %v3677 = vunpack.c.h.b16 %v3508
  %v3678 = vunpack.c.l.b16 %v3509
  %v3679 = vunpack.c.h.b16 %v3509
  %v3680 = vunpack.c.l.b16 %v3510
  %v3681 = vunpack.c.h.b16 %v3510
  %v3682 = vunpack.c.l.b16 %v3511
  %v3683 = vunpack.c.h.b16 %v3511
  %v3684 = vunpack.c.l.b16 %v3512
  %v3685 = vunpack.c.h.b16 %v3512
  %v3686 = vunpack.c.l.b16 %v3513
  %v3687 = vunpack.c.h.b16 %v3513
  %v3688 = vunpack.c.l.b16 %v3514
  %v3689 = vunpack.c.h.b16 %v3514
  %v3690 = vunpack.c.l.b16 %v3515
  %v3691 = vunpack.c.h.b16 %v3515
  %v3692 = vunpack.c.l.b16 %v3516
  %v3693 = vunpack.c.h.b16 %v3516
  %v3694 = vunpack.c.l.b16 %v3517
  %v3695 = vunpack.c.h.b16 %v3517
  %v3696 = vunpack.c.l.b16 %v3518
  %v3697 = vunpack.c.h.b16 %v3518
  %v3698 = vunpack.c.l.b16 %v3519
  %v3699 = vunpack.c.h.b16 %v3519
  %v3700 = vunpack.c.l.b16 %v3520
  %v3701 = vunpack.c.h.b16 %v3520
  %v3702 = vunpack.c.l.b16 %v3521
  %v3703 = vunpack.c.h.b16 %v3521
  %v3704 = vunpack.c.l.b16 %v3522
  %v3705 = vunpack.c.h.b16 %v3522
  %v3706 = vunpack.c.l.b16 %v3523
  %v3707 = vunpack.c.h.b16 %v3523
  %v3708 = vunpack.c.l.b16 %v3524
  %v3709 = vunpack.c.h.b16 %v3524
  %v3710 = vunpack.c.l.b16 %v3525
  %v3711 = vunpack.c.h.b16 %v3525
  %v3712 = vunpack.c.l.b16 %v3526
  %v3713 = vunpack.c.h.b16 %v3526
  %v3714 = vunpack.c.l.b16 %v3527
  %v3715 = vunpack.c.h.b16 %v3527
  %v3716 = vunpack.c.l.b16 %v3528
  %v3717 = vunpack.c.h.b16 %v3528
  %v3718 = vunpack.c.l.b16 %v3529
  %v3719 = vunpack.c.h.b16 %v3529
  %v3720 = vunpack.c.l.b16 %v3530
  %v3721 = vunpack.c.h.b16 %v3530
  %v3722 = vunpack.c.l.b16 %v3531
  %v3723 = vunpack.c.h.b16 %v3531
  %v3724 = vpack.c.b16 %v3600, %v3596
  %v3725 = vpack.c.b16 %v3601, %v3597
  %v3726 = vpack.c.b16 %v3602, %v3598
  %v3727 = vpack.c.b16 %v3603, %v3599
  %v3728 = vpack.c.b16 %v3608, %v3604
  %v3729 = vpack.c.b16 %v3609, %v3605
  %v3730 = vpack.c.b16 %v3610, %v3606
  %v3731 = vpack.c.b16 %v3611, %v3607
  %v3732 = vpack.c.b16 %v3616, %v3612
  %v3733 = vpack.c.b16 %v3617, %v3613
  %v3734 = vpack.c.b16 %v3618, %v3614
  %v3735 = vpack.c.b16 %v3619, %v3615
  %v3736 = vpack.c.b16 %v3624, %v3620
  %v3737 = vpack.c.b16 %v3625, %v3621
  %v3738 = vpack.c.b16 %v3626, %v3622
  %v3739 = vpack.c.b16 %v3627, %v3623
  %v3740 = vpack.c.b16 %v3632, %v3628
  %v3741 = vpack.c.b16 %v3633, %v3629
  %v3742 = vpack.c.b16 %v3634, %v3630
  %v3743 = vpack.c.b16 %v3635, %v3631
  %v3744 = vpack.c.b16 %v3640, %v3636
  %v3745 = vpack.c.b16 %v3641, %v3637
  %v3746 = vpack.c.b16 %v3642, %v3638
  %v3747 = vpack.c.b16 %v3643, %v3639
  %v3748 = vpack.c.b16 %v3648, %v3644
  %v3749 = vpack.c.b16 %v3649, %v3645
  %v3750 = vpack.c.b16 %v3650, %v3646
  %v3751 = vpack.c.b16 %v3651, %v3647
  %v3752 = vpack.c.b16 %v3656, %v3652
  %v3753 = vpack.c.b16 %v3657, %v3653
  %v3754 = vpack.c.b16 %v3658, %v3654
  %v3755 = vpack.c.b16 %v3659, %v3655
  %v3756 = vpack.c.b16 %v3664, %v3660
  %v3757 = vpack.c.b16 %v3665, %v3661
  %v3758 = vpack.c.b16 %v3666, %v3662
  %v3759 = vpack.c.b16 %v3667, %v3663
  %v3760 = vpack.c.b16 %v3672, %v3668
  %v3761 = vpack.c.b16 %v3673, %v3669
  %v3762 = vpack.c.b16 %v3674, %v3670
  %v3763 = vpack.c.b16 %v3675, %v3671
  %v3764 = vpack.c.b16 %v3680, %v3676
  %v3765 = vpack.c.b16 %v3681, %v3677
  %v3766 = vpack.c.b16 %v3682, %v3678
  %v3767 = vpack.c.b16 %v3683, %v3679
  %v3768 = vpack.c.b16 %v3688, %v3684
  %v3769 = vpack.c.b16 %v3689, %v3685
  %v3770 = vpack.c.b16 %v3690, %v3686
  %v3771 = vpack.c.b16 %v3691, %v3687
  %v3772 = vpack.c.b16 %v3696, %v3692
  %v3773 = vpack.c.b16 %v3697, %v3693
  %v3774 = vpack.c.b16 %v3698, %v3694
  %v3775 = vpack.c.b16 %v3699, %v3695
  %v3776 = vpack.c.b16 %v3704, %v3700
  %v3777 = vpack.c.b16 %v3705, %v3701
  %v3778 = vpack.c.b16 %v3706, %v3702
  %v3779 = vpack.c.b16 %v3707, %v3703
  %v3780 = vpack.c.b16 %v3712, %v3708
  %v3781 = vpack.c.b16 %v3713, %v3709
  %v3782 = vpack.c.b16 %v3714, %v3710
  %v3783 = vpack.c.b16 %v3715, %v3711
  %v3784 = vpack.c.b16 %v3720, %v3716
  %v3785 = vpack.c.b16 %v3721, %v3717
  %v3786 = vpack.c.b16 %v3722, %v3718
  %v3787 = vpack.c.b16 %v3723, %v3719
  %3852 = vmatpush.bf16.msra.mxu0 %v3752
  %3853 = vmatpush.bf16.msra.mxu0 %v3748
  %3854 = vmatpush.bf16.msra.mxu0 %v3744
  %3855 = vmatpush.bf16.msra.mxu0 %v3740
  %3856 = vmatpush.bf16.msra.mxu0 %v3736
  %3857 = vmatpush.bf16.msra.mxu0 %v3732
  %3858 = vmatpush.bf16.msra.mxu0 %v3728
  %3859 = vmatpush.bf16.msra.mxu0 %v3724
  %3860 = vmatmul.bf16.gmra.mxu0 %v3466
  %v3861 = vpop.f32.mrf.mxu0
  %v3862 = vadd.f32 0.0, %v3861
  %v3863 = vpop.f32.mrf.mxu0
  %3864 = vdwg.mxu0
  %3865 = vmatpush.bf16.msra.mxu0 %v3784
  %3866 = vmatpush.bf16.msra.mxu0 %v3780
  %3867 = vmatpush.bf16.msra.mxu0 %v3776
  %3868 = vmatpush.bf16.msra.mxu0 %v3772
  %3869 = vmatpush.bf16.msra.mxu0 %v3768
  %3870 = vmatpush.bf16.msra.mxu0 %v3764
  %3871 = vmatpush.bf16.msra.mxu0 %v3760
  %3872 = vmatpush.bf16.msra.mxu0 %v3756
  %3873 = vmatmul.bf16.gmra.mxu0 %v3467
  %v3874 = vpop.f32.mrf.mxu0
  %v3875 = vadd.f32 %v3862, %v3874
  %v3876 = vpop.f32.mrf.mxu0
  %3877 = vdwg.mxu0
  %3878 = vmatpush.bf16.msra.mxu0 %v3753
  %3879 = vmatpush.bf16.msra.mxu0 %v3749
  %3880 = vmatpush.bf16.msra.mxu0 %v3745
  %3881 = vmatpush.bf16.msra.mxu0 %v3741
  %3882 = vmatpush.bf16.msra.mxu0 %v3737
  %3883 = vmatpush.bf16.msra.mxu0 %v3733
  %3884 = vmatpush.bf16.msra.mxu0 %v3729
  %3885 = vmatpush.bf16.msra.mxu0 %v3725
  %3886 = vmatmul.bf16.gmra.mxu0 %v3466
  %v3887 = vpop.f32.mrf.mxu0
  %v3888 = vadd.f32 0.0, %v3887
  %v3889 = vpop.f32.mrf.mxu0
  %3890 = vdwg.mxu0
  %3891 = vmatpush.bf16.msra.mxu0 %v3785
  %3892 = vmatpush.bf16.msra.mxu0 %v3781
  %3893 = vmatpush.bf16.msra.mxu0 %v3777
  %3894 = vmatpush.bf16.msra.mxu0 %v3773
  %3895 = vmatpush.bf16.msra.mxu0 %v3769
  %3896 = vmatpush.bf16.msra.mxu0 %v3765
  %3897 = vmatpush.bf16.msra.mxu0 %v3761
  %3898 = vmatpush.bf16.msra.mxu0 %v3757
  %3899 = vmatmul.bf16.gmra.mxu0 %v3467
  %v3900 = vpop.f32.mrf.mxu0
  %v3901 = vadd.f32 %v3888, %v3900
  %v3902 = vpop.f32.mrf.mxu0
  %3903 = vdwg.mxu0
  %3904 = vmatpush.bf16.msra.mxu0 %v3754
  %3905 = vmatpush.bf16.msra.mxu0 %v3750
  %3906 = vmatpush.bf16.msra.mxu0 %v3746
  %3907 = vmatpush.bf16.msra.mxu0 %v3742
  %3908 = vmatpush.bf16.msra.mxu0 %v3738
  %3909 = vmatpush.bf16.msra.mxu0 %v3734
  %3910 = vmatpush.bf16.msra.mxu0 %v3730
  %3911 = vmatpush.bf16.msra.mxu0 %v3726
  %3912 = vmatmul.bf16.gmra.mxu0 %v3466
  %v3913 = vpop.f32.mrf.mxu0
  %v3914 = vadd.f32 0.0, %v3913
  %v3915 = vpop.f32.mrf.mxu0
  %3916 = vdwg.mxu0
  %3917 = vmatpush.bf16.msra.mxu0 %v3786
  %3918 = vmatpush.bf16.msra.mxu0 %v3782
  %3919 = vmatpush.bf16.msra.mxu0 %v3778
  %3920 = vmatpush.bf16.msra.mxu0 %v3774
  %3921 = vmatpush.bf16.msra.mxu0 %v3770
  %3922 = vmatpush.bf16.msra.mxu0 %v3766
  %3923 = vmatpush.bf16.msra.mxu0 %v3762
  %3924 = vmatpush.bf16.msra.mxu0 %v3758
  %3925 = vmatmul.bf16.gmra.mxu0 %v3467
  %v3926 = vpop.f32.mrf.mxu0
  %v3927 = vadd.f32 %v3914, %v3926
  %v3928 = vpop.f32.mrf.mxu0
  %3929 = vdwg.mxu0
  %3930 = vmatpush.bf16.msra.mxu0 %v3755
  %3931 = vmatpush.bf16.msra.mxu0 %v3751
  %3932 = vmatpush.bf16.msra.mxu0 %v3747
  %3933 = vmatpush.bf16.msra.mxu0 %v3743
  %3934 = vmatpush.bf16.msra.mxu0 %v3739
  %3935 = vmatpush.bf16.msra.mxu0 %v3735
  %3936 = vmatpush.bf16.msra.mxu0 %v3731
  %3937 = vmatpush.bf16.msra.mxu0 %v3727
  %3938 = vmatmul.bf16.gmra.mxu0 %v3466
  %v3939 = vpop.f32.mrf.mxu0
  %v3940 = vadd.f32 0.0, %v3939
  %v3941 = vpop.f32.mrf.mxu0
  %3942 = vdwg.mxu0
  %3943 = vmatpush.bf16.msra.mxu0 %v3787
  %3944 = vmatpush.bf16.msra.mxu0 %v3783
  %3945 = vmatpush.bf16.msra.mxu0 %v3779
  %3946 = vmatpush.bf16.msra.mxu0 %v3775
  %3947 = vmatpush.bf16.msra.mxu0 %v3771
  %3948 = vmatpush.bf16.msra.mxu0 %v3767
  %3949 = vmatpush.bf16.msra.mxu0 %v3763
  %3950 = vmatpush.bf16.msra.mxu0 %v3759
  %3951 = vmatmul.bf16.gmra.mxu0 %v3467
  %v3952 = vpop.f32.mrf.mxu0
  %v3953 = vadd.f32 %v3940, %v3952
  %v3954 = vpop.f32.mrf.mxu0
  %3955 = vdwg.mxu0
  %v3988 = vunpack.c.l.b16 %v3434
  %v3989 = vunpack.c.h.b16 %v3434
  %v3990 = vunpack.c.l.b16 %v3435
  %v3991 = vunpack.c.h.b16 %v3435
  %v3992 = vunpack.c.l.b16 %v3436
  %v3993 = vunpack.c.h.b16 %v3436
  %v3994 = vunpack.c.l.b16 %v3437
  %v3995 = vunpack.c.h.b16 %v3437
  %v3996 = vunpack.c.l.b16 %v3438
  %v3997 = vunpack.c.h.b16 %v3438
  %v3998 = vunpack.c.l.b16 %v3439
  %v3999 = vunpack.c.h.b16 %v3439
  %v4000 = vunpack.c.l.b16 %v3440
  %v4001 = vunpack.c.h.b16 %v3440
  %v4002 = vunpack.c.l.b16 %v3441
  %v4003 = vunpack.c.h.b16 %v3441
  %v4004 = vunpack.c.l.b16 %v3442
  %v4005 = vunpack.c.h.b16 %v3442
  %v4006 = vunpack.c.l.b16 %v3443
  %v4007 = vunpack.c.h.b16 %v3443
  %v4008 = vunpack.c.l.b16 %v3444
  %v4009 = vunpack.c.h.b16 %v3444
  %v4010 = vunpack.c.l.b16 %v3445
  %v4011 = vunpack.c.h.b16 %v3445
  %v4012 = vunpack.c.l.b16 %v3446
  %v4013 = vunpack.c.h.b16 %v3446
  %v4014 = vunpack.c.l.b16 %v3447
  %v4015 = vunpack.c.h.b16 %v3447
  %v4016 = vunpack.c.l.b16 %v3448
  %v4017 = vunpack.c.h.b16 %v3448
  %v4018 = vunpack.c.l.b16 %v3449
  %v4019 = vunpack.c.h.b16 %v3449
  %v4020 = vunpack.c.l.b16 %v3450
  %v4021 = vunpack.c.h.b16 %v3450
  %v4022 = vunpack.c.l.b16 %v3451
  %v4023 = vunpack.c.h.b16 %v3451
  %v4024 = vunpack.c.l.b16 %v3452
  %v4025 = vunpack.c.h.b16 %v3452
  %v4026 = vunpack.c.l.b16 %v3453
  %v4027 = vunpack.c.h.b16 %v3453
  %v4028 = vunpack.c.l.b16 %v3454
  %v4029 = vunpack.c.h.b16 %v3454
  %v4030 = vunpack.c.l.b16 %v3455
  %v4031 = vunpack.c.h.b16 %v3455
  %v4032 = vunpack.c.l.b16 %v3456
  %v4033 = vunpack.c.h.b16 %v3456
  %v4034 = vunpack.c.l.b16 %v3457
  %v4035 = vunpack.c.h.b16 %v3457
  %v4036 = vunpack.c.l.b16 %v3458
  %v4037 = vunpack.c.h.b16 %v3458
  %v4038 = vunpack.c.l.b16 %v3459
  %v4039 = vunpack.c.h.b16 %v3459
  %v4040 = vunpack.c.l.b16 %v3460
  %v4041 = vunpack.c.h.b16 %v3460
  %v4042 = vunpack.c.l.b16 %v3461
  %v4043 = vunpack.c.h.b16 %v3461
  %v4044 = vunpack.c.l.b16 %v3462
  %v4045 = vunpack.c.h.b16 %v3462
  %v4046 = vunpack.c.l.b16 %v3463
  %v4047 = vunpack.c.h.b16 %v3463
  %v4048 = vunpack.c.l.b16 %v3464
  %v4049 = vunpack.c.h.b16 %v3464
  %v4050 = vunpack.c.l.b16 %v3465
  %v4051 = vunpack.c.h.b16 %v3465
  %v4052 = vpack.c.b16 %v3992, %v3988
  %v4053 = vpack.c.b16 %v3993, %v3989
  %v4054 = vpack.c.b16 %v3994, %v3990
  %v4055 = vpack.c.b16 %v3995, %v3991
  %v4056 = vpack.c.b16 %v4000, %v3996
  %v4057 = vpack.c.b16 %v4001, %v3997
  %v4058 = vpack.c.b16 %v4002, %v3998
  %v4059 = vpack.c.b16 %v4003, %v3999
  %v4060 = vpack.c.b16 %v4008, %v4004
  %v4061 = vpack.c.b16 %v4009, %v4005
  %v4062 = vpack.c.b16 %v4010, %v4006
  %v4063 = vpack.c.b16 %v4011, %v4007
  %v4064 = vpack.c.b16 %v4016, %v4012
  %v4065 = vpack.c.b16 %v4017, %v4013
  %v4066 = vpack.c.b16 %v4018, %v4014
  %v4067 = vpack.c.b16 %v4019, %v4015
  %v4068 = vpack.c.b16 %v4024, %v4020
  %v4069 = vpack.c.b16 %v4025, %v4021
  %v4070 = vpack.c.b16 %v4026, %v4022
  %v4071 = vpack.c.b16 %v4027, %v4023
  %v4072 = vpack.c.b16 %v4032, %v4028
  %v4073 = vpack.c.b16 %v4033, %v4029
  %v4074 = vpack.c.b16 %v4034, %v4030
  %v4075 = vpack.c.b16 %v4035, %v4031
  %v4076 = vpack.c.b16 %v4040, %v4036
  %v4077 = vpack.c.b16 %v4041, %v4037
  %v4078 = vpack.c.b16 %v4042, %v4038
  %v4079 = vpack.c.b16 %v4043, %v4039
  %v4080 = vpack.c.b16 %v4048, %v4044
  %v4081 = vpack.c.b16 %v4049, %v4045
  %v4082 = vpack.c.b16 %v4050, %v4046
  %v4083 = vpack.c.b16 %v4051, %v4047
  %4116 = vmatpush.bf16.msra.mxu0 %v4080
  %4117 = vmatpush.bf16.msra.mxu0 %v4076
  %4118 = vmatpush.bf16.msra.mxu0 %v4072
  %4119 = vmatpush.bf16.msra.mxu0 %v4068
  %4120 = vmatpush.bf16.msra.mxu0 %v4064
  %4121 = vmatpush.bf16.msra.mxu0 %v4060
  %4122 = vmatpush.bf16.msra.mxu0 %v4056
  %4123 = vmatpush.bf16.msra.mxu0 %v4052
  %4124 = vmatmul.bf16.gmra.mxu0 %v2556
  %v4125 = vpop.f32.mrf.mxu0
  %v4126 = vadd.f32 %v3875, %v4125
  %v4127 = vpop.f32.mrf.mxu0
  %4128 = vdwg.mxu0
  %4129 = vmatpush.bf16.msra.mxu0 %v4081
  %4130 = vmatpush.bf16.msra.mxu0 %v4077
  %4131 = vmatpush.bf16.msra.mxu0 %v4073
  %4132 = vmatpush.bf16.msra.mxu0 %v4069
  %4133 = vmatpush.bf16.msra.mxu0 %v4065
  %4134 = vmatpush.bf16.msra.mxu0 %v4061
  %4135 = vmatpush.bf16.msra.mxu0 %v4057
  %4136 = vmatpush.bf16.msra.mxu0 %v4053
  %4137 = vmatmul.bf16.gmra.mxu0 %v2556
  %v4138 = vpop.f32.mrf.mxu0
  %v4139 = vadd.f32 %v3901, %v4138
  %v4140 = vpop.f32.mrf.mxu0
  %4141 = vdwg.mxu0
  %4142 = vmatpush.bf16.msra.mxu0 %v4082
  %4143 = vmatpush.bf16.msra.mxu0 %v4078
  %4144 = vmatpush.bf16.msra.mxu0 %v4074
  %4145 = vmatpush.bf16.msra.mxu0 %v4070
  %4146 = vmatpush.bf16.msra.mxu0 %v4066
  %4147 = vmatpush.bf16.msra.mxu0 %v4062
  %4148 = vmatpush.bf16.msra.mxu0 %v4058
  %4149 = vmatpush.bf16.msra.mxu0 %v4054
  %4150 = vmatmul.bf16.gmra.mxu0 %v2556
  %v4151 = vpop.f32.mrf.mxu0
  %v4152 = vadd.f32 %v3927, %v4151
  %v4153 = vpop.f32.mrf.mxu0
  %4154 = vdwg.mxu0
  %4155 = vmatpush.bf16.msra.mxu0 %v4083
  %4156 = vmatpush.bf16.msra.mxu0 %v4079
  %4157 = vmatpush.bf16.msra.mxu0 %v4075
  %4158 = vmatpush.bf16.msra.mxu0 %v4071
  %4159 = vmatpush.bf16.msra.mxu0 %v4067
  %4160 = vmatpush.bf16.msra.mxu0 %v4063
  %4161 = vmatpush.bf16.msra.mxu0 %v4059
  %4162 = vmatpush.bf16.msra.mxu0 %v4055
  %4163 = vmatmul.bf16.gmra.mxu0 %v2556
  %v4164 = vpop.f32.mrf.mxu0
  %v4165 = vadd.f32 %v3953, %v4164
  %v4166 = vpop.f32.mrf.mxu0
  %4167 = vdwg.mxu0
  %v4168 = vld [vmem:[%s15] sm:$0xf]
  %v4170 = vperm.slane %v4168, 0
  %v4171 = vperm.slane %v4168, 1
  %v4172 = vperm.slane %v4168, 2
  %v4173 = vperm.slane %v4168, 3
  %v4178 = vadd.f32 %v4126, %v4170
  %v4179 = vadd.f32 %v4139, %v4171
  %v4180 = vadd.f32 %v4152, %v4172
  %v4181 = vadd.f32 %v4165, %v4173
  %v4182 = vmax.f32 %v4178, 0.0
  %v4183 = vmax.f32 %v4179, 0.0
  %v4184 = vmax.f32 %v4180, 0.0
  %v4185 = vmax.f32 %v4181, 0.0
  %v4186 = vpack.c.bf16 %v4182, %v4182
  %v4187 = vpack.c.bf16 %v4183, %v4183
  %v4188 = vpack.c.bf16 %v4184, %v4184
  %v4189 = vpack.c.bf16 %v4185, %v4185
  %v4190 = vld [vmem:[%s16] sm:$0xff]
  %v4191 = vld [vmem:[%s16 + $0x8] sm:$0xff]
  %v4192 = vld [vmem:[%s16 + $0x10] sm:$0xff]
  %v4193 = vld [vmem:[%s16 + $0x18] sm:$0xff]
  %v4194 = vld [vmem:[%s16 + $0x20] sm:$0xff]
  %v4195 = vld [vmem:[%s16 + $0x28] sm:$0xff]
  %v4196 = vld [vmem:[%s16 + $0x30] sm:$0xff]
  %v4197 = vld [vmem:[%s16 + $0x38] sm:$0xff]
  %v4198 = vld [vmem:[%s16 + $0x40] sm:$0xff]
  %v4199 = vld [vmem:[%s16 + $0x48] sm:$0xff]
  %v4200 = vld [vmem:[%s16 + $0x50] sm:$0xff]
  %v4201 = vld [vmem:[%s16 + $0x58] sm:$0xff]
  %v4202 = vld [vmem:[%s16 + $0x60] sm:$0xff]
  %v4203 = vld [vmem:[%s16 + $0x68] sm:$0xff]
  %v4204 = vld [vmem:[%s16 + $0x70] sm:$0xff]
  %v4205 = vld [vmem:[%s16 + $0x78] sm:$0xff]
  %v4206 = vld [vmem:[%s16 + $0x80] sm:$0xff]
  %v4207 = vld [vmem:[%s16 + $0x88] sm:$0xff]
  %v4208 = vld [vmem:[%s16 + $0x90] sm:$0xff]
  %v4209 = vld [vmem:[%s16 + $0x98] sm:$0xff]
  %v4210 = vld [vmem:[%s16 + $0xa0] sm:$0xff]
  %v4211 = vld [vmem:[%s16 + $0xa8] sm:$0xff]
  %v4212 = vld [vmem:[%s16 + $0xb0] sm:$0xff]
  %v4213 = vld [vmem:[%s16 + $0xb8] sm:$0xff]
  %v4214 = vld [vmem:[%s16 + $0xc0] sm:$0xff]
  %v4215 = vld [vmem:[%s16 + $0xc8] sm:$0xff]
  %v4216 = vld [vmem:[%s16 + $0xd0] sm:$0xff]
  %v4217 = vld [vmem:[%s16 + $0xd8] sm:$0xff]
  %v4218 = vld [vmem:[%s16 + $0xe0] sm:$0xff]
  %v4219 = vld [vmem:[%s16 + $0xe8] sm:$0xff]
  %v4220 = vld [vmem:[%s16 + $0xf0] sm:$0xff]
  %v4221 = vld [vmem:[%s16 + $0xf8] sm:$0xff]
  %v4222 = vld [vmem:[%s16 + $0x100] sm:$0xff]
  %v4223 = vld [vmem:[%s16 + $0x108] sm:$0xff]
  %v4224 = vld [vmem:[%s16 + $0x110] sm:$0xff]
  %v4225 = vld [vmem:[%s16 + $0x118] sm:$0xff]
  %v4226 = vld [vmem:[%s16 + $0x120] sm:$0xff]
  %v4227 = vld [vmem:[%s16 + $0x128] sm:$0xff]
  %v4228 = vld [vmem:[%s16 + $0x130] sm:$0xff]
  %v4229 = vld [vmem:[%s16 + $0x138] sm:$0xff]
  %v4230 = vld [vmem:[%s16 + $0x140] sm:$0xff]
  %v4231 = vld [vmem:[%s16 + $0x148] sm:$0xff]
  %v4232 = vld [vmem:[%s16 + $0x150] sm:$0xff]
  %v4233 = vld [vmem:[%s16 + $0x158] sm:$0xff]
  %v4234 = vld [vmem:[%s16 + $0x160] sm:$0xff]
  %v4235 = vld [vmem:[%s16 + $0x168] sm:$0xff]
  %v4236 = vld [vmem:[%s16 + $0x170] sm:$0xff]
  %v4237 = vld [vmem:[%s16 + $0x178] sm:$0xff]
  %v4238 = vld [vmem:[%s16 + $0x180] sm:$0xff]
  %v4239 = vld [vmem:[%s16 + $0x188] sm:$0xff]
  %v4240 = vld [vmem:[%s16 + $0x190] sm:$0xff]
  %v4241 = vld [vmem:[%s16 + $0x198] sm:$0xff]
  %v4242 = vld [vmem:[%s16 + $0x1a0] sm:$0xff]
  %v4243 = vld [vmem:[%s16 + $0x1a8] sm:$0xff]
  %v4244 = vld [vmem:[%s16 + $0x1b0] sm:$0xff]
  %v4245 = vld [vmem:[%s16 + $0x1b8] sm:$0xff]
  %v4246 = vld [vmem:[%s16 + $0x1c0] sm:$0xff]
  %v4247 = vld [vmem:[%s16 + $0x1c8] sm:$0xff]
  %v4248 = vld [vmem:[%s16 + $0x1d0] sm:$0xff]
  %v4249 = vld [vmem:[%s16 + $0x1d8] sm:$0xff]
  %v4250 = vld [vmem:[%s16 + $0x1e0] sm:$0xff]
  %v4251 = vld [vmem:[%s16 + $0x1e8] sm:$0xff]
  %v4252 = vld [vmem:[%s16 + $0x1f0] sm:$0xff]
  %v4253 = vld [vmem:[%s16 + $0x1f8] sm:$0xff]
  %v4254 = vld [vmem:[%s16 + $0x200] sm:$0xff]
  %v4255 = vld [vmem:[%s16 + $0x208] sm:$0xff]
  %v4256 = vld [vmem:[%s16 + $0x210] sm:$0xff]
  %v4257 = vld [vmem:[%s16 + $0x218] sm:$0xff]
  %v4258 = vld [vmem:[%s16 + $0x220] sm:$0xff]
  %v4259 = vld [vmem:[%s16 + $0x228] sm:$0xff]
  %v4260 = vld [vmem:[%s16 + $0x230] sm:$0xff]
  %v4261 = vld [vmem:[%s16 + $0x238] sm:$0xff]
  %v4262 = vld [vmem:[%s16 + $0x240] sm:$0xff]
  %v4263 = vld [vmem:[%s16 + $0x248] sm:$0xff]
  %v4264 = vld [vmem:[%s16 + $0x250] sm:$0xff]
  %v4265 = vld [vmem:[%s16 + $0x258] sm:$0xff]
  %v4266 = vld [vmem:[%s16 + $0x260] sm:$0xff]
  %v4267 = vld [vmem:[%s16 + $0x268] sm:$0xff]
  %v4268 = vld [vmem:[%s16 + $0x270] sm:$0xff]
  %v4269 = vld [vmem:[%s16 + $0x278] sm:$0xff]
  %v4270 = vld [vmem:[%s16 + $0x280] sm:$0xff]
  %v4271 = vld [vmem:[%s16 + $0x288] sm:$0xff]
  %v4272 = vld [vmem:[%s16 + $0x290] sm:$0xff]
  %v4273 = vld [vmem:[%s16 + $0x298] sm:$0xff]
  %v4274 = vld [vmem:[%s16 + $0x2a0] sm:$0xff]
  %v4275 = vld [vmem:[%s16 + $0x2a8] sm:$0xff]
  %v4276 = vld [vmem:[%s16 + $0x2b0] sm:$0xff]
  %v4277 = vld [vmem:[%s16 + $0x2b8] sm:$0xff]
  %v4278 = vld [vmem:[%s16 + $0x2c0] sm:$0xff]
  %v4279 = vld [vmem:[%s16 + $0x2c8] sm:$0xff]
  %v4280 = vld [vmem:[%s16 + $0x2d0] sm:$0xff]
  %v4281 = vld [vmem:[%s16 + $0x2d8] sm:$0xff]
  %v4282 = vld [vmem:[%s16 + $0x2e0] sm:$0xff]
  %v4283 = vld [vmem:[%s16 + $0x2e8] sm:$0xff]
  %v4284 = vld [vmem:[%s16 + $0x2f0] sm:$0xff]
  %v4285 = vld [vmem:[%s16 + $0x2f8] sm:$0xff]
  %v4286 = vld [vmem:[%s16 + $0x300] sm:$0xff]
  %v4287 = vld [vmem:[%s16 + $0x308] sm:$0xff]
  %v4288 = vld [vmem:[%s16 + $0x310] sm:$0xff]
  %v4289 = vld [vmem:[%s16 + $0x318] sm:$0xff]
  %v4290 = vld [vmem:[%s16 + $0x320] sm:$0xff]
  %v4291 = vld [vmem:[%s16 + $0x328] sm:$0xff]
  %v4292 = vld [vmem:[%s16 + $0x330] sm:$0xff]
  %v4293 = vld [vmem:[%s16 + $0x338] sm:$0xff]
  %v4294 = vld [vmem:[%s16 + $0x340] sm:$0xff]
  %v4295 = vld [vmem:[%s16 + $0x348] sm:$0xff]
  %v4296 = vld [vmem:[%s16 + $0x350] sm:$0xff]
  %v4297 = vld [vmem:[%s16 + $0x358] sm:$0xff]
  %v4298 = vld [vmem:[%s16 + $0x360] sm:$0xff]
  %v4299 = vld [vmem:[%s16 + $0x368] sm:$0xff]
  %v4300 = vld [vmem:[%s16 + $0x370] sm:$0xff]
  %v4301 = vld [vmem:[%s16 + $0x378] sm:$0xff]
  %v4302 = vld [vmem:[%s16 + $0x380] sm:$0xff]
  %v4303 = vld [vmem:[%s16 + $0x388] sm:$0xff]
  %v4304 = vld [vmem:[%s16 + $0x390] sm:$0xff]
  %v4305 = vld [vmem:[%s16 + $0x398] sm:$0xff]
  %v4306 = vld [vmem:[%s16 + $0x3a0] sm:$0xff]
  %v4307 = vld [vmem:[%s16 + $0x3a8] sm:$0xff]
  %v4308 = vld [vmem:[%s16 + $0x3b0] sm:$0xff]
  %v4309 = vld [vmem:[%s16 + $0x3b8] sm:$0xff]
  %v4310 = vld [vmem:[%s16 + $0x3c0] sm:$0xff]
  %v4311 = vld [vmem:[%s16 + $0x3c8] sm:$0xff]
  %v4312 = vld [vmem:[%s16 + $0x3d0] sm:$0xff]
  %v4313 = vld [vmem:[%s16 + $0x3d8] sm:$0xff]
  %v4314 = vld [vmem:[%s16 + $0x3e0] sm:$0xff]
  %v4315 = vld [vmem:[%s16 + $0x3e8] sm:$0xff]
  %v4316 = vld [vmem:[%s16 + $0x3f0] sm:$0xff]
  %v4317 = vld [vmem:[%s16 + $0x3f8] sm:$0xff]
  %v4318 = vld [vmem:[%s17] sm:$0xf]
  %v4320 = vperm.slane %v4318, 0
  %v4321 = vperm.slane %v4318, 1
  %v4322 = vperm.slane %v4318, 2
  %v4323 = vperm.slane %v4318, 3
  %v4456 = vunpack.c.l.b16 %v4190
  %v4457 = vunpack.c.h.b16 %v4190
  %v4458 = vunpack.c.l.b16 %v4191
  %v4459 = vunpack.c.h.b16 %v4191
  %v4460 = vunpack.c.l.b16 %v4192
  %v4461 = vunpack.c.h.b16 %v4192
  %v4462 = vunpack.c.l.b16 %v4193
  %v4463 = vunpack.c.h.b16 %v4193
  %v4464 = vunpack.c.l.b16 %v4194
  %v4465 = vunpack.c.h.b16 %v4194
  %v4466 = vunpack.c.l.b16 %v4195
  %v4467 = vunpack.c.h.b16 %v4195
  %v4468 = vunpack.c.l.b16 %v4196
  %v4469 = vunpack.c.h.b16 %v4196
  %v4470 = vunpack.c.l.b16 %v4197
  %v4471 = vunpack.c.h.b16 %v4197
  %v4472 = vunpack.c.l.b16 %v4198
  %v4473 = vunpack.c.h.b16 %v4198
  %v4474 = vunpack.c.l.b16 %v4199
  %v4475 = vunpack.c.h.b16 %v4199
  %v4476 = vunpack.c.l.b16 %v4200
  %v4477 = vunpack.c.h.b16 %v4200
  %v4478 = vunpack.c.l.b16 %v4201
  %v4479 = vunpack.c.h.b16 %v4201
  %v4480 = vunpack.c.l.b16 %v4202
  %v4481 = vunpack.c.h.b16 %v4202
  %v4482 = vunpack.c.l.b16 %v4203
  %v4483 = vunpack.c.h.b16 %v4203
  %v4484 = vunpack.c.l.b16 %v4204
  %v4485 = vunpack.c.h.b16 %v4204
  %v4486 = vunpack.c.l.b16 %v4205
  %v4487 = vunpack.c.h.b16 %v4205
  %v4488 = vunpack.c.l.b16 %v4206
  %v4489 = vunpack.c.h.b16 %v4206
  %v4490 = vunpack.c.l.b16 %v4207
  %v4491 = vunpack.c.h.b16 %v4207
  %v4492 = vunpack.c.l.b16 %v4208
  %v4493 = vunpack.c.h.b16 %v4208
  %v4494 = vunpack.c.l.b16 %v4209
  %v4495 = vunpack.c.h.b16 %v4209
  %v4496 = vunpack.c.l.b16 %v4210
  %v4497 = vunpack.c.h.b16 %v4210
  %v4498 = vunpack.c.l.b16 %v4211
  %v4499 = vunpack.c.h.b16 %v4211
  %v4500 = vunpack.c.l.b16 %v4212
  %v4501 = vunpack.c.h.b16 %v4212
  %v4502 = vunpack.c.l.b16 %v4213
  %v4503 = vunpack.c.h.b16 %v4213
  %v4504 = vunpack.c.l.b16 %v4214
  %v4505 = vunpack.c.h.b16 %v4214
  %v4506 = vunpack.c.l.b16 %v4215
  %v4507 = vunpack.c.h.b16 %v4215
  %v4508 = vunpack.c.l.b16 %v4216
  %v4509 = vunpack.c.h.b16 %v4216
  %v4510 = vunpack.c.l.b16 %v4217
  %v4511 = vunpack.c.h.b16 %v4217
  %v4512 = vunpack.c.l.b16 %v4218
  %v4513 = vunpack.c.h.b16 %v4218
  %v4514 = vunpack.c.l.b16 %v4219
  %v4515 = vunpack.c.h.b16 %v4219
  %v4516 = vunpack.c.l.b16 %v4220
  %v4517 = vunpack.c.h.b16 %v4220
  %v4518 = vunpack.c.l.b16 %v4221
  %v4519 = vunpack.c.h.b16 %v4221
  %v4520 = vunpack.c.l.b16 %v4222
  %v4521 = vunpack.c.h.b16 %v4222
  %v4522 = vunpack.c.l.b16 %v4223
  %v4523 = vunpack.c.h.b16 %v4223
  %v4524 = vunpack.c.l.b16 %v4224
  %v4525 = vunpack.c.h.b16 %v4224
  %v4526 = vunpack.c.l.b16 %v4225
  %v4527 = vunpack.c.h.b16 %v4225
  %v4528 = vunpack.c.l.b16 %v4226
  %v4529 = vunpack.c.h.b16 %v4226
  %v4530 = vunpack.c.l.b16 %v4227
  %v4531 = vunpack.c.h.b16 %v4227
  %v4532 = vunpack.c.l.b16 %v4228
  %v4533 = vunpack.c.h.b16 %v4228
  %v4534 = vunpack.c.l.b16 %v4229
  %v4535 = vunpack.c.h.b16 %v4229
  %v4536 = vunpack.c.l.b16 %v4230
  %v4537 = vunpack.c.h.b16 %v4230
  %v4538 = vunpack.c.l.b16 %v4231
  %v4539 = vunpack.c.h.b16 %v4231
  %v4540 = vunpack.c.l.b16 %v4232
  %v4541 = vunpack.c.h.b16 %v4232
  %v4542 = vunpack.c.l.b16 %v4233
  %v4543 = vunpack.c.h.b16 %v4233
  %v4544 = vunpack.c.l.b16 %v4234
  %v4545 = vunpack.c.h.b16 %v4234
  %v4546 = vunpack.c.l.b16 %v4235
  %v4547 = vunpack.c.h.b16 %v4235
  %v4548 = vunpack.c.l.b16 %v4236
  %v4549 = vunpack.c.h.b16 %v4236
  %v4550 = vunpack.c.l.b16 %v4237
  %v4551 = vunpack.c.h.b16 %v4237
  %v4552 = vunpack.c.l.b16 %v4238
  %v4553 = vunpack.c.h.b16 %v4238
  %v4554 = vunpack.c.l.b16 %v4239
  %v4555 = vunpack.c.h.b16 %v4239
  %v4556 = vunpack.c.l.b16 %v4240
  %v4557 = vunpack.c.h.b16 %v4240
  %v4558 = vunpack.c.l.b16 %v4241
  %v4559 = vunpack.c.h.b16 %v4241
  %v4560 = vunpack.c.l.b16 %v4242
  %v4561 = vunpack.c.h.b16 %v4242
  %v4562 = vunpack.c.l.b16 %v4243
  %v4563 = vunpack.c.h.b16 %v4243
  %v4564 = vunpack.c.l.b16 %v4244
  %v4565 = vunpack.c.h.b16 %v4244
  %v4566 = vunpack.c.l.b16 %v4245
  %v4567 = vunpack.c.h.b16 %v4245
  %v4568 = vunpack.c.l.b16 %v4246
  %v4569 = vunpack.c.h.b16 %v4246
  %v4570 = vunpack.c.l.b16 %v4247
  %v4571 = vunpack.c.h.b16 %v4247
  %v4572 = vunpack.c.l.b16 %v4248
  %v4573 = vunpack.c.h.b16 %v4248
  %v4574 = vunpack.c.l.b16 %v4249
  %v4575 = vunpack.c.h.b16 %v4249
  %v4576 = vunpack.c.l.b16 %v4250
  %v4577 = vunpack.c.h.b16 %v4250
  %v4578 = vunpack.c.l.b16 %v4251
  %v4579 = vunpack.c.h.b16 %v4251
  %v4580 = vunpack.c.l.b16 %v4252
  %v4581 = vunpack.c.h.b16 %v4252
  %v4582 = vunpack.c.l.b16 %v4253
  %v4583 = vunpack.c.h.b16 %v4253
  %v4584 = vunpack.c.l.b16 %v4254
  %v4585 = vunpack.c.h.b16 %v4254
  %v4586 = vunpack.c.l.b16 %v4255
  %v4587 = vunpack.c.h.b16 %v4255
  %v4588 = vunpack.c.l.b16 %v4256
  %v4589 = vunpack.c.h.b16 %v4256
  %v4590 = vunpack.c.l.b16 %v4257
  %v4591 = vunpack.c.h.b16 %v4257
  %v4592 = vunpack.c.l.b16 %v4258
  %v4593 = vunpack.c.h.b16 %v4258
  %v4594 = vunpack.c.l.b16 %v4259
  %v4595 = vunpack.c.h.b16 %v4259
  %v4596 = vunpack.c.l.b16 %v4260
  %v4597 = vunpack.c.h.b16 %v4260
  %v4598 = vunpack.c.l.b16 %v4261
  %v4599 = vunpack.c.h.b16 %v4261
  %v4600 = vunpack.c.l.b16 %v4262
  %v4601 = vunpack.c.h.b16 %v4262
  %v4602 = vunpack.c.l.b16 %v4263
  %v4603 = vunpack.c.h.b16 %v4263
  %v4604 = vunpack.c.l.b16 %v4264
  %v4605 = vunpack.c.h.b16 %v4264
  %v4606 = vunpack.c.l.b16 %v4265
  %v4607 = vunpack.c.h.b16 %v4265
  %v4608 = vunpack.c.l.b16 %v4266
  %v4609 = vunpack.c.h.b16 %v4266
  %v4610 = vunpack.c.l.b16 %v4267
  %v4611 = vunpack.c.h.b16 %v4267
  %v4612 = vunpack.c.l.b16 %v4268
  %v4613 = vunpack.c.h.b16 %v4268
  %v4614 = vunpack.c.l.b16 %v4269
  %v4615 = vunpack.c.h.b16 %v4269
  %v4616 = vunpack.c.l.b16 %v4270
  %v4617 = vunpack.c.h.b16 %v4270
  %v4618 = vunpack.c.l.b16 %v4271
  %v4619 = vunpack.c.h.b16 %v4271
  %v4620 = vunpack.c.l.b16 %v4272
  %v4621 = vunpack.c.h.b16 %v4272
  %v4622 = vunpack.c.l.b16 %v4273
  %v4623 = vunpack.c.h.b16 %v4273
  %v4624 = vunpack.c.l.b16 %v4274
  %v4625 = vunpack.c.h.b16 %v4274
  %v4626 = vunpack.c.l.b16 %v4275
  %v4627 = vunpack.c.h.b16 %v4275
  %v4628 = vunpack.c.l.b16 %v4276
  %v4629 = vunpack.c.h.b16 %v4276
  %v4630 = vunpack.c.l.b16 %v4277
  %v4631 = vunpack.c.h.b16 %v4277
  %v4632 = vunpack.c.l.b16 %v4278
  %v4633 = vunpack.c.h.b16 %v4278
  %v4634 = vunpack.c.l.b16 %v4279
  %v4635 = vunpack.c.h.b16 %v4279
  %v4636 = vunpack.c.l.b16 %v4280
  %v4637 = vunpack.c.h.b16 %v4280
  %v4638 = vunpack.c.l.b16 %v4281
  %v4639 = vunpack.c.h.b16 %v4281
  %v4640 = vunpack.c.l.b16 %v4282
  %v4641 = vunpack.c.h.b16 %v4282
  %v4642 = vunpack.c.l.b16 %v4283
  %v4643 = vunpack.c.h.b16 %v4283
  %v4644 = vunpack.c.l.b16 %v4284
  %v4645 = vunpack.c.h.b16 %v4284
  %v4646 = vunpack.c.l.b16 %v4285
  %v4647 = vunpack.c.h.b16 %v4285
  %v4648 = vunpack.c.l.b16 %v4286
  %v4649 = vunpack.c.h.b16 %v4286
  %v4650 = vunpack.c.l.b16 %v4287
  %v4651 = vunpack.c.h.b16 %v4287
  %v4652 = vunpack.c.l.b16 %v4288
  %v4653 = vunpack.c.h.b16 %v4288
  %v4654 = vunpack.c.l.b16 %v4289
  %v4655 = vunpack.c.h.b16 %v4289
  %v4656 = vunpack.c.l.b16 %v4290
  %v4657 = vunpack.c.h.b16 %v4290
  %v4658 = vunpack.c.l.b16 %v4291
  %v4659 = vunpack.c.h.b16 %v4291
  %v4660 = vunpack.c.l.b16 %v4292
  %v4661 = vunpack.c.h.b16 %v4292
  %v4662 = vunpack.c.l.b16 %v4293
  %v4663 = vunpack.c.h.b16 %v4293
  %v4664 = vunpack.c.l.b16 %v4294
  %v4665 = vunpack.c.h.b16 %v4294
  %v4666 = vunpack.c.l.b16 %v4295
  %v4667 = vunpack.c.h.b16 %v4295
  %v4668 = vunpack.c.l.b16 %v4296
  %v4669 = vunpack.c.h.b16 %v4296
  %v4670 = vunpack.c.l.b16 %v4297
  %v4671 = vunpack.c.h.b16 %v4297
  %v4672 = vunpack.c.l.b16 %v4298
  %v4673 = vunpack.c.h.b16 %v4298
  %v4674 = vunpack.c.l.b16 %v4299
  %v4675 = vunpack.c.h.b16 %v4299
  %v4676 = vunpack.c.l.b16 %v4300
  %v4677 = vunpack.c.h.b16 %v4300
  %v4678 = vunpack.c.l.b16 %v4301
  %v4679 = vunpack.c.h.b16 %v4301
  %v4680 = vunpack.c.l.b16 %v4302
  %v4681 = vunpack.c.h.b16 %v4302
  %v4682 = vunpack.c.l.b16 %v4303
  %v4683 = vunpack.c.h.b16 %v4303
  %v4684 = vunpack.c.l.b16 %v4304
  %v4685 = vunpack.c.h.b16 %v4304
  %v4686 = vunpack.c.l.b16 %v4305
  %v4687 = vunpack.c.h.b16 %v4305
  %v4688 = vunpack.c.l.b16 %v4306
  %v4689 = vunpack.c.h.b16 %v4306
  %v4690 = vunpack.c.l.b16 %v4307
  %v4691 = vunpack.c.h.b16 %v4307
  %v4692 = vunpack.c.l.b16 %v4308
  %v4693 = vunpack.c.h.b16 %v4308
  %v4694 = vunpack.c.l.b16 %v4309
  %v4695 = vunpack.c.h.b16 %v4309
  %v4696 = vunpack.c.l.b16 %v4310
  %v4697 = vunpack.c.h.b16 %v4310
  %v4698 = vunpack.c.l.b16 %v4311
  %v4699 = vunpack.c.h.b16 %v4311
  %v4700 = vunpack.c.l.b16 %v4312
  %v4701 = vunpack.c.h.b16 %v4312
  %v4702 = vunpack.c.l.b16 %v4313
  %v4703 = vunpack.c.h.b16 %v4313
  %v4704 = vunpack.c.l.b16 %v4314
  %v4705 = vunpack.c.h.b16 %v4314
  %v4706 = vunpack.c.l.b16 %v4315
  %v4707 = vunpack.c.h.b16 %v4315
  %v4708 = vunpack.c.l.b16 %v4316
  %v4709 = vunpack.c.h.b16 %v4316
  %v4710 = vunpack.c.l.b16 %v4317
  %v4711 = vunpack.c.h.b16 %v4317
  %v4712 = vpack.c.b16 %v4460, %v4456
  %v4713 = vpack.c.b16 %v4461, %v4457
  %v4714 = vpack.c.b16 %v4462, %v4458
  %v4715 = vpack.c.b16 %v4463, %v4459
  %v4716 = vpack.c.b16 %v4468, %v4464
  %v4717 = vpack.c.b16 %v4469, %v4465
  %v4718 = vpack.c.b16 %v4470, %v4466
  %v4719 = vpack.c.b16 %v4471, %v4467
  %v4720 = vpack.c.b16 %v4476, %v4472
  %v4721 = vpack.c.b16 %v4477, %v4473
  %v4722 = vpack.c.b16 %v4478, %v4474
  %v4723 = vpack.c.b16 %v4479, %v4475
  %v4724 = vpack.c.b16 %v4484, %v4480
  %v4725 = vpack.c.b16 %v4485, %v4481
  %v4726 = vpack.c.b16 %v4486, %v4482
  %v4727 = vpack.c.b16 %v4487, %v4483
  %v4728 = vpack.c.b16 %v4492, %v4488
  %v4729 = vpack.c.b16 %v4493, %v4489
  %v4730 = vpack.c.b16 %v4494, %v4490
  %v4731 = vpack.c.b16 %v4495, %v4491
  %v4732 = vpack.c.b16 %v4500, %v4496
  %v4733 = vpack.c.b16 %v4501, %v4497
  %v4734 = vpack.c.b16 %v4502, %v4498
  %v4735 = vpack.c.b16 %v4503, %v4499
  %v4736 = vpack.c.b16 %v4508, %v4504
  %v4737 = vpack.c.b16 %v4509, %v4505
  %v4738 = vpack.c.b16 %v4510, %v4506
  %v4739 = vpack.c.b16 %v4511, %v4507
  %v4740 = vpack.c.b16 %v4516, %v4512
  %v4741 = vpack.c.b16 %v4517, %v4513
  %v4742 = vpack.c.b16 %v4518, %v4514
  %v4743 = vpack.c.b16 %v4519, %v4515
  %v4744 = vpack.c.b16 %v4524, %v4520
  %v4745 = vpack.c.b16 %v4525, %v4521
  %v4746 = vpack.c.b16 %v4526, %v4522
  %v4747 = vpack.c.b16 %v4527, %v4523
  %v4748 = vpack.c.b16 %v4532, %v4528
  %v4749 = vpack.c.b16 %v4533, %v4529
  %v4750 = vpack.c.b16 %v4534, %v4530
  %v4751 = vpack.c.b16 %v4535, %v4531
  %v4752 = vpack.c.b16 %v4540, %v4536
  %v4753 = vpack.c.b16 %v4541, %v4537
  %v4754 = vpack.c.b16 %v4542, %v4538
  %v4755 = vpack.c.b16 %v4543, %v4539
  %v4756 = vpack.c.b16 %v4548, %v4544
  %v4757 = vpack.c.b16 %v4549, %v4545
  %v4758 = vpack.c.b16 %v4550, %v4546
  %v4759 = vpack.c.b16 %v4551, %v4547
  %v4760 = vpack.c.b16 %v4556, %v4552
  %v4761 = vpack.c.b16 %v4557, %v4553
  %v4762 = vpack.c.b16 %v4558, %v4554
  %v4763 = vpack.c.b16 %v4559, %v4555
  %v4764 = vpack.c.b16 %v4564, %v4560
  %v4765 = vpack.c.b16 %v4565, %v4561
  %v4766 = vpack.c.b16 %v4566, %v4562
  %v4767 = vpack.c.b16 %v4567, %v4563
  %v4768 = vpack.c.b16 %v4572, %v4568
  %v4769 = vpack.c.b16 %v4573, %v4569
  %v4770 = vpack.c.b16 %v4574, %v4570
  %v4771 = vpack.c.b16 %v4575, %v4571
  %v4772 = vpack.c.b16 %v4580, %v4576
  %v4773 = vpack.c.b16 %v4581, %v4577
  %v4774 = vpack.c.b16 %v4582, %v4578
  %v4775 = vpack.c.b16 %v4583, %v4579
  %v4776 = vpack.c.b16 %v4588, %v4584
  %v4777 = vpack.c.b16 %v4589, %v4585
  %v4778 = vpack.c.b16 %v4590, %v4586
  %v4779 = vpack.c.b16 %v4591, %v4587
  %v4780 = vpack.c.b16 %v4596, %v4592
  %v4781 = vpack.c.b16 %v4597, %v4593
  %v4782 = vpack.c.b16 %v4598, %v4594
  %v4783 = vpack.c.b16 %v4599, %v4595
  %v4784 = vpack.c.b16 %v4604, %v4600
  %v4785 = vpack.c.b16 %v4605, %v4601
  %v4786 = vpack.c.b16 %v4606, %v4602
  %v4787 = vpack.c.b16 %v4607, %v4603
  %v4788 = vpack.c.b16 %v4612, %v4608
  %v4789 = vpack.c.b16 %v4613, %v4609
  %v4790 = vpack.c.b16 %v4614, %v4610
  %v4791 = vpack.c.b16 %v4615, %v4611
  %v4792 = vpack.c.b16 %v4620, %v4616
  %v4793 = vpack.c.b16 %v4621, %v4617
  %v4794 = vpack.c.b16 %v4622, %v4618
  %v4795 = vpack.c.b16 %v4623, %v4619
  %v4796 = vpack.c.b16 %v4628, %v4624
  %v4797 = vpack.c.b16 %v4629, %v4625
  %v4798 = vpack.c.b16 %v4630, %v4626
  %v4799 = vpack.c.b16 %v4631, %v4627
  %v4800 = vpack.c.b16 %v4636, %v4632
  %v4801 = vpack.c.b16 %v4637, %v4633
  %v4802 = vpack.c.b16 %v4638, %v4634
  %v4803 = vpack.c.b16 %v4639, %v4635
  %v4804 = vpack.c.b16 %v4644, %v4640
  %v4805 = vpack.c.b16 %v4645, %v4641
  %v4806 = vpack.c.b16 %v4646, %v4642
  %v4807 = vpack.c.b16 %v4647, %v4643
  %v4808 = vpack.c.b16 %v4652, %v4648
  %v4809 = vpack.c.b16 %v4653, %v4649
  %v4810 = vpack.c.b16 %v4654, %v4650
  %v4811 = vpack.c.b16 %v4655, %v4651
  %v4812 = vpack.c.b16 %v4660, %v4656
  %v4813 = vpack.c.b16 %v4661, %v4657
  %v4814 = vpack.c.b16 %v4662, %v4658
  %v4815 = vpack.c.b16 %v4663, %v4659
  %v4816 = vpack.c.b16 %v4668, %v4664
  %v4817 = vpack.c.b16 %v4669, %v4665
  %v4818 = vpack.c.b16 %v4670, %v4666
  %v4819 = vpack.c.b16 %v4671, %v4667
  %v4820 = vpack.c.b16 %v4676, %v4672
  %v4821 = vpack.c.b16 %v4677, %v4673
  %v4822 = vpack.c.b16 %v4678, %v4674
  %v4823 = vpack.c.b16 %v4679, %v4675
  %v4824 = vpack.c.b16 %v4684, %v4680
  %v4825 = vpack.c.b16 %v4685, %v4681
  %v4826 = vpack.c.b16 %v4686, %v4682
  %v4827 = vpack.c.b16 %v4687, %v4683
  %v4828 = vpack.c.b16 %v4692, %v4688
  %v4829 = vpack.c.b16 %v4693, %v4689
  %v4830 = vpack.c.b16 %v4694, %v4690
  %v4831 = vpack.c.b16 %v4695, %v4691
  %v4832 = vpack.c.b16 %v4700, %v4696
  %v4833 = vpack.c.b16 %v4701, %v4697
  %v4834 = vpack.c.b16 %v4702, %v4698
  %v4835 = vpack.c.b16 %v4703, %v4699
  %v4836 = vpack.c.b16 %v4708, %v4704
  %v4837 = vpack.c.b16 %v4709, %v4705
  %v4838 = vpack.c.b16 %v4710, %v4706
  %v4839 = vpack.c.b16 %v4711, %v4707
  %4968 = vmatpush.bf16.msra.mxu0 %v4740
  %4969 = vmatpush.bf16.msra.mxu0 %v4736
  %4970 = vmatpush.bf16.msra.mxu0 %v4732
  %4971 = vmatpush.bf16.msra.mxu0 %v4728
  %4972 = vmatpush.bf16.msra.mxu0 %v4724
  %4973 = vmatpush.bf16.msra.mxu0 %v4720
  %4974 = vmatpush.bf16.msra.mxu0 %v4716
  %4975 = vmatpush.bf16.msra.mxu0 %v4712
  %4976 = vmatmul.bf16.gmra.mxu0 %v4186
  %v4977 = vpop.f32.mrf.mxu0
  %v4978 = vadd.f32 %v4320, %v4977
  %v4979 = vpop.f32.mrf.mxu0
  %4980 = vdwg.mxu0
  %4981 = vmatpush.bf16.msra.mxu0 %v4772
  %4982 = vmatpush.bf16.msra.mxu0 %v4768
  %4983 = vmatpush.bf16.msra.mxu0 %v4764
  %4984 = vmatpush.bf16.msra.mxu0 %v4760
  %4985 = vmatpush.bf16.msra.mxu0 %v4756
  %4986 = vmatpush.bf16.msra.mxu0 %v4752
  %4987 = vmatpush.bf16.msra.mxu0 %v4748
  %4988 = vmatpush.bf16.msra.mxu0 %v4744
  %4989 = vmatmul.bf16.gmra.mxu0 %v4187
  %v4990 = vpop.f32.mrf.mxu0
  %v4991 = vadd.f32 %v4978, %v4990
  %v4992 = vpop.f32.mrf.mxu0
  %4993 = vdwg.mxu0
  %4994 = vmatpush.bf16.msra.mxu0 %v4804
  %4995 = vmatpush.bf16.msra.mxu0 %v4800
  %4996 = vmatpush.bf16.msra.mxu0 %v4796
  %4997 = vmatpush.bf16.msra.mxu0 %v4792
  %4998 = vmatpush.bf16.msra.mxu0 %v4788
  %4999 = vmatpush.bf16.msra.mxu0 %v4784
  %5000 = vmatpush.bf16.msra.mxu0 %v4780
  %5001 = vmatpush.bf16.msra.mxu0 %v4776
  %5002 = vmatmul.bf16.gmra.mxu0 %v4188
  %v5003 = vpop.f32.mrf.mxu0
  %v5004 = vadd.f32 %v4991, %v5003
  %v5005 = vpop.f32.mrf.mxu0
  %5006 = vdwg.mxu0
  %5007 = vmatpush.bf16.msra.mxu0 %v4836
  %5008 = vmatpush.bf16.msra.mxu0 %v4832
  %5009 = vmatpush.bf16.msra.mxu0 %v4828
  %5010 = vmatpush.bf16.msra.mxu0 %v4824
  %5011 = vmatpush.bf16.msra.mxu0 %v4820
  %5012 = vmatpush.bf16.msra.mxu0 %v4816
  %5013 = vmatpush.bf16.msra.mxu0 %v4812
  %5014 = vmatpush.bf16.msra.mxu0 %v4808
  %5015 = vmatmul.bf16.gmra.mxu0 %v4189
  %v5016 = vpop.f32.mrf.mxu0
  %v5017 = vadd.f32 %v5004, %v5016
  %v5018 = vpop.f32.mrf.mxu0
  %5019 = vdwg.mxu0
  %5020 = vmatpush.bf16.msra.mxu0 %v4741
  %5021 = vmatpush.bf16.msra.mxu0 %v4737
  %5022 = vmatpush.bf16.msra.mxu0 %v4733
  %5023 = vmatpush.bf16.msra.mxu0 %v4729
  %5024 = vmatpush.bf16.msra.mxu0 %v4725
  %5025 = vmatpush.bf16.msra.mxu0 %v4721
  %5026 = vmatpush.bf16.msra.mxu0 %v4717
  %5027 = vmatpush.bf16.msra.mxu0 %v4713
  %5028 = vmatmul.bf16.gmra.mxu0 %v4186
  %v5029 = vpop.f32.mrf.mxu0
  %v5030 = vadd.f32 %v4321, %v5029
  %v5031 = vpop.f32.mrf.mxu0
  %5032 = vdwg.mxu0
  %5033 = vmatpush.bf16.msra.mxu0 %v4773
  %5034 = vmatpush.bf16.msra.mxu0 %v4769
  %5035 = vmatpush.bf16.msra.mxu0 %v4765
  %5036 = vmatpush.bf16.msra.mxu0 %v4761
  %5037 = vmatpush.bf16.msra.mxu0 %v4757
  %5038 = vmatpush.bf16.msra.mxu0 %v4753
  %5039 = vmatpush.bf16.msra.mxu0 %v4749
  %5040 = vmatpush.bf16.msra.mxu0 %v4745
  %5041 = vmatmul.bf16.gmra.mxu0 %v4187
  %v5042 = vpop.f32.mrf.mxu0
  %v5043 = vadd.f32 %v5030, %v5042
  %v5044 = vpop.f32.mrf.mxu0
  %5045 = vdwg.mxu0
  %5046 = vmatpush.bf16.msra.mxu0 %v4805
  %5047 = vmatpush.bf16.msra.mxu0 %v4801
  %5048 = vmatpush.bf16.msra.mxu0 %v4797
  %5049 = vmatpush.bf16.msra.mxu0 %v4793
  %5050 = vmatpush.bf16.msra.mxu0 %v4789
  %5051 = vmatpush.bf16.msra.mxu0 %v4785
  %5052 = vmatpush.bf16.msra.mxu0 %v4781
  %5053 = vmatpush.bf16.msra.mxu0 %v4777
  %5054 = vmatmul.bf16.gmra.mxu0 %v4188
  %v5055 = vpop.f32.mrf.mxu0
  %v5056 = vadd.f32 %v5043, %v5055
  %v5057 = vpop.f32.mrf.mxu0
  %5058 = vdwg.mxu0
  %5059 = vmatpush.bf16.msra.mxu0 %v4837
  %5060 = vmatpush.bf16.msra.mxu0 %v4833
  %5061 = vmatpush.bf16.msra.mxu0 %v4829
  %5062 = vmatpush.bf16.msra.mxu0 %v4825
  %5063 = vmatpush.bf16.msra.mxu0 %v4821
  %5064 = vmatpush.bf16.msra.mxu0 %v4817
  %5065 = vmatpush.bf16.msra.mxu0 %v4813
  %5066 = vmatpush.bf16.msra.mxu0 %v4809
  %5067 = vmatmul.bf16.gmra.mxu0 %v4189
  %v5068 = vpop.f32.mrf.mxu0
  %v5069 = vadd.f32 %v5056, %v5068
  %v5070 = vpop.f32.mrf.mxu0
  %5071 = vdwg.mxu0
  %5072 = vmatpush.bf16.msra.mxu0 %v4742
  %5073 = vmatpush.bf16.msra.mxu0 %v4738
  %5074 = vmatpush.bf16.msra.mxu0 %v4734
  %5075 = vmatpush.bf16.msra.mxu0 %v4730
  %5076 = vmatpush.bf16.msra.mxu0 %v4726
  %5077 = vmatpush.bf16.msra.mxu0 %v4722
  %5078 = vmatpush.bf16.msra.mxu0 %v4718
  %5079 = vmatpush.bf16.msra.mxu0 %v4714
  %5080 = vmatmul.bf16.gmra.mxu0 %v4186
  %v5081 = vpop.f32.mrf.mxu0
  %v5082 = vadd.f32 %v4322, %v5081
  %v5083 = vpop.f32.mrf.mxu0
  %5084 = vdwg.mxu0
  %5085 = vmatpush.bf16.msra.mxu0 %v4774
  %5086 = vmatpush.bf16.msra.mxu0 %v4770
  %5087 = vmatpush.bf16.msra.mxu0 %v4766
  %5088 = vmatpush.bf16.msra.mxu0 %v4762
  %5089 = vmatpush.bf16.msra.mxu0 %v4758
  %5090 = vmatpush.bf16.msra.mxu0 %v4754
  %5091 = vmatpush.bf16.msra.mxu0 %v4750
  %5092 = vmatpush.bf16.msra.mxu0 %v4746
  %5093 = vmatmul.bf16.gmra.mxu0 %v4187
  %v5094 = vpop.f32.mrf.mxu0
  %v5095 = vadd.f32 %v5082, %v5094
  %v5096 = vpop.f32.mrf.mxu0
  %5097 = vdwg.mxu0
  %5098 = vmatpush.bf16.msra.mxu0 %v4806
  %5099 = vmatpush.bf16.msra.mxu0 %v4802
  %5100 = vmatpush.bf16.msra.mxu0 %v4798
  %5101 = vmatpush.bf16.msra.mxu0 %v4794
  %5102 = vmatpush.bf16.msra.mxu0 %v4790
  %5103 = vmatpush.bf16.msra.mxu0 %v4786
  %5104 = vmatpush.bf16.msra.mxu0 %v4782
  %5105 = vmatpush.bf16.msra.mxu0 %v4778
  %5106 = vmatmul.bf16.gmra.mxu0 %v4188
  %v5107 = vpop.f32.mrf.mxu0
  %v5108 = vadd.f32 %v5095, %v5107
  %v5109 = vpop.f32.mrf.mxu0
  %5110 = vdwg.mxu0
  %5111 = vmatpush.bf16.msra.mxu0 %v4838
  %5112 = vmatpush.bf16.msra.mxu0 %v4834
  %5113 = vmatpush.bf16.msra.mxu0 %v4830
  %5114 = vmatpush.bf16.msra.mxu0 %v4826
  %5115 = vmatpush.bf16.msra.mxu0 %v4822
  %5116 = vmatpush.bf16.msra.mxu0 %v4818
  %5117 = vmatpush.bf16.msra.mxu0 %v4814
  %5118 = vmatpush.bf16.msra.mxu0 %v4810
  %5119 = vmatmul.bf16.gmra.mxu0 %v4189
  %v5120 = vpop.f32.mrf.mxu0
  %v5121 = vadd.f32 %v5108, %v5120
  %v5122 = vpop.f32.mrf.mxu0
  %5123 = vdwg.mxu0
  %5124 = vmatpush.bf16.msra.mxu0 %v4743
  %5125 = vmatpush.bf16.msra.mxu0 %v4739
  %5126 = vmatpush.bf16.msra.mxu0 %v4735
  %5127 = vmatpush.bf16.msra.mxu0 %v4731
  %5128 = vmatpush.bf16.msra.mxu0 %v4727
  %5129 = vmatpush.bf16.msra.mxu0 %v4723
  %5130 = vmatpush.bf16.msra.mxu0 %v4719
  %5131 = vmatpush.bf16.msra.mxu0 %v4715
  %5132 = vmatmul.bf16.gmra.mxu0 %v4186
  %v5133 = vpop.f32.mrf.mxu0
  %v5134 = vadd.f32 %v4323, %v5133
  %v5135 = vpop.f32.mrf.mxu0
  %5136 = vdwg.mxu0
  %5137 = vmatpush.bf16.msra.mxu0 %v4775
  %5138 = vmatpush.bf16.msra.mxu0 %v4771
  %5139 = vmatpush.bf16.msra.mxu0 %v4767
  %5140 = vmatpush.bf16.msra.mxu0 %v4763
  %5141 = vmatpush.bf16.msra.mxu0 %v4759
  %5142 = vmatpush.bf16.msra.mxu0 %v4755
  %5143 = vmatpush.bf16.msra.mxu0 %v4751
  %5144 = vmatpush.bf16.msra.mxu0 %v4747
  %5145 = vmatmul.bf16.gmra.mxu0 %v4187
  %v5146 = vpop.f32.mrf.mxu0
  %v5147 = vadd.f32 %v5134, %v5146
  %v5148 = vpop.f32.mrf.mxu0
  %5149 = vdwg.mxu0
  %5150 = vmatpush.bf16.msra.mxu0 %v4807
  %5151 = vmatpush.bf16.msra.mxu0 %v4803
  %5152 = vmatpush.bf16.msra.mxu0 %v4799
  %5153 = vmatpush.bf16.msra.mxu0 %v4795
  %5154 = vmatpush.bf16.msra.mxu0 %v4791
  %5155 = vmatpush.bf16.msra.mxu0 %v4787
  %5156 = vmatpush.bf16.msra.mxu0 %v4783
  %5157 = vmatpush.bf16.msra.mxu0 %v4779
  %5158 = vmatmul.bf16.gmra.mxu0 %v4188
  %v5159 = vpop.f32.mrf.mxu0
  %v5160 = vadd.f32 %v5147, %v5159
  %v5161 = vpop.f32.mrf.mxu0
  %5162 = vdwg.mxu0
  %5163 = vmatpush.bf16.msra.mxu0 %v4839
  %5164 = vmatpush.bf16.msra.mxu0 %v4835
  %5165 = vmatpush.bf16.msra.mxu0 %v4831
  %5166 = vmatpush.bf16.msra.mxu0 %v4827
  %5167 = vmatpush.bf16.msra.mxu0 %v4823
  %5168 = vmatpush.bf16.msra.mxu0 %v4819
  %5169 = vmatpush.bf16.msra.mxu0 %v4815
  %5170 = vmatpush.bf16.msra.mxu0 %v4811
  %5171 = vmatmul.bf16.gmra.mxu0 %v4189
  %v5172 = vpop.f32.mrf.mxu0
  %v5173 = vadd.f32 %v5160, %v5172
  %v5174 = vpop.f32.mrf.mxu0
  %5175 = vdwg.mxu0
  %v5176 = vmax.f32 %v5017, 0.0
  %v5177 = vmax.f32 %v5069, 0.0
  %v5178 = vmax.f32 %v5121, 0.0
  %v5179 = vmax.f32 %v5173, 0.0
  %v5180 = vpack.c.bf16 %v5176, %v5176
  %v5181 = vpack.c.bf16 %v5177, %v5177
  %v5182 = vpack.c.bf16 %v5178, %v5178
  %v5183 = vpack.c.bf16 %v5179, %v5179
  %v5184 = vld [vmem:[%s18] sm:$0xff]
  %v5185 = vld [vmem:[%s18 + $0x8] sm:$0xff]
  %v5186 = vld [vmem:[%s18 + $0x10] sm:$0xff]
  %v5187 = vld [vmem:[%s18 + $0x18] sm:$0xff]
  %v5188 = vld [vmem:[%s18 + $0x20] sm:$0xff]
  %v5189 = vld [vmem:[%s18 + $0x28] sm:$0xff]
  %v5190 = vld [vmem:[%s18 + $0x30] sm:$0xff]
  %v5191 = vld [vmem:[%s18 + $0x38] sm:$0xff]
  %v5192 = vld [vmem:[%s18 + $0x40] sm:$0xff]
  %v5193 = vld [vmem:[%s18 + $0x48] sm:$0xff]
  %v5194 = vld [vmem:[%s18 + $0x50] sm:$0xff]
  %v5195 = vld [vmem:[%s18 + $0x58] sm:$0xff]
  %v5196 = vld [vmem:[%s18 + $0x60] sm:$0xff]
  %v5197 = vld [vmem:[%s18 + $0x68] sm:$0xff]
  %v5198 = vld [vmem:[%s18 + $0x70] sm:$0xff]
  %v5199 = vld [vmem:[%s18 + $0x78] sm:$0xff]
  %v5200 = vld [vmem:[%s18 + $0x80] sm:$0xff]
  %v5201 = vld [vmem:[%s18 + $0x88] sm:$0xff]
  %v5202 = vld [vmem:[%s18 + $0x90] sm:$0xff]
  %v5203 = vld [vmem:[%s18 + $0x98] sm:$0xff]
  %v5204 = vld [vmem:[%s18 + $0xa0] sm:$0xff]
  %v5205 = vld [vmem:[%s18 + $0xa8] sm:$0xff]
  %v5206 = vld [vmem:[%s18 + $0xb0] sm:$0xff]
  %v5207 = vld [vmem:[%s18 + $0xb8] sm:$0xff]
  %v5208 = vld [vmem:[%s18 + $0xc0] sm:$0xff]
  %v5209 = vld [vmem:[%s18 + $0xc8] sm:$0xff]
  %v5210 = vld [vmem:[%s18 + $0xd0] sm:$0xff]
  %v5211 = vld [vmem:[%s18 + $0xd8] sm:$0xff]
  %v5212 = vld [vmem:[%s18 + $0xe0] sm:$0xff]
  %v5213 = vld [vmem:[%s18 + $0xe8] sm:$0xff]
  %v5214 = vld [vmem:[%s18 + $0xf0] sm:$0xff]
  %v5215 = vld [vmem:[%s18 + $0xf8] sm:$0xff]
  %v5216 = vld [vmem:[%s18 + $0x100] sm:$0xff]
  %v5217 = vld [vmem:[%s18 + $0x108] sm:$0xff]
  %v5218 = vld [vmem:[%s18 + $0x110] sm:$0xff]
  %v5219 = vld [vmem:[%s18 + $0x118] sm:$0xff]
  %v5220 = vld [vmem:[%s18 + $0x120] sm:$0xff]
  %v5221 = vld [vmem:[%s18 + $0x128] sm:$0xff]
  %v5222 = vld [vmem:[%s18 + $0x130] sm:$0xff]
  %v5223 = vld [vmem:[%s18 + $0x138] sm:$0xff]
  %v5224 = vld [vmem:[%s18 + $0x140] sm:$0xff]
  %v5225 = vld [vmem:[%s18 + $0x148] sm:$0xff]
  %v5226 = vld [vmem:[%s18 + $0x150] sm:$0xff]
  %v5227 = vld [vmem:[%s18 + $0x158] sm:$0xff]
  %v5228 = vld [vmem:[%s18 + $0x160] sm:$0xff]
  %v5229 = vld [vmem:[%s18 + $0x168] sm:$0xff]
  %v5230 = vld [vmem:[%s18 + $0x170] sm:$0xff]
  %v5231 = vld [vmem:[%s18 + $0x178] sm:$0xff]
  %v5232 = vld [vmem:[%s18 + $0x180] sm:$0xff]
  %v5233 = vld [vmem:[%s18 + $0x188] sm:$0xff]
  %v5234 = vld [vmem:[%s18 + $0x190] sm:$0xff]
  %v5235 = vld [vmem:[%s18 + $0x198] sm:$0xff]
  %v5236 = vld [vmem:[%s18 + $0x1a0] sm:$0xff]
  %v5237 = vld [vmem:[%s18 + $0x1a8] sm:$0xff]
  %v5238 = vld [vmem:[%s18 + $0x1b0] sm:$0xff]
  %v5239 = vld [vmem:[%s18 + $0x1b8] sm:$0xff]
  %v5240 = vld [vmem:[%s18 + $0x1c0] sm:$0xff]
  %v5241 = vld [vmem:[%s18 + $0x1c8] sm:$0xff]
  %v5242 = vld [vmem:[%s18 + $0x1d0] sm:$0xff]
  %v5243 = vld [vmem:[%s18 + $0x1d8] sm:$0xff]
  %v5244 = vld [vmem:[%s18 + $0x1e0] sm:$0xff]
  %v5245 = vld [vmem:[%s18 + $0x1e8] sm:$0xff]
  %v5246 = vld [vmem:[%s18 + $0x1f0] sm:$0xff]
  %v5247 = vld [vmem:[%s18 + $0x1f8] sm:$0xff]
  %v5248 = vld [vmem:[%s18 + $0x200] sm:$0xff]
  %v5249 = vld [vmem:[%s18 + $0x208] sm:$0xff]
  %v5250 = vld [vmem:[%s18 + $0x210] sm:$0xff]
  %v5251 = vld [vmem:[%s18 + $0x218] sm:$0xff]
  %v5252 = vld [vmem:[%s18 + $0x220] sm:$0xff]
  %v5253 = vld [vmem:[%s18 + $0x228] sm:$0xff]
  %v5254 = vld [vmem:[%s18 + $0x230] sm:$0xff]
  %v5255 = vld [vmem:[%s18 + $0x238] sm:$0xff]
  %v5256 = vld [vmem:[%s18 + $0x240] sm:$0xff]
  %v5257 = vld [vmem:[%s18 + $0x248] sm:$0xff]
  %v5258 = vld [vmem:[%s18 + $0x250] sm:$0xff]
  %v5259 = vld [vmem:[%s18 + $0x258] sm:$0xff]
  %v5260 = vld [vmem:[%s18 + $0x260] sm:$0xff]
  %v5261 = vld [vmem:[%s18 + $0x268] sm:$0xff]
  %v5262 = vld [vmem:[%s18 + $0x270] sm:$0xff]
  %v5263 = vld [vmem:[%s18 + $0x278] sm:$0xff]
  %v5264 = vld [vmem:[%s18 + $0x280] sm:$0xff]
  %v5265 = vld [vmem:[%s18 + $0x288] sm:$0xff]
  %v5266 = vld [vmem:[%s18 + $0x290] sm:$0xff]
  %v5267 = vld [vmem:[%s18 + $0x298] sm:$0xff]
  %v5268 = vld [vmem:[%s18 + $0x2a0] sm:$0xff]
  %v5269 = vld [vmem:[%s18 + $0x2a8] sm:$0xff]
  %v5270 = vld [vmem:[%s18 + $0x2b0] sm:$0xff]
  %v5271 = vld [vmem:[%s18 + $0x2b8] sm:$0xff]
  %v5272 = vld [vmem:[%s18 + $0x2c0] sm:$0xff]
  %v5273 = vld [vmem:[%s18 + $0x2c8] sm:$0xff]
  %v5274 = vld [vmem:[%s18 + $0x2d0] sm:$0xff]
  %v5275 = vld [vmem:[%s18 + $0x2d8] sm:$0xff]
  %v5276 = vld [vmem:[%s18 + $0x2e0] sm:$0xff]
  %v5277 = vld [vmem:[%s18 + $0x2e8] sm:$0xff]
  %v5278 = vld [vmem:[%s18 + $0x2f0] sm:$0xff]
  %v5279 = vld [vmem:[%s18 + $0x2f8] sm:$0xff]
  %v5280 = vld [vmem:[%s18 + $0x300] sm:$0xff]
  %v5281 = vld [vmem:[%s18 + $0x308] sm:$0xff]
  %v5282 = vld [vmem:[%s18 + $0x310] sm:$0xff]
  %v5283 = vld [vmem:[%s18 + $0x318] sm:$0xff]
  %v5284 = vld [vmem:[%s18 + $0x320] sm:$0xff]
  %v5285 = vld [vmem:[%s18 + $0x328] sm:$0xff]
  %v5286 = vld [vmem:[%s18 + $0x330] sm:$0xff]
  %v5287 = vld [vmem:[%s18 + $0x338] sm:$0xff]
  %v5288 = vld [vmem:[%s18 + $0x340] sm:$0xff]
  %v5289 = vld [vmem:[%s18 + $0x348] sm:$0xff]
  %v5290 = vld [vmem:[%s18 + $0x350] sm:$0xff]
  %v5291 = vld [vmem:[%s18 + $0x358] sm:$0xff]
  %v5292 = vld [vmem:[%s18 + $0x360] sm:$0xff]
  %v5293 = vld [vmem:[%s18 + $0x368] sm:$0xff]
  %v5294 = vld [vmem:[%s18 + $0x370] sm:$0xff]
  %v5295 = vld [vmem:[%s18 + $0x378] sm:$0xff]
  %v5296 = vld [vmem:[%s18 + $0x380] sm:$0xff]
  %v5297 = vld [vmem:[%s18 + $0x388] sm:$0xff]
  %v5298 = vld [vmem:[%s18 + $0x390] sm:$0xff]
  %v5299 = vld [vmem:[%s18 + $0x398] sm:$0xff]
  %v5300 = vld [vmem:[%s18 + $0x3a0] sm:$0xff]
  %v5301 = vld [vmem:[%s18 + $0x3a8] sm:$0xff]
  %v5302 = vld [vmem:[%s18 + $0x3b0] sm:$0xff]
  %v5303 = vld [vmem:[%s18 + $0x3b8] sm:$0xff]
  %v5304 = vld [vmem:[%s18 + $0x3c0] sm:$0xff]
  %v5305 = vld [vmem:[%s18 + $0x3c8] sm:$0xff]
  %v5306 = vld [vmem:[%s18 + $0x3d0] sm:$0xff]
  %v5307 = vld [vmem:[%s18 + $0x3d8] sm:$0xff]
  %v5308 = vld [vmem:[%s18 + $0x3e0] sm:$0xff]
  %v5309 = vld [vmem:[%s18 + $0x3e8] sm:$0xff]
  %v5310 = vld [vmem:[%s18 + $0x3f0] sm:$0xff]
  %v5311 = vld [vmem:[%s18 + $0x3f8] sm:$0xff]
  %v5312 = vld [vmem:[%s19] sm:$0xf]
  %v5314 = vperm.slane %v5312, 0
  %v5315 = vperm.slane %v5312, 1
  %v5316 = vperm.slane %v5312, 2
  %v5317 = vperm.slane %v5312, 3
  %v5450 = vunpack.c.l.b16 %v5184
  %v5451 = vunpack.c.h.b16 %v5184
  %v5452 = vunpack.c.l.b16 %v5185
  %v5453 = vunpack.c.h.b16 %v5185
  %v5454 = vunpack.c.l.b16 %v5186
  %v5455 = vunpack.c.h.b16 %v5186
  %v5456 = vunpack.c.l.b16 %v5187
  %v5457 = vunpack.c.h.b16 %v5187
  %v5458 = vunpack.c.l.b16 %v5188
  %v5459 = vunpack.c.h.b16 %v5188
  %v5460 = vunpack.c.l.b16 %v5189
  %v5461 = vunpack.c.h.b16 %v5189
  %v5462 = vunpack.c.l.b16 %v5190
  %v5463 = vunpack.c.h.b16 %v5190
  %v5464 = vunpack.c.l.b16 %v5191
  %v5465 = vunpack.c.h.b16 %v5191
  %v5466 = vunpack.c.l.b16 %v5192
  %v5467 = vunpack.c.h.b16 %v5192
  %v5468 = vunpack.c.l.b16 %v5193
  %v5469 = vunpack.c.h.b16 %v5193
  %v5470 = vunpack.c.l.b16 %v5194
  %v5471 = vunpack.c.h.b16 %v5194
  %v5472 = vunpack.c.l.b16 %v5195
  %v5473 = vunpack.c.h.b16 %v5195
  %v5474 = vunpack.c.l.b16 %v5196
  %v5475 = vunpack.c.h.b16 %v5196
  %v5476 = vunpack.c.l.b16 %v5197
  %v5477 = vunpack.c.h.b16 %v5197
  %v5478 = vunpack.c.l.b16 %v5198
  %v5479 = vunpack.c.h.b16 %v5198
  %v5480 = vunpack.c.l.b16 %v5199
  %v5481 = vunpack.c.h.b16 %v5199
  %v5482 = vunpack.c.l.b16 %v5200
  %v5483 = vunpack.c.h.b16 %v5200
  %v5484 = vunpack.c.l.b16 %v5201
  %v5485 = vunpack.c.h.b16 %v5201
  %v5486 = vunpack.c.l.b16 %v5202
  %v5487 = vunpack.c.h.b16 %v5202
  %v5488 = vunpack.c.l.b16 %v5203
  %v5489 = vunpack.c.h.b16 %v5203
  %v5490 = vunpack.c.l.b16 %v5204
  %v5491 = vunpack.c.h.b16 %v5204
  %v5492 = vunpack.c.l.b16 %v5205
  %v5493 = vunpack.c.h.b16 %v5205
  %v5494 = vunpack.c.l.b16 %v5206
  %v5495 = vunpack.c.h.b16 %v5206
  %v5496 = vunpack.c.l.b16 %v5207
  %v5497 = vunpack.c.h.b16 %v5207
  %v5498 = vunpack.c.l.b16 %v5208
  %v5499 = vunpack.c.h.b16 %v5208
  %v5500 = vunpack.c.l.b16 %v5209
  %v5501 = vunpack.c.h.b16 %v5209
  %v5502 = vunpack.c.l.b16 %v5210
  %v5503 = vunpack.c.h.b16 %v5210
  %v5504 = vunpack.c.l.b16 %v5211
  %v5505 = vunpack.c.h.b16 %v5211
  %v5506 = vunpack.c.l.b16 %v5212
  %v5507 = vunpack.c.h.b16 %v5212
  %v5508 = vunpack.c.l.b16 %v5213
  %v5509 = vunpack.c.h.b16 %v5213
  %v5510 = vunpack.c.l.b16 %v5214
  %v5511 = vunpack.c.h.b16 %v5214
  %v5512 = vunpack.c.l.b16 %v5215
  %v5513 = vunpack.c.h.b16 %v5215
  %v5514 = vunpack.c.l.b16 %v5216
  %v5515 = vunpack.c.h.b16 %v5216
  %v5516 = vunpack.c.l.b16 %v5217
  %v5517 = vunpack.c.h.b16 %v5217
  %v5518 = vunpack.c.l.b16 %v5218
  %v5519 = vunpack.c.h.b16 %v5218
  %v5520 = vunpack.c.l.b16 %v5219
  %v5521 = vunpack.c.h.b16 %v5219
  %v5522 = vunpack.c.l.b16 %v5220
  %v5523 = vunpack.c.h.b16 %v5220
  %v5524 = vunpack.c.l.b16 %v5221
  %v5525 = vunpack.c.h.b16 %v5221
  %v5526 = vunpack.c.l.b16 %v5222
  %v5527 = vunpack.c.h.b16 %v5222
  %v5528 = vunpack.c.l.b16 %v5223
  %v5529 = vunpack.c.h.b16 %v5223
  %v5530 = vunpack.c.l.b16 %v5224
  %v5531 = vunpack.c.h.b16 %v5224
  %v5532 = vunpack.c.l.b16 %v5225
  %v5533 = vunpack.c.h.b16 %v5225
  %v5534 = vunpack.c.l.b16 %v5226
  %v5535 = vunpack.c.h.b16 %v5226
  %v5536 = vunpack.c.l.b16 %v5227
  %v5537 = vunpack.c.h.b16 %v5227
  %v5538 = vunpack.c.l.b16 %v5228
  %v5539 = vunpack.c.h.b16 %v5228
  %v5540 = vunpack.c.l.b16 %v5229
  %v5541 = vunpack.c.h.b16 %v5229
  %v5542 = vunpack.c.l.b16 %v5230
  %v5543 = vunpack.c.h.b16 %v5230
  %v5544 = vunpack.c.l.b16 %v5231
  %v5545 = vunpack.c.h.b16 %v5231
  %v5546 = vunpack.c.l.b16 %v5232
  %v5547 = vunpack.c.h.b16 %v5232
  %v5548 = vunpack.c.l.b16 %v5233
  %v5549 = vunpack.c.h.b16 %v5233
  %v5550 = vunpack.c.l.b16 %v5234
  %v5551 = vunpack.c.h.b16 %v5234
  %v5552 = vunpack.c.l.b16 %v5235
  %v5553 = vunpack.c.h.b16 %v5235
  %v5554 = vunpack.c.l.b16 %v5236
  %v5555 = vunpack.c.h.b16 %v5236
  %v5556 = vunpack.c.l.b16 %v5237
  %v5557 = vunpack.c.h.b16 %v5237
  %v5558 = vunpack.c.l.b16 %v5238
  %v5559 = vunpack.c.h.b16 %v5238
  %v5560 = vunpack.c.l.b16 %v5239
  %v5561 = vunpack.c.h.b16 %v5239
  %v5562 = vunpack.c.l.b16 %v5240
  %v5563 = vunpack.c.h.b16 %v5240
  %v5564 = vunpack.c.l.b16 %v5241
  %v5565 = vunpack.c.h.b16 %v5241
  %v5566 = vunpack.c.l.b16 %v5242
  %v5567 = vunpack.c.h.b16 %v5242
  %v5568 = vunpack.c.l.b16 %v5243
  %v5569 = vunpack.c.h.b16 %v5243
  %v5570 = vunpack.c.l.b16 %v5244
  %v5571 = vunpack.c.h.b16 %v5244
  %v5572 = vunpack.c.l.b16 %v5245
  %v5573 = vunpack.c.h.b16 %v5245
  %v5574 = vunpack.c.l.b16 %v5246
  %v5575 = vunpack.c.h.b16 %v5246
  %v5576 = vunpack.c.l.b16 %v5247
  %v5577 = vunpack.c.h.b16 %v5247
  %v5578 = vunpack.c.l.b16 %v5248
  %v5579 = vunpack.c.h.b16 %v5248
  %v5580 = vunpack.c.l.b16 %v5249
  %v5581 = vunpack.c.h.b16 %v5249
  %v5582 = vunpack.c.l.b16 %v5250
  %v5583 = vunpack.c.h.b16 %v5250
  %v5584 = vunpack.c.l.b16 %v5251
  %v5585 = vunpack.c.h.b16 %v5251
  %v5586 = vunpack.c.l.b16 %v5252
  %v5587 = vunpack.c.h.b16 %v5252
  %v5588 = vunpack.c.l.b16 %v5253
  %v5589 = vunpack.c.h.b16 %v5253
  %v5590 = vunpack.c.l.b16 %v5254
  %v5591 = vunpack.c.h.b16 %v5254
  %v5592 = vunpack.c.l.b16 %v5255
  %v5593 = vunpack.c.h.b16 %v5255
  %v5594 = vunpack.c.l.b16 %v5256
  %v5595 = vunpack.c.h.b16 %v5256
  %v5596 = vunpack.c.l.b16 %v5257
  %v5597 = vunpack.c.h.b16 %v5257
  %v5598 = vunpack.c.l.b16 %v5258
  %v5599 = vunpack.c.h.b16 %v5258
  %v5600 = vunpack.c.l.b16 %v5259
  %v5601 = vunpack.c.h.b16 %v5259
  %v5602 = vunpack.c.l.b16 %v5260
  %v5603 = vunpack.c.h.b16 %v5260
  %v5604 = vunpack.c.l.b16 %v5261
  %v5605 = vunpack.c.h.b16 %v5261
  %v5606 = vunpack.c.l.b16 %v5262
  %v5607 = vunpack.c.h.b16 %v5262
  %v5608 = vunpack.c.l.b16 %v5263
  %v5609 = vunpack.c.h.b16 %v5263
  %v5610 = vunpack.c.l.b16 %v5264
  %v5611 = vunpack.c.h.b16 %v5264
  %v5612 = vunpack.c.l.b16 %v5265
  %v5613 = vunpack.c.h.b16 %v5265
  %v5614 = vunpack.c.l.b16 %v5266
  %v5615 = vunpack.c.h.b16 %v5266
  %v5616 = vunpack.c.l.b16 %v5267
  %v5617 = vunpack.c.h.b16 %v5267
  %v5618 = vunpack.c.l.b16 %v5268
  %v5619 = vunpack.c.h.b16 %v5268
  %v5620 = vunpack.c.l.b16 %v5269
  %v5621 = vunpack.c.h.b16 %v5269
  %v5622 = vunpack.c.l.b16 %v5270
  %v5623 = vunpack.c.h.b16 %v5270
  %v5624 = vunpack.c.l.b16 %v5271
  %v5625 = vunpack.c.h.b16 %v5271
  %v5626 = vunpack.c.l.b16 %v5272
  %v5627 = vunpack.c.h.b16 %v5272
  %v5628 = vunpack.c.l.b16 %v5273
  %v5629 = vunpack.c.h.b16 %v5273
  %v5630 = vunpack.c.l.b16 %v5274
  %v5631 = vunpack.c.h.b16 %v5274
  %v5632 = vunpack.c.l.b16 %v5275
  %v5633 = vunpack.c.h.b16 %v5275
  %v5634 = vunpack.c.l.b16 %v5276
  %v5635 = vunpack.c.h.b16 %v5276
  %v5636 = vunpack.c.l.b16 %v5277
  %v5637 = vunpack.c.h.b16 %v5277
  %v5638 = vunpack.c.l.b16 %v5278
  %v5639 = vunpack.c.h.b16 %v5278
  %v5640 = vunpack.c.l.b16 %v5279
  %v5641 = vunpack.c.h.b16 %v5279
  %v5642 = vunpack.c.l.b16 %v5280
  %v5643 = vunpack.c.h.b16 %v5280
  %v5644 = vunpack.c.l.b16 %v5281
  %v5645 = vunpack.c.h.b16 %v5281
  %v5646 = vunpack.c.l.b16 %v5282
  %v5647 = vunpack.c.h.b16 %v5282
  %v5648 = vunpack.c.l.b16 %v5283
  %v5649 = vunpack.c.h.b16 %v5283
  %v5650 = vunpack.c.l.b16 %v5284
  %v5651 = vunpack.c.h.b16 %v5284
  %v5652 = vunpack.c.l.b16 %v5285
  %v5653 = vunpack.c.h.b16 %v5285
  %v5654 = vunpack.c.l.b16 %v5286
  %v5655 = vunpack.c.h.b16 %v5286
  %v5656 = vunpack.c.l.b16 %v5287
  %v5657 = vunpack.c.h.b16 %v5287
  %v5658 = vunpack.c.l.b16 %v5288
  %v5659 = vunpack.c.h.b16 %v5288
  %v5660 = vunpack.c.l.b16 %v5289
  %v5661 = vunpack.c.h.b16 %v5289
  %v5662 = vunpack.c.l.b16 %v5290
  %v5663 = vunpack.c.h.b16 %v5290
  %v5664 = vunpack.c.l.b16 %v5291
  %v5665 = vunpack.c.h.b16 %v5291
  %v5666 = vunpack.c.l.b16 %v5292
  %v5667 = vunpack.c.h.b16 %v5292
  %v5668 = vunpack.c.l.b16 %v5293
  %v5669 = vunpack.c.h.b16 %v5293
  %v5670 = vunpack.c.l.b16 %v5294
  %v5671 = vunpack.c.h.b16 %v5294
  %v5672 = vunpack.c.l.b16 %v5295
  %v5673 = vunpack.c.h.b16 %v5295
  %v5674 = vunpack.c.l.b16 %v5296
  %v5675 = vunpack.c.h.b16 %v5296
  %v5676 = vunpack.c.l.b16 %v5297
  %v5677 = vunpack.c.h.b16 %v5297
  %v5678 = vunpack.c.l.b16 %v5298
  %v5679 = vunpack.c.h.b16 %v5298
  %v5680 = vunpack.c.l.b16 %v5299
  %v5681 = vunpack.c.h.b16 %v5299
  %v5682 = vunpack.c.l.b16 %v5300
  %v5683 = vunpack.c.h.b16 %v5300
  %v5684 = vunpack.c.l.b16 %v5301
  %v5685 = vunpack.c.h.b16 %v5301
  %v5686 = vunpack.c.l.b16 %v5302
  %v5687 = vunpack.c.h.b16 %v5302
  %v5688 = vunpack.c.l.b16 %v5303
  %v5689 = vunpack.c.h.b16 %v5303
  %v5690 = vunpack.c.l.b16 %v5304
  %v5691 = vunpack.c.h.b16 %v5304
  %v5692 = vunpack.c.l.b16 %v5305
  %v5693 = vunpack.c.h.b16 %v5305
  %v5694 = vunpack.c.l.b16 %v5306
  %v5695 = vunpack.c.h.b16 %v5306
  %v5696 = vunpack.c.l.b16 %v5307
  %v5697 = vunpack.c.h.b16 %v5307
  %v5698 = vunpack.c.l.b16 %v5308
  %v5699 = vunpack.c.h.b16 %v5308
  %v5700 = vunpack.c.l.b16 %v5309
  %v5701 = vunpack.c.h.b16 %v5309
  %v5702 = vunpack.c.l.b16 %v5310
  %v5703 = vunpack.c.h.b16 %v5310
  %v5704 = vunpack.c.l.b16 %v5311
  %v5705 = vunpack.c.h.b16 %v5311
  %v5706 = vpack.c.b16 %v5454, %v5450
  %v5707 = vpack.c.b16 %v5455, %v5451
  %v5708 = vpack.c.b16 %v5456, %v5452
  %v5709 = vpack.c.b16 %v5457, %v5453
  %v5710 = vpack.c.b16 %v5462, %v5458
  %v5711 = vpack.c.b16 %v5463, %v5459
  %v5712 = vpack.c.b16 %v5464, %v5460
  %v5713 = vpack.c.b16 %v5465, %v5461
  %v5714 = vpack.c.b16 %v5470, %v5466
  %v5715 = vpack.c.b16 %v5471, %v5467
  %v5716 = vpack.c.b16 %v5472, %v5468
  %v5717 = vpack.c.b16 %v5473, %v5469
  %v5718 = vpack.c.b16 %v5478, %v5474
  %v5719 = vpack.c.b16 %v5479, %v5475
  %v5720 = vpack.c.b16 %v5480, %v5476
  %v5721 = vpack.c.b16 %v5481, %v5477
  %v5722 = vpack.c.b16 %v5486, %v5482
  %v5723 = vpack.c.b16 %v5487, %v5483
  %v5724 = vpack.c.b16 %v5488, %v5484
  %v5725 = vpack.c.b16 %v5489, %v5485
  %v5726 = vpack.c.b16 %v5494, %v5490
  %v5727 = vpack.c.b16 %v5495, %v5491
  %v5728 = vpack.c.b16 %v5496, %v5492
  %v5729 = vpack.c.b16 %v5497, %v5493
  %v5730 = vpack.c.b16 %v5502, %v5498
  %v5731 = vpack.c.b16 %v5503, %v5499
  %v5732 = vpack.c.b16 %v5504, %v5500
  %v5733 = vpack.c.b16 %v5505, %v5501
  %v5734 = vpack.c.b16 %v5510, %v5506
  %v5735 = vpack.c.b16 %v5511, %v5507
  %v5736 = vpack.c.b16 %v5512, %v5508
  %v5737 = vpack.c.b16 %v5513, %v5509
  %v5738 = vpack.c.b16 %v5518, %v5514
  %v5739 = vpack.c.b16 %v5519, %v5515
  %v5740 = vpack.c.b16 %v5520, %v5516
  %v5741 = vpack.c.b16 %v5521, %v5517
  %v5742 = vpack.c.b16 %v5526, %v5522
  %v5743 = vpack.c.b16 %v5527, %v5523
  %v5744 = vpack.c.b16 %v5528, %v5524
  %v5745 = vpack.c.b16 %v5529, %v5525
  %v5746 = vpack.c.b16 %v5534, %v5530
  %v5747 = vpack.c.b16 %v5535, %v5531
  %v5748 = vpack.c.b16 %v5536, %v5532
  %v5749 = vpack.c.b16 %v5537, %v5533
  %v5750 = vpack.c.b16 %v5542, %v5538
  %v5751 = vpack.c.b16 %v5543, %v5539
  %v5752 = vpack.c.b16 %v5544, %v5540
  %v5753 = vpack.c.b16 %v5545, %v5541
  %v5754 = vpack.c.b16 %v5550, %v5546
  %v5755 = vpack.c.b16 %v5551, %v5547
  %v5756 = vpack.c.b16 %v5552, %v5548
  %v5757 = vpack.c.b16 %v5553, %v5549
  %v5758 = vpack.c.b16 %v5558, %v5554
  %v5759 = vpack.c.b16 %v5559, %v5555
  %v5760 = vpack.c.b16 %v5560, %v5556
  %v5761 = vpack.c.b16 %v5561, %v5557
  %v5762 = vpack.c.b16 %v5566, %v5562
  %v5763 = vpack.c.b16 %v5567, %v5563
  %v5764 = vpack.c.b16 %v5568, %v5564
  %v5765 = vpack.c.b16 %v5569, %v5565
  %v5766 = vpack.c.b16 %v5574, %v5570
  %v5767 = vpack.c.b16 %v5575, %v5571
  %v5768 = vpack.c.b16 %v5576, %v5572
  %v5769 = vpack.c.b16 %v5577, %v5573
  %v5770 = vpack.c.b16 %v5582, %v5578
  %v5771 = vpack.c.b16 %v5583, %v5579
  %v5772 = vpack.c.b16 %v5584, %v5580
  %v5773 = vpack.c.b16 %v5585, %v5581
  %v5774 = vpack.c.b16 %v5590, %v5586
  %v5775 = vpack.c.b16 %v5591, %v5587
  %v5776 = vpack.c.b16 %v5592, %v5588
  %v5777 = vpack.c.b16 %v5593, %v5589
  %v5778 = vpack.c.b16 %v5598, %v5594
  %v5779 = vpack.c.b16 %v5599, %v5595
  %v5780 = vpack.c.b16 %v5600, %v5596
  %v5781 = vpack.c.b16 %v5601, %v5597
  %v5782 = vpack.c.b16 %v5606, %v5602
  %v5783 = vpack.c.b16 %v5607, %v5603
  %v5784 = vpack.c.b16 %v5608, %v5604
  %v5785 = vpack.c.b16 %v5609, %v5605
  %v5786 = vpack.c.b16 %v5614, %v5610
  %v5787 = vpack.c.b16 %v5615, %v5611
  %v5788 = vpack.c.b16 %v5616, %v5612
  %v5789 = vpack.c.b16 %v5617, %v5613
  %v5790 = vpack.c.b16 %v5622, %v5618
  %v5791 = vpack.c.b16 %v5623, %v5619
  %v5792 = vpack.c.b16 %v5624, %v5620
  %v5793 = vpack.c.b16 %v5625, %v5621
  %v5794 = vpack.c.b16 %v5630, %v5626
  %v5795 = vpack.c.b16 %v5631, %v5627
  %v5796 = vpack.c.b16 %v5632, %v5628
  %v5797 = vpack.c.b16 %v5633, %v5629
  %v5798 = vpack.c.b16 %v5638, %v5634
  %v5799 = vpack.c.b16 %v5639, %v5635
  %v5800 = vpack.c.b16 %v5640, %v5636
  %v5801 = vpack.c.b16 %v5641, %v5637
  %v5802 = vpack.c.b16 %v5646, %v5642
  %v5803 = vpack.c.b16 %v5647, %v5643
  %v5804 = vpack.c.b16 %v5648, %v5644
  %v5805 = vpack.c.b16 %v5649, %v5645
  %v5806 = vpack.c.b16 %v5654, %v5650
  %v5807 = vpack.c.b16 %v5655, %v5651
  %v5808 = vpack.c.b16 %v5656, %v5652
  %v5809 = vpack.c.b16 %v5657, %v5653
  %v5810 = vpack.c.b16 %v5662, %v5658
  %v5811 = vpack.c.b16 %v5663, %v5659
  %v5812 = vpack.c.b16 %v5664, %v5660
  %v5813 = vpack.c.b16 %v5665, %v5661
  %v5814 = vpack.c.b16 %v5670, %v5666
  %v5815 = vpack.c.b16 %v5671, %v5667
  %v5816 = vpack.c.b16 %v5672, %v5668
  %v5817 = vpack.c.b16 %v5673, %v5669
  %v5818 = vpack.c.b16 %v5678, %v5674
  %v5819 = vpack.c.b16 %v5679, %v5675
  %v5820 = vpack.c.b16 %v5680, %v5676
  %v5821 = vpack.c.b16 %v5681, %v5677
  %v5822 = vpack.c.b16 %v5686, %v5682
  %v5823 = vpack.c.b16 %v5687, %v5683
  %v5824 = vpack.c.b16 %v5688, %v5684
  %v5825 = vpack.c.b16 %v5689, %v5685
  %v5826 = vpack.c.b16 %v5694, %v5690
  %v5827 = vpack.c.b16 %v5695, %v5691
  %v5828 = vpack.c.b16 %v5696, %v5692
  %v5829 = vpack.c.b16 %v5697, %v5693
  %v5830 = vpack.c.b16 %v5702, %v5698
  %v5831 = vpack.c.b16 %v5703, %v5699
  %v5832 = vpack.c.b16 %v5704, %v5700
  %v5833 = vpack.c.b16 %v5705, %v5701
  %5962 = vmatpush.bf16.msra.mxu0 %v5734
  %5963 = vmatpush.bf16.msra.mxu0 %v5730
  %5964 = vmatpush.bf16.msra.mxu0 %v5726
  %5965 = vmatpush.bf16.msra.mxu0 %v5722
  %5966 = vmatpush.bf16.msra.mxu0 %v5718
  %5967 = vmatpush.bf16.msra.mxu0 %v5714
  %5968 = vmatpush.bf16.msra.mxu0 %v5710
  %5969 = vmatpush.bf16.msra.mxu0 %v5706
  %5970 = vmatmul.bf16.gmra.mxu0 %v5180
  %v5971 = vpop.f32.mrf.mxu0
  %v5972 = vadd.f32 %v5314, %v5971
  %v5973 = vpop.f32.mrf.mxu0
  %5974 = vdwg.mxu0
  %5975 = vmatpush.bf16.msra.mxu0 %v5766
  %5976 = vmatpush.bf16.msra.mxu0 %v5762
  %5977 = vmatpush.bf16.msra.mxu0 %v5758
  %5978 = vmatpush.bf16.msra.mxu0 %v5754
  %5979 = vmatpush.bf16.msra.mxu0 %v5750
  %5980 = vmatpush.bf16.msra.mxu0 %v5746
  %5981 = vmatpush.bf16.msra.mxu0 %v5742
  %5982 = vmatpush.bf16.msra.mxu0 %v5738
  %5983 = vmatmul.bf16.gmra.mxu0 %v5181
  %v5984 = vpop.f32.mrf.mxu0
  %v5985 = vadd.f32 %v5972, %v5984
  %v5986 = vpop.f32.mrf.mxu0
  %5987 = vdwg.mxu0
  %5988 = vmatpush.bf16.msra.mxu0 %v5798
  %5989 = vmatpush.bf16.msra.mxu0 %v5794
  %5990 = vmatpush.bf16.msra.mxu0 %v5790
  %5991 = vmatpush.bf16.msra.mxu0 %v5786
  %5992 = vmatpush.bf16.msra.mxu0 %v5782
  %5993 = vmatpush.bf16.msra.mxu0 %v5778
  %5994 = vmatpush.bf16.msra.mxu0 %v5774
  %5995 = vmatpush.bf16.msra.mxu0 %v5770
  %5996 = vmatmul.bf16.gmra.mxu0 %v5182
  %v5997 = vpop.f32.mrf.mxu0
  %v5998 = vadd.f32 %v5985, %v5997
  %v5999 = vpop.f32.mrf.mxu0
  %6000 = vdwg.mxu0
  %6001 = vmatpush.bf16.msra.mxu0 %v5830
  %6002 = vmatpush.bf16.msra.mxu0 %v5826
  %6003 = vmatpush.bf16.msra.mxu0 %v5822
  %6004 = vmatpush.bf16.msra.mxu0 %v5818
  %6005 = vmatpush.bf16.msra.mxu0 %v5814
  %6006 = vmatpush.bf16.msra.mxu0 %v5810
  %6007 = vmatpush.bf16.msra.mxu0 %v5806
  %6008 = vmatpush.bf16.msra.mxu0 %v5802
  %6009 = vmatmul.bf16.gmra.mxu0 %v5183
  %v6010 = vpop.f32.mrf.mxu0
  %v6011 = vadd.f32 %v5998, %v6010
  %v6012 = vpop.f32.mrf.mxu0
  %6013 = vdwg.mxu0
  %6014 = vmatpush.bf16.msra.mxu0 %v5735
  %6015 = vmatpush.bf16.msra.mxu0 %v5731
  %6016 = vmatpush.bf16.msra.mxu0 %v5727
  %6017 = vmatpush.bf16.msra.mxu0 %v5723
  %6018 = vmatpush.bf16.msra.mxu0 %v5719
  %6019 = vmatpush.bf16.msra.mxu0 %v5715
  %6020 = vmatpush.bf16.msra.mxu0 %v5711
  %6021 = vmatpush.bf16.msra.mxu0 %v5707
  %6022 = vmatmul.bf16.gmra.mxu0 %v5180
  %v6023 = vpop.f32.mrf.mxu0
  %v6024 = vadd.f32 %v5315, %v6023
  %v6025 = vpop.f32.mrf.mxu0
  %6026 = vdwg.mxu0
  %6027 = vmatpush.bf16.msra.mxu0 %v5767
  %6028 = vmatpush.bf16.msra.mxu0 %v5763
  %6029 = vmatpush.bf16.msra.mxu0 %v5759
  %6030 = vmatpush.bf16.msra.mxu0 %v5755
  %6031 = vmatpush.bf16.msra.mxu0 %v5751
  %6032 = vmatpush.bf16.msra.mxu0 %v5747
  %6033 = vmatpush.bf16.msra.mxu0 %v5743
  %6034 = vmatpush.bf16.msra.mxu0 %v5739
  %6035 = vmatmul.bf16.gmra.mxu0 %v5181
  %v6036 = vpop.f32.mrf.mxu0
  %v6037 = vadd.f32 %v6024, %v6036
  %v6038 = vpop.f32.mrf.mxu0
  %6039 = vdwg.mxu0
  %6040 = vmatpush.bf16.msra.mxu0 %v5799
  %6041 = vmatpush.bf16.msra.mxu0 %v5795
  %6042 = vmatpush.bf16.msra.mxu0 %v5791
  %6043 = vmatpush.bf16.msra.mxu0 %v5787
  %6044 = vmatpush.bf16.msra.mxu0 %v5783
  %6045 = vmatpush.bf16.msra.mxu0 %v5779
  %6046 = vmatpush.bf16.msra.mxu0 %v5775
  %6047 = vmatpush.bf16.msra.mxu0 %v5771
  %6048 = vmatmul.bf16.gmra.mxu0 %v5182
  %v6049 = vpop.f32.mrf.mxu0
  %v6050 = vadd.f32 %v6037, %v6049
  %v6051 = vpop.f32.mrf.mxu0
  %6052 = vdwg.mxu0
  %6053 = vmatpush.bf16.msra.mxu0 %v5831
  %6054 = vmatpush.bf16.msra.mxu0 %v5827
  %6055 = vmatpush.bf16.msra.mxu0 %v5823
  %6056 = vmatpush.bf16.msra.mxu0 %v5819
  %6057 = vmatpush.bf16.msra.mxu0 %v5815
  %6058 = vmatpush.bf16.msra.mxu0 %v5811
  %6059 = vmatpush.bf16.msra.mxu0 %v5807
  %6060 = vmatpush.bf16.msra.mxu0 %v5803
  %6061 = vmatmul.bf16.gmra.mxu0 %v5183
  %v6062 = vpop.f32.mrf.mxu0
  %v6063 = vadd.f32 %v6050, %v6062
  %v6064 = vpop.f32.mrf.mxu0
  %6065 = vdwg.mxu0
  %6066 = vmatpush.bf16.msra.mxu0 %v5736
  %6067 = vmatpush.bf16.msra.mxu0 %v5732
  %6068 = vmatpush.bf16.msra.mxu0 %v5728
  %6069 = vmatpush.bf16.msra.mxu0 %v5724
  %6070 = vmatpush.bf16.msra.mxu0 %v5720
  %6071 = vmatpush.bf16.msra.mxu0 %v5716
  %6072 = vmatpush.bf16.msra.mxu0 %v5712
  %6073 = vmatpush.bf16.msra.mxu0 %v5708
  %6074 = vmatmul.bf16.gmra.mxu0 %v5180
  %v6075 = vpop.f32.mrf.mxu0
  %v6076 = vadd.f32 %v5316, %v6075
  %v6077 = vpop.f32.mrf.mxu0
  %6078 = vdwg.mxu0
  %6079 = vmatpush.bf16.msra.mxu0 %v5768
  %6080 = vmatpush.bf16.msra.mxu0 %v5764
  %6081 = vmatpush.bf16.msra.mxu0 %v5760
  %6082 = vmatpush.bf16.msra.mxu0 %v5756
  %6083 = vmatpush.bf16.msra.mxu0 %v5752
  %6084 = vmatpush.bf16.msra.mxu0 %v5748
  %6085 = vmatpush.bf16.msra.mxu0 %v5744
  %6086 = vmatpush.bf16.msra.mxu0 %v5740
  %6087 = vmatmul.bf16.gmra.mxu0 %v5181
  %v6088 = vpop.f32.mrf.mxu0
  %v6089 = vadd.f32 %v6076, %v6088
  %v6090 = vpop.f32.mrf.mxu0
  %6091 = vdwg.mxu0
  %6092 = vmatpush.bf16.msra.mxu0 %v5800
  %6093 = vmatpush.bf16.msra.mxu0 %v5796
  %6094 = vmatpush.bf16.msra.mxu0 %v5792
  %6095 = vmatpush.bf16.msra.mxu0 %v5788
  %6096 = vmatpush.bf16.msra.mxu0 %v5784
  %6097 = vmatpush.bf16.msra.mxu0 %v5780
  %6098 = vmatpush.bf16.msra.mxu0 %v5776
  %6099 = vmatpush.bf16.msra.mxu0 %v5772
  %6100 = vmatmul.bf16.gmra.mxu0 %v5182
  %v6101 = vpop.f32.mrf.mxu0
  %v6102 = vadd.f32 %v6089, %v6101
  %v6103 = vpop.f32.mrf.mxu0
  %6104 = vdwg.mxu0
  %6105 = vmatpush.bf16.msra.mxu0 %v5832
  %6106 = vmatpush.bf16.msra.mxu0 %v5828
  %6107 = vmatpush.bf16.msra.mxu0 %v5824
  %6108 = vmatpush.bf16.msra.mxu0 %v5820
  %6109 = vmatpush.bf16.msra.mxu0 %v5816
  %6110 = vmatpush.bf16.msra.mxu0 %v5812
  %6111 = vmatpush.bf16.msra.mxu0 %v5808
  %6112 = vmatpush.bf16.msra.mxu0 %v5804
  %6113 = vmatmul.bf16.gmra.mxu0 %v5183
  %v6114 = vpop.f32.mrf.mxu0
  %v6115 = vadd.f32 %v6102, %v6114
  %v6116 = vpop.f32.mrf.mxu0
  %6117 = vdwg.mxu0
  %6118 = vmatpush.bf16.msra.mxu0 %v5737
  %6119 = vmatpush.bf16.msra.mxu0 %v5733
  %6120 = vmatpush.bf16.msra.mxu0 %v5729
  %6121 = vmatpush.bf16.msra.mxu0 %v5725
  %6122 = vmatpush.bf16.msra.mxu0 %v5721
  %6123 = vmatpush.bf16.msra.mxu0 %v5717
  %6124 = vmatpush.bf16.msra.mxu0 %v5713
  %6125 = vmatpush.bf16.msra.mxu0 %v5709
  %6126 = vmatmul.bf16.gmra.mxu0 %v5180
  %v6127 = vpop.f32.mrf.mxu0
  %v6128 = vadd.f32 %v5317, %v6127
  %v6129 = vpop.f32.mrf.mxu0
  %6130 = vdwg.mxu0
  %6131 = vmatpush.bf16.msra.mxu0 %v5769
  %6132 = vmatpush.bf16.msra.mxu0 %v5765
  %6133 = vmatpush.bf16.msra.mxu0 %v5761
  %6134 = vmatpush.bf16.msra.mxu0 %v5757
  %6135 = vmatpush.bf16.msra.mxu0 %v5753
  %6136 = vmatpush.bf16.msra.mxu0 %v5749
  %6137 = vmatpush.bf16.msra.mxu0 %v5745
  %6138 = vmatpush.bf16.msra.mxu0 %v5741
  %6139 = vmatmul.bf16.gmra.mxu0 %v5181
  %v6140 = vpop.f32.mrf.mxu0
  %v6141 = vadd.f32 %v6128, %v6140
  %v6142 = vpop.f32.mrf.mxu0
  %6143 = vdwg.mxu0
  %6144 = vmatpush.bf16.msra.mxu0 %v5801
  %6145 = vmatpush.bf16.msra.mxu0 %v5797
  %6146 = vmatpush.bf16.msra.mxu0 %v5793
  %6147 = vmatpush.bf16.msra.mxu0 %v5789
  %6148 = vmatpush.bf16.msra.mxu0 %v5785
  %6149 = vmatpush.bf16.msra.mxu0 %v5781
  %6150 = vmatpush.bf16.msra.mxu0 %v5777
  %6151 = vmatpush.bf16.msra.mxu0 %v5773
  %6152 = vmatmul.bf16.gmra.mxu0 %v5182
  %v6153 = vpop.f32.mrf.mxu0
  %v6154 = vadd.f32 %v6141, %v6153
  %v6155 = vpop.f32.mrf.mxu0
  %6156 = vdwg.mxu0
  %6157 = vmatpush.bf16.msra.mxu0 %v5833
  %6158 = vmatpush.bf16.msra.mxu0 %v5829
  %6159 = vmatpush.bf16.msra.mxu0 %v5825
  %6160 = vmatpush.bf16.msra.mxu0 %v5821
  %6161 = vmatpush.bf16.msra.mxu0 %v5817
  %6162 = vmatpush.bf16.msra.mxu0 %v5813
  %6163 = vmatpush.bf16.msra.mxu0 %v5809
  %6164 = vmatpush.bf16.msra.mxu0 %v5805
  %6165 = vmatmul.bf16.gmra.mxu0 %v5183
  %v6166 = vpop.f32.mrf.mxu0
  %v6167 = vadd.f32 %v6154, %v6166
  %v6168 = vpop.f32.mrf.mxu0
  %6169 = vdwg.mxu0
  %v6170 = vmax.f32 %v6011, 0.0
  %v6171 = vmax.f32 %v6063, 0.0
  %v6172 = vmax.f32 %v6115, 0.0
  %v6173 = vmax.f32 %v6167, 0.0
  %v6174 = vpack.c.bf16 %v6170, %v6170
  %v6175 = vpack.c.bf16 %v6171, %v6171
  %v6176 = vpack.c.bf16 %v6172, %v6172
  %v6177 = vpack.c.bf16 %v6173, %v6173
  %v6178 = vld [vmem:[%s20] sm:$0xf]
  %v6179 = vld [vmem:[%s20 + $0x4] sm:$0xf]
  %v6180 = vld [vmem:[%s20 + $0x8] sm:$0xf]
  %v6181 = vld [vmem:[%s20 + $0xc] sm:$0xf]
  %v6182 = vld [vmem:[%s20 + $0x10] sm:$0xf]
  %v6183 = vld [vmem:[%s20 + $0x14] sm:$0xf]
  %v6184 = vld [vmem:[%s20 + $0x18] sm:$0xf]
  %v6185 = vld [vmem:[%s20 + $0x1c] sm:$0xf]
  %v6186 = vld [vmem:[%s20 + $0x20] sm:$0xf]
  %v6187 = vld [vmem:[%s20 + $0x24] sm:$0xf]
  %v6188 = vld [vmem:[%s20 + $0x28] sm:$0xf]
  %v6189 = vld [vmem:[%s20 + $0x2c] sm:$0xf]
  %v6190 = vld [vmem:[%s20 + $0x30] sm:$0xf]
  %v6191 = vld [vmem:[%s20 + $0x34] sm:$0xf]
  %v6192 = vld [vmem:[%s20 + $0x38] sm:$0xf]
  %v6193 = vld [vmem:[%s20 + $0x3c] sm:$0xf]
  %v6194 = vld [vmem:[%s20 + $0x40] sm:$0xf]
  %v6195 = vld [vmem:[%s20 + $0x44] sm:$0xf]
  %v6196 = vld [vmem:[%s20 + $0x48] sm:$0xf]
  %v6197 = vld [vmem:[%s20 + $0x4c] sm:$0xf]
  %v6198 = vld [vmem:[%s20 + $0x50] sm:$0xf]
  %v6199 = vld [vmem:[%s20 + $0x54] sm:$0xf]
  %v6200 = vld [vmem:[%s20 + $0x58] sm:$0xf]
  %v6201 = vld [vmem:[%s20 + $0x5c] sm:$0xf]
  %v6202 = vld [vmem:[%s20 + $0x60] sm:$0xf]
  %v6203 = vld [vmem:[%s20 + $0x64] sm:$0xf]
  %v6204 = vld [vmem:[%s20 + $0x68] sm:$0xf]
  %v6205 = vld [vmem:[%s20 + $0x6c] sm:$0xf]
  %v6206 = vld [vmem:[%s20 + $0x70] sm:$0xf]
  %v6207 = vld [vmem:[%s20 + $0x74] sm:$0xf]
  %v6208 = vld [vmem:[%s20 + $0x78] sm:$0xf]
  %v6209 = vld [vmem:[%s20 + $0x7c] sm:$0xf]
  %v6210 = vld [vmem:[%s20 + $0x80] sm:$0xf]
  %v6211 = vld [vmem:[%s20 + $0x84] sm:$0xf]
  %v6212 = vld [vmem:[%s20 + $0x88] sm:$0xf]
  %v6213 = vld [vmem:[%s20 + $0x8c] sm:$0xf]
  %v6214 = vld [vmem:[%s20 + $0x90] sm:$0xf]
  %v6215 = vld [vmem:[%s20 + $0x94] sm:$0xf]
  %v6216 = vld [vmem:[%s20 + $0x98] sm:$0xf]
  %v6217 = vld [vmem:[%s20 + $0x9c] sm:$0xf]
  %v6218 = vld [vmem:[%s20 + $0xa0] sm:$0xf]
  %v6219 = vld [vmem:[%s20 + $0xa4] sm:$0xf]
  %v6220 = vld [vmem:[%s20 + $0xa8] sm:$0xf]
  %v6221 = vld [vmem:[%s20 + $0xac] sm:$0xf]
  %v6222 = vld [vmem:[%s20 + $0xb0] sm:$0xf]
  %v6223 = vld [vmem:[%s20 + $0xb4] sm:$0xf]
  %v6224 = vld [vmem:[%s20 + $0xb8] sm:$0xf]
  %v6225 = vld [vmem:[%s20 + $0xbc] sm:$0xf]
  %v6226 = vld [vmem:[%s20 + $0xc0] sm:$0xf]
  %v6227 = vld [vmem:[%s20 + $0xc4] sm:$0xf]
  %v6228 = vld [vmem:[%s20 + $0xc8] sm:$0xf]
  %v6229 = vld [vmem:[%s20 + $0xcc] sm:$0xf]
  %v6230 = vld [vmem:[%s20 + $0xd0] sm:$0xf]
  %v6231 = vld [vmem:[%s20 + $0xd4] sm:$0xf]
  %v6232 = vld [vmem:[%s20 + $0xd8] sm:$0xf]
  %v6233 = vld [vmem:[%s20 + $0xdc] sm:$0xf]
  %v6234 = vld [vmem:[%s20 + $0xe0] sm:$0xf]
  %v6235 = vld [vmem:[%s20 + $0xe4] sm:$0xf]
  %v6236 = vld [vmem:[%s20 + $0xe8] sm:$0xf]
  %v6237 = vld [vmem:[%s20 + $0xec] sm:$0xf]
  %v6238 = vld [vmem:[%s20 + $0xf0] sm:$0xf]
  %v6239 = vld [vmem:[%s20 + $0xf4] sm:$0xf]
  %v6240 = vld [vmem:[%s20 + $0xf8] sm:$0xf]
  %v6241 = vld [vmem:[%s20 + $0xfc] sm:$0xf]
  %v6242 = vld [vmem:[%s21] sm:$0x1]
  %v6244 = vperm.slane %v6242, 0
  %v6310 = vunpack.c.l.b16 %v6178
  %v6311 = vunpack.c.l.b16 %v6179
  %v6312 = vunpack.c.l.b16 %v6180
  %v6313 = vunpack.c.l.b16 %v6181
  %v6314 = vunpack.c.l.b16 %v6182
  %v6315 = vunpack.c.l.b16 %v6183
  %v6316 = vunpack.c.l.b16 %v6184
  %v6317 = vunpack.c.l.b16 %v6185
  %v6318 = vunpack.c.l.b16 %v6186
  %v6319 = vunpack.c.l.b16 %v6187
  %v6320 = vunpack.c.l.b16 %v6188
  %v6321 = vunpack.c.l.b16 %v6189
  %v6322 = vunpack.c.l.b16 %v6190
  %v6323 = vunpack.c.l.b16 %v6191
  %v6324 = vunpack.c.l.b16 %v6192
  %v6325 = vunpack.c.l.b16 %v6193
  %v6326 = vunpack.c.l.b16 %v6194
  %v6327 = vunpack.c.l.b16 %v6195
  %v6328 = vunpack.c.l.b16 %v6196
  %v6329 = vunpack.c.l.b16 %v6197
  %v6330 = vunpack.c.l.b16 %v6198
  %v6331 = vunpack.c.l.b16 %v6199
  %v6332 = vunpack.c.l.b16 %v6200
  %v6333 = vunpack.c.l.b16 %v6201
  %v6334 = vunpack.c.l.b16 %v6202
  %v6335 = vunpack.c.l.b16 %v6203
  %v6336 = vunpack.c.l.b16 %v6204
  %v6337 = vunpack.c.l.b16 %v6205
  %v6338 = vunpack.c.l.b16 %v6206
  %v6339 = vunpack.c.l.b16 %v6207
  %v6340 = vunpack.c.l.b16 %v6208
  %v6341 = vunpack.c.l.b16 %v6209
  %v6342 = vunpack.c.l.b16 %v6210
  %v6343 = vunpack.c.l.b16 %v6211
  %v6344 = vunpack.c.l.b16 %v6212
  %v6345 = vunpack.c.l.b16 %v6213
  %v6346 = vunpack.c.l.b16 %v6214
  %v6347 = vunpack.c.l.b16 %v6215
  %v6348 = vunpack.c.l.b16 %v6216
  %v6349 = vunpack.c.l.b16 %v6217
  %v6350 = vunpack.c.l.b16 %v6218
  %v6351 = vunpack.c.l.b16 %v6219
  %v6352 = vunpack.c.l.b16 %v6220
  %v6353 = vunpack.c.l.b16 %v6221
  %v6354 = vunpack.c.l.b16 %v6222
  %v6355 = vunpack.c.l.b16 %v6223
  %v6356 = vunpack.c.l.b16 %v6224
  %v6357 = vunpack.c.l.b16 %v6225
  %v6358 = vunpack.c.l.b16 %v6226
  %v6359 = vunpack.c.l.b16 %v6227
  %v6360 = vunpack.c.l.b16 %v6228
  %v6361 = vunpack.c.l.b16 %v6229
  %v6362 = vunpack.c.l.b16 %v6230
  %v6363 = vunpack.c.l.b16 %v6231
  %v6364 = vunpack.c.l.b16 %v6232
  %v6365 = vunpack.c.l.b16 %v6233
  %v6366 = vunpack.c.l.b16 %v6234
  %v6367 = vunpack.c.l.b16 %v6235
  %v6368 = vunpack.c.l.b16 %v6236
  %v6369 = vunpack.c.l.b16 %v6237
  %v6370 = vunpack.c.l.b16 %v6238
  %v6371 = vunpack.c.l.b16 %v6239
  %v6372 = vunpack.c.l.b16 %v6240
  %v6373 = vunpack.c.l.b16 %v6241
  %v6374 = vpack.c.b16 %v6311, %v6310
  %v6375 = vpack.c.b16 %v6313, %v6312
  %v6376 = vpack.c.b16 %v6315, %v6314
  %v6377 = vpack.c.b16 %v6317, %v6316
  %v6378 = vpack.c.b16 %v6319, %v6318
  %v6379 = vpack.c.b16 %v6321, %v6320
  %v6380 = vpack.c.b16 %v6323, %v6322
  %v6381 = vpack.c.b16 %v6325, %v6324
  %v6382 = vpack.c.b16 %v6327, %v6326
  %v6383 = vpack.c.b16 %v6329, %v6328
  %v6384 = vpack.c.b16 %v6331, %v6330
  %v6385 = vpack.c.b16 %v6333, %v6332
  %v6386 = vpack.c.b16 %v6335, %v6334
  %v6387 = vpack.c.b16 %v6337, %v6336
  %v6388 = vpack.c.b16 %v6339, %v6338
  %v6389 = vpack.c.b16 %v6341, %v6340
  %v6390 = vpack.c.b16 %v6343, %v6342
  %v6391 = vpack.c.b16 %v6345, %v6344
  %v6392 = vpack.c.b16 %v6347, %v6346
  %v6393 = vpack.c.b16 %v6349, %v6348
  %v6394 = vpack.c.b16 %v6351, %v6350
  %v6395 = vpack.c.b16 %v6353, %v6352
  %v6396 = vpack.c.b16 %v6355, %v6354
  %v6397 = vpack.c.b16 %v6357, %v6356
  %v6398 = vpack.c.b16 %v6359, %v6358
  %v6399 = vpack.c.b16 %v6361, %v6360
  %v6400 = vpack.c.b16 %v6363, %v6362
  %v6401 = vpack.c.b16 %v6365, %v6364
  %v6402 = vpack.c.b16 %v6367, %v6366
  %v6403 = vpack.c.b16 %v6369, %v6368
  %v6404 = vpack.c.b16 %v6371, %v6370
  %v6405 = vpack.c.b16 %v6373, %v6372
  %6438 = vmatpush.bf16.msra.mxu0 %v6381
  %6439 = vmatpush.bf16.msra.mxu0 %v6380
  %6440 = vmatpush.bf16.msra.mxu0 %v6379
  %6441 = vmatpush.bf16.msra.mxu0 %v6378
  %6442 = vmatpush.bf16.msra.mxu0 %v6377
  %6443 = vmatpush.bf16.msra.mxu0 %v6376
  %6444 = vmatpush.bf16.msra.mxu0 %v6375
  %6445 = vmatpush.bf16.msra.mxu0 %v6374
  %6446 = vmatmul.bf16.gmra.mxu0 %v6174
  %v6447 = vpop.f32.mrf.mxu0
  %v6448 = vadd.f32 %v6244, %v6447
  %v6449 = vpop.f32.mrf.mxu0
  %6450 = vdwg.mxu0
  %6451 = vmatpush.bf16.msra.mxu0 %v6389
  %6452 = vmatpush.bf16.msra.mxu0 %v6388
  %6453 = vmatpush.bf16.msra.mxu0 %v6387
  %6454 = vmatpush.bf16.msra.mxu0 %v6386
  %6455 = vmatpush.bf16.msra.mxu0 %v6385
  %6456 = vmatpush.bf16.msra.mxu0 %v6384
  %6457 = vmatpush.bf16.msra.mxu0 %v6383
  %6458 = vmatpush.bf16.msra.mxu0 %v6382
  %6459 = vmatmul.bf16.gmra.mxu0 %v6175
  %v6460 = vpop.f32.mrf.mxu0
  %v6461 = vadd.f32 %v6448, %v6460
  %v6462 = vpop.f32.mrf.mxu0
  %6463 = vdwg.mxu0
  %6464 = vmatpush.bf16.msra.mxu0 %v6397
  %6465 = vmatpush.bf16.msra.mxu0 %v6396
  %6466 = vmatpush.bf16.msra.mxu0 %v6395
  %6467 = vmatpush.bf16.msra.mxu0 %v6394
  %6468 = vmatpush.bf16.msra.mxu0 %v6393
  %6469 = vmatpush.bf16.msra.mxu0 %v6392
  %6470 = vmatpush.bf16.msra.mxu0 %v6391
  %6471 = vmatpush.bf16.msra.mxu0 %v6390
  %6472 = vmatmul.bf16.gmra.mxu0 %v6176
  %v6473 = vpop.f32.mrf.mxu0
  %v6474 = vadd.f32 %v6461, %v6473
  %v6475 = vpop.f32.mrf.mxu0
  %6476 = vdwg.mxu0
  %6477 = vmatpush.bf16.msra.mxu0 %v6405
  %6478 = vmatpush.bf16.msra.mxu0 %v6404
  %6479 = vmatpush.bf16.msra.mxu0 %v6403
  %6480 = vmatpush.bf16.msra.mxu0 %v6402
  %6481 = vmatpush.bf16.msra.mxu0 %v6401
  %6482 = vmatpush.bf16.msra.mxu0 %v6400
  %6483 = vmatpush.bf16.msra.mxu0 %v6399
  %6484 = vmatpush.bf16.msra.mxu0 %v6398
  %6485 = vmatmul.bf16.gmra.mxu0 %v6177
  %v6486 = vpop.f32.mrf.mxu0
  %v6487 = vadd.f32 %v6474, %v6486
  %v6488 = vpop.f32.mrf.mxu0
  %6489 = vdwg.mxu0
  %6490 = vst [vmem:[%s22] sm:$0xff] %v6487
  // Predicated region
  $region90: #{selection_from_all_forward.1} parent=0 // pred_check
    _
  $region91: #{selection_from_all_forward.1} parent=0 // pred_check_branch
    %6492 = sbr.rel (0) target = $region93
  $region92: #{selection_from_all_forward.1} parent=0 // pred_region
    _
  $region93: #{selection_from_all_forward.1} parent=0 // pred_fallthru
    _
  // Predicated region
  $region94: #{selection_from_all_forward.1} parent=0 // pred_check
    _
  $region95: #{selection_from_all_forward.1} parent=0 // pred_check_branch
    %6494 = sbr.rel (0) target = $region97
  $region96: #{selection_from_all_forward.1} parent=0 // pred_region
    _
  $region97: #{selection_from_all_forward.1} parent=0 // pred_fallthru
    _

</llo_original>
